<compile_context>
chip_gen: v7x
topology: tpu7x:2x2x1
jax: 0.10.0
libtpu: 0.0.40
codegen_flags: <defaults>
</compile_context>

<pallas_src>
import functools

import jax
import jax.numpy as jnp
from jax.experimental import pallas as pl
from jax.experimental.pallas import tpu as pltpu

NUM_CLASSES = 3
FEAT_CH = 2048            # resnet50.fc.in_features


def _round_up(n, m):
    return ((n + m - 1) // m) * m


# ----------------------------------------------------------------------------
# Fused kernel.  Grid = (B, n_tiles over pixels).  The pixel axis is a
# reduction: a (1, 2048) f32 VMEM scratch accumulates the channel-wise sum of
# relu(conv) over pixels; on the last tile of each batch the fc + CORAL head is
# applied in f32 and the (resident) logits/probas blocks are written out.
# ----------------------------------------------------------------------------
def _fused_coral_kernel(hw_inv,
                        patches_ref, w_ref, fcw_ref, fcb_ref, coralb_ref,
                        logits_ref, probas_ref, acc_ref):
    t = pl.program_id(1)

    @pl.when(t == 0)
    def _():
        acc_ref[...] = jnp.zeros_like(acc_ref)

    # conv as matmul (bf16 operands, f32 accumulate on the MXU).  conv_b is a
    # row of w_ref (matched by the constant-1 patch column), so no bias add.
    conv = jnp.dot(patches_ref[...], w_ref[...],
                   preferred_element_type=jnp.float32)            # (tm, Cout) f32
    feat = jnp.maximum(conv, 0.0)

    # Pool-first: padded pixel rows are all-zero (including the bias column),
    # so they contribute exactly 0 — no masking needed.
    acc_ref[...] += jnp.sum(feat, axis=0, keepdims=True)          # (1, Cout) f32

    @pl.when(t == pl.num_programs(1) - 1)
    def _():
        pooled = acc_ref[...] * hw_inv                            # (1, Cout) f32
        g = jnp.sum(pooled * fcw_ref[...], axis=1, keepdims=True) + fcb_ref[...]
        logits = g + coralb_ref[...]                              # (1, K-1)
        logits_ref[...] = logits[None]
        probas_ref[...] = jax.nn.sigmoid(logits)[None]


# ----------------------------------------------------------------------------
# Full forward (PyTorch-facing: input is NCHW, like torch).
# ----------------------------------------------------------------------------
def coral_cnn_forward(x_nchw, params, *, tm=512):
    # NCHW -> NHWC, cast to bf16 up front so the im2col pass is bf16 in HBM.
    x = jnp.transpose(x_nchw, (0, 2, 3, 1)).astype(jnp.bfloat16)
    B, H, W, Cin = x.shape
    w_hwio = params["conv_w"]
    KH, KW, _, Cout = w_hwio.shape
    k1 = NUM_CLASSES - 1
    HW = H * W

    # im2col (pure data movement): (kh, kw, cin) ordering matches
    # w_hwio.reshape(KH*KW*Cin, Cout).  SAME padding for 3x3 / stride 1.
    # A constant-1 column is appended so conv_b folds into the weight matrix.
    ph, pw = KH // 2, KW // 2
    xp = jnp.pad(x, ((0, 0), (ph, ph), (pw, pw), (0, 0)))
    cols = [xp[:, dh:dh + H, dw:dw + W, :] for dh in range(KH) for dw in range(KW)]
    cols.append(jnp.ones((B, H, W, 1), jnp.bfloat16))             # bias column
    K1 = KH * KW * Cin + 1
    patches = jnp.concatenate(cols, axis=-1).reshape(B, HW, K1)

    # Pad the contraction dim to a sublane multiple (kept narrow — do NOT pad
    # to 128, that would 4x the dominant HBM stream) and the pixel dim to a
    # multiple of the M tile.  Padded pixel rows are all-zero -> contribute 0.
    Kp = _round_up(K1, 8)
    tm = max(128, min(tm, _round_up(HW, 128)))    # 128-aligned (bf16 packing / MXU)
    HWp = _round_up(HW, tm)
    n_tiles = HWp // tm
    patches = jnp.pad(patches, ((0, 0), (0, HWp - HW), (0, Kp - K1)))
    patches = patches.reshape(B * HWp, Kp)                        # bf16 MXU operand

    # Conv weights with conv_b folded in as the extra contraction row.
    w2d = jnp.concatenate(
        [w_hwio.reshape(KH * KW * Cin, Cout),
         params["conv_b"].reshape(1, Cout)], axis=0)
    w2d = jnp.pad(w2d, ((0, Kp - K1), (0, 0))).astype(jnp.bfloat16)   # (Kp, Cout)

    fc_w = params["fc_w"].reshape(1, Cout).astype(jnp.float32)        # kept f32
    fc_b = params["fc_b"].reshape(1, 1).astype(jnp.float32)
    coral_b = params["coral_b"].reshape(1, k1).astype(jnp.float32)

    kernel = functools.partial(_fused_coral_kernel, float(1.0 / HW))

    logits3, probas3 = pl.pallas_call(
        kernel,
        out_shape=(jax.ShapeDtypeStruct((B, 1, k1), jnp.float32),
                   jax.ShapeDtypeStruct((B, 1, k1), jnp.float32)),
        grid_spec=pltpu.PrefetchScalarGridSpec(
            num_scalar_prefetch=0,
            grid=(B, n_tiles),
            in_specs=[
                # streamed per (batch, pixel-tile): row block = b * n_tiles + t
                pl.BlockSpec((tm, Kp), lambda b, t: (b * n_tiles + t, 0)),
                # resident across the whole grid (DMA'd once)
                pl.BlockSpec((Kp, Cout), lambda b, t: (0, 0)),
                pl.BlockSpec((1, Cout), lambda b, t: (0, 0)),
                pl.BlockSpec((1, 1), lambda b, t: (0, 0)),
                pl.BlockSpec((1, k1), lambda b, t: (0, 0)),
            ],
            out_specs=(pl.BlockSpec((1, 1, k1), lambda b, t: (b, 0, 0)),
                       pl.BlockSpec((1, 1, k1), lambda b, t: (b, 0, 0))),
            scratch_shapes=[pltpu.VMEM((1, Cout), jnp.float32)],
        ),
        compiler_params=pltpu.CompilerParams(
            dimension_semantics=("parallel", "arbitrary"),
            vmem_limit_bytes=64 * 1024 * 1024),
    )(patches, w2d, fc_w, fc_b, coral_b)

    return logits3[:, 0, :], probas3[:, 0, :]


# ----------------------------------------------------------------------------
# Pure-JAX reference (all f32) for verification.
# ----------------------------------------------------------------------------
def reference_forward(x_nchw, params):
    x = jnp.transpose(x_nchw, (0, 2, 3, 1)).astype(jnp.float32)
    feat = jax.lax.conv_general_dilated(
        x, params["conv_w"], window_strides=(1, 1), padding="SAME",
        dimension_numbers=("NHWC", "HWIO", "NHWC"))
    feat = jnp.maximum(feat + params["conv_b"][None, None, None, :], 0.0)
    pooled = jnp.mean(feat, axis=(1, 2))                          # (B, C)
    g = pooled @ params["fc_w"].reshape(-1, 1) + params["fc_b"].reshape(1, 1)
    logits = g + params["coral_b"].reshape(1, -1)
    return logits, jax.nn.sigmoid(logits)


if __name__ == "__main__":
    key = jax.random.PRNGKey(0)
    k_x, k_cw, k_cb, k_fw, k_fb, k_co = jax.random.split(key, 6)

    B, Cin, H, W = 2, 3, 16, 16
    x = jax.random.normal(k_x, (B, Cin, H, W), dtype=jnp.float32)

    params = {
        "conv_w": 0.05 * jax.random.normal(k_cw, (3, 3, Cin, FEAT_CH), jnp.float32),
        "conv_b": 0.05 * jax.random.normal(k_cb, (FEAT_CH,), jnp.float32),
        "fc_w": 0.02 * jax.random.normal(k_fw, (FEAT_CH,), jnp.float32),  # Linear(2048,1)
        "fc_b": 0.1 * jax.random.normal(k_fb, (1,), jnp.float32),
        "coral_b": 0.1 * jax.random.normal(k_co, (NUM_CLASSES - 1,), jnp.float32),
    }

    logits, probas = jax.block_until_ready(coral_cnn_forward(x, params))
    ref_logits, ref_probas = reference_forward(x, params)

    assert logits.shape == (B, NUM_CLASSES - 1) and probas.shape == (B, NUM_CLASSES - 1)
    assert jnp.allclose(logits, ref_logits, atol=1e-2, rtol=1e-2), (logits, ref_logits)
    assert jnp.allclose(probas, ref_probas, atol=1e-2, rtol=1e-2), (probas, ref_probas)
    print("KERNEL_OK")
</pallas_src>

<mosaic_0001>
module attributes {stable_mosaic.version = 11 : i64} {
  func.func @_fused_coral_kernel(%arg0: i32, %arg1: i32, %arg2: memref<256x32xbf16, #tpu.memory_space<vmem>>, %arg3: memref<32x2048xbf16, #tpu.memory_space<vmem>>, %arg4: memref<1x2048xf32, #tpu.memory_space<vmem>>, %arg5: memref<1x1xf32, #tpu.memory_space<vmem>>, %arg6: memref<1x2xf32, #tpu.memory_space<vmem>>, %arg7: memref<1x1x2xf32, #tpu.memory_space<vmem>>, %arg8: memref<1x1x2xf32, #tpu.memory_space<vmem>>, %arg9: memref<1x2048xf32, #tpu.memory_space<vmem>>) attributes {dimension_semantics = [#tpu.dimension_semantics<parallel>, #tpu.dimension_semantics<arbitrary>], iteration_bounds = array<i64: 2, 1>, scalar_prefetch = 0 : i64, scratch_operands = 1 : i64, tpu.core_type = #tpu.core_type<tc>, window_params = [{transform_indices = @transform_0, window_bounds = array<i64: 256, 32>}, {pipeline_mode = #tpu.pipeline_mode<synchronous>, transform_indices = @transform_1, window_bounds = array<i64: 32, 2048>}, {pipeline_mode = #tpu.pipeline_mode<synchronous>, transform_indices = @transform_2, window_bounds = array<i64: 1, 2048>}, {pipeline_mode = #tpu.pipeline_mode<synchronous>, transform_indices = @transform_3, window_bounds = array<i64: 1, 1>}, {pipeline_mode = #tpu.pipeline_mode<synchronous>, transform_indices = @transform_4, window_bounds = array<i64: 1, 2>}, {transform_indices = @transform_5, window_bounds = array<i64: 1, 1, 2>}, {transform_indices = @transform_6, window_bounds = array<i64: 1, 1, 2>}]} {
    %c0_i32 = arith.constant 0 : i32
    %0 = arith.cmpi eq, %arg1, %c0_i32 : i32
    %1 = arith.extui %0 : i1 to i32
    %c0_i32_0 = arith.constant 0 : i32
    %2 = arith.cmpi ne, %1, %c0_i32_0 : i32
    scf.if %2 {
      %cst_12 = arith.constant 0.000000e+00 : f32
      %16 = vector.broadcast %cst_12 : f32 to vector<1x2048xf32>
      %c0_13 = arith.constant 0 : index
      %c0_14 = arith.constant 0 : index
      %17 = vector.load %arg9[%c0_13, %c0_14] : memref<1x2048xf32, #tpu.memory_space<vmem>>, vector<1x2048xf32>
      tpu.vector_store %arg9[%c0_13, %c0_14], %16 {strides = array<i32>} : memref<1x2048xf32, #tpu.memory_space<vmem>>, vector<1x2048xf32>,
    } else {
    }
    %c0 = arith.constant 0 : index
    %c0_1 = arith.constant 0 : index
    %3 = vector.load %arg2[%c0, %c0_1] : memref<256x32xbf16, #tpu.memory_space<vmem>>, vector<256x32xbf16>
    %c0_2 = arith.constant 0 : index
    %c0_3 = arith.constant 0 : index
    %4 = vector.load %arg3[%c0_2, %c0_3] : memref<32x2048xbf16, #tpu.memory_space<vmem>>, vector<32x2048xbf16>
    %cst = arith.constant dense<0.000000e+00> : vector<256x2048xf32>
    %5 = tpu.matmul %3, %4, %cst {dimension_numbers = #tpu.dot_dimension_numbers<[1], [0], [0], [1], [0, 0, 1, 1], [], []>} : vector<256x32xbf16>, vector<32x2048xbf16>, vector<256x2048xf32> -> vector<256x2048xf32>
    %cst_4 = arith.constant 0.000000e+00 : f32
    %6 = vector.broadcast %cst_4 : f32 to vector<256x2048xf32>
    %7 = arith.maximumf %5, %6 : vector<256x2048xf32>
    %c0_5 = arith.constant 0 : index
    %c0_6 = arith.constant 0 : index
    %8 = vector.load %arg9[%c0_5, %c0_6] : memref<1x2048xf32, #tpu.memory_space<vmem>>, vector<1x2048xf32>
    %cst_7 = arith.constant dense<0.000000e+00> : vector<2048xf32>
    %9 = vector.multi_reduction <add>, %7, %cst_7 [0] : vector<256x2048xf32> to vector<2048xf32>
    %10 = vector.shape_cast %9 : vector<2048xf32> to vector<1x2048xf32>
    %11 = arith.addf %8, %10 : vector<1x2048xf32>
    %c0_8 = arith.constant 0 : index
    %c0_9 = arith.constant 0 : index
    %12 = vector.load %arg9[%c0_8, %c0_9] : memref<1x2048xf32, #tpu.memory_space<vmem>>, vector<1x2048xf32>
    tpu.vector_store %arg9[%c0_8, %c0_9], %11 {strides = array<i32>} : memref<1x2048xf32, #tpu.memory_space<vmem>>, vector<1x2048xf32>,
    %c0_i32_10 = arith.constant 0 : i32
    %13 = arith.cmpi eq, %arg1, %c0_i32_10 : i32
    %14 = arith.extui %13 : i1 to i32
    %c0_i32_11 = arith.constant 0 : i32
    %15 = arith.cmpi ne, %14, %c0_i32_11 : i32
    scf.if %15 {
      %c0_12 = arith.constant 0 : index
      %c0_13 = arith.constant 0 : index
      %16 = vector.load %arg9[%c0_12, %c0_13] : memref<1x2048xf32, #tpu.memory_space<vmem>>, vector<1x2048xf32>
      %cst_14 = arith.constant 3.906250e-03 : f32
      %17 = vector.broadcast %cst_14 : f32 to vector<1x2048xf32>
      %18 = arith.mulf %16, %17 : vector<1x2048xf32>
      %c0_15 = arith.constant 0 : index
      %c0_16 = arith.constant 0 : index
      %19 = vector.load %arg4[%c0_15, %c0_16] : memref<1x2048xf32, #tpu.memory_space<vmem>>, vector<1x2048xf32>
      %20 = arith.mulf %18, %19 : vector<1x2048xf32>
      %cst_17 = arith.constant dense<0.000000e+00> : vector<1xf32>
      %21 = vector.multi_reduction <add>, %20, %cst_17 [1] : vector<1x2048xf32> to vector<1xf32>
      %22 = vector.shape_cast %21 : vector<1xf32> to vector<1x1xf32>
      %c0_18 = arith.constant 0 : index
      %c0_19 = arith.constant 0 : index
      %23 = vector.load %arg5[%c0_18, %c0_19] : memref<1x1xf32, #tpu.memory_space<vmem>>, vector<1x1xf32>
      %24 = arith.addf %22, %23 : vector<1x1xf32>
      %c0_20 = arith.constant 0 : index
      %c0_21 = arith.constant 0 : index
      %25 = vector.load %arg6[%c0_20, %c0_21] : memref<1x2xf32, #tpu.memory_space<vmem>>, vector<1x2xf32>
      %26 = vector.broadcast %24 : vector<1x1xf32> to vector<1x2xf32>
      %27 = arith.addf %26, %25 : vector<1x2xf32>
      %28 = vector.shape_cast %27 : vector<1x2xf32> to vector<1x1x2xf32>
      %c0_22 = arith.constant 0 : index
      %c0_23 = arith.constant 0 : index
      %c0_24 = arith.constant 0 : index
      %29 = vector.load %arg7[%c0_22, %c0_23, %c0_24] : memref<1x1x2xf32, #tpu.memory_space<vmem>>, vector<1x1x2xf32>
      tpu.vector_store %arg7[%c0_22, %c0_23, %c0_24], %28 {strides = array<i32>} : memref<1x1x2xf32, #tpu.memory_space<vmem>>, vector<1x1x2xf32>,
      %30 = arith.negf %27 : vector<1x2xf32>
      %31 = math.exp %30 : vector<1x2xf32>
      %cst_25 = arith.constant 1.000000e+00 : f32
      %32 = vector.broadcast %cst_25 : f32 to vector<1x2xf32>
      %33 = arith.addf %32, %31 : vector<1x2xf32>
      %34 = arith.divf %32, %33 : vector<1x2xf32>
      %35 = vector.shape_cast %34 : vector<1x2xf32> to vector<1x1x2xf32>
      %c0_26 = arith.constant 0 : index
      %c0_27 = arith.constant 0 : index
      %c0_28 = arith.constant 0 : index
      %36 = vector.load %arg8[%c0_26, %c0_27, %c0_28] : memref<1x1x2xf32, #tpu.memory_space<vmem>>, vector<1x1x2xf32>
      tpu.vector_store %arg8[%c0_26, %c0_27, %c0_28], %35 {strides = array<i32>} : memref<1x1x2xf32, #tpu.memory_space<vmem>>, vector<1x1x2xf32>,
    } else {
    }
    return
  }
  func.func @transform_0(%arg0: i32, %arg1: i32) -> (i32, i32) {
    %c1_i32 = arith.constant 1 : i32
    %0 = arith.muli %arg0, %c1_i32 : i32
    %1 = arith.addi %0, %arg1 : i32
    %c0_i32 = arith.constant 0 : i32
    %c0_i32_0 = arith.constant 0 : i32
    return %1, %c0_i32 : i32, i32
  }
  func.func @transform_1(%arg0: i32, %arg1: i32) -> (i32, i32) {
    %c0_i32 = arith.constant 0 : i32
    %c0_i32_0 = arith.constant 0 : i32
    %c0_i32_1 = arith.constant 0 : i32
    return %c0_i32, %c0_i32_0 : i32, i32
  }
  func.func @transform_2(%arg0: i32, %arg1: i32) -> (i32, i32) {
    %c0_i32 = arith.constant 0 : i32
    %c0_i32_0 = arith.constant 0 : i32
    %c0_i32_1 = arith.constant 0 : i32
    return %c0_i32, %c0_i32_0 : i32, i32
  }
  func.func @transform_3(%arg0: i32, %arg1: i32) -> (i32, i32) {
    %c0_i32 = arith.constant 0 : i32
    %c0_i32_0 = arith.constant 0 : i32
    %c0_i32_1 = arith.constant 0 : i32
    return %c0_i32, %c0_i32_0 : i32, i32
  }
  func.func @transform_4(%arg0: i32, %arg1: i32) -> (i32, i32) {
    %c0_i32 = arith.constant 0 : i32
    %c0_i32_0 = arith.constant 0 : i32
    %c0_i32_1 = arith.constant 0 : i32
    return %c0_i32, %c0_i32_0 : i32, i32
  }
  func.func @transform_5(%arg0: i32, %arg1: i32) -> (i32, i32, i32) {
    %c0_i32 = arith.constant 0 : i32
    %c0_i32_0 = arith.constant 0 : i32
    %c0_i32_1 = arith.constant 0 : i32
    return %arg0, %c0_i32, %c0_i32_0 : i32, i32, i32
  }
  func.func @transform_6(%arg0: i32, %arg1: i32) -> (i32, i32, i32) {
    %c0_i32 = arith.constant 0 : i32
    %c0_i32_0 = arith.constant 0 : i32
    %c0_i32_1 = arith.constant 0 : i32
    return %arg0, %c0_i32, %c0_i32_0 : i32, i32, i32
  }
}

</mosaic_0001>

<llo_original>
// kernel: tpu_custom_call.1
$region0: #{tpu_custom_call.1}
  #allocation0 [shape = 'u32[]', space=smem, size = 0x4, offset = 0x4, fixed_abs, tag = 'smem constant byte address 0x4 - core index']
  #allocation1 [shape = 'u32[144,128]{1,0:T(1,128)}', space=vmem, size = 0x12000, scoped, tag = 'internal scratch']
  #allocation2 [shape = 'f32[1,2048]{1,0:T(1,128)}', space=vmem, size = 0x2000, scoped, tag = 'scratch operand']
  #allocation3 [shape = 'f32[1,1]{1,0:T(1,128)S(1)}', space=vmem, size = 0x200, scoped, tag = 'scoped memory for tpu_custom_call.1']
  %s0 = inlined_call_operand.hbm [shape: bf16[512,32], index: 0, kind: input, shape index: {}]
  %s1 = inlined_call_operand.hbm [shape: bf16[32,2048], index: 1, kind: input, shape index: {}]
  %s2 = inlined_call_operand.hbm [shape: f32[1,2048], index: 2, kind: input, shape index: {}]
  %s3 = inlined_call_operand.<no memory space> [shape: f32[1,1], index: 3, kind: input, shape index: {}]
  %s4 = inlined_call_operand.hbm [shape: f32[1,2], index: 4, kind: input, shape index: {}]
  %s5 = inlined_call_operand.hbm [shape: f32[2,1,2], index: 5, kind: output, shape index: {0}]
  %s6 = inlined_call_operand.hbm [shape: f32[2,1,2], index: 6, kind: output, shape index: {1}]
  %7 = xla_tuple %s5, %s6
  %s8 = sld [smem:[#allocation0]]
  $region85: #{tpu_custom_call.1} parent=0
    _
  %s10 = ssub.s32 1, %s8
  %s11 = scalar_select 0, %s10, %s8
  %v12 = vstv %s3
  %13 = vst [vmem:[#allocation3] sm:$0x1] %v12
  $region1: #{tpu_custom_call.1} parent=0
    #allocation4 [shape = 'u8[131072]{0}', space=vmem, size = 0x20000, scoped, tag = 'input window, operand 0']
    #allocation5 [shape = 's32[2]{0}', space=sflag, size = 0x8, scoped, tag = 'scoped memory for tpu_custom_call.1']
    #allocation6 [shape = 's32[2]{0}', space=sflag, size = 0x8, scoped, tag = 'scoped memory for tpu_custom_call.1']
    #allocation7 [shape = 'u8[131072]{0}', space=vmem, size = 0x20000, scoped, tag = 'input window, operand 1, single buffered']
    #allocation8 [shape = 's32[1]{0}', space=sflag, size = 0x4, scoped, tag = 'scoped memory for tpu_custom_call.1']
    #allocation9 [shape = 'u8[8192]{0}', space=vmem, size = 0x2000, scoped, tag = 'input window, operand 2, single buffered']
    #allocation10 [shape = 'u8[512]{0}', space=vmem, size = 0x400, scoped, tag = 'input window, operand 4, single buffered']
    #allocation11 [shape = 's32[1]{0}', space=sflag, size = 0x4, scoped, tag = 'scoped memory for tpu_custom_call.1']
    #allocation12 [shape = 'u8[1024]{0}', space=vmem, size = 0x400, scoped, tag = 'output window, operand 0']
    #allocation13 [shape = 'u8[1024]{0}', space=vmem, size = 0x400, scoped, tag = 'output window, operand 1']
    #allocation14 [shape = 's32[2]{0}', space=sflag, size = 0x8, scoped, tag = 'scoped memory for tpu_custom_call.1']
    %14 = vsyncpa [#allocation5], 0
    %s15 = scalar_lea.sflag [#allocation5], 1
    %16 = vsyncpa %s15, 0
    %17 = vsyncpa [#allocation8], 0
    %18 = vsyncpa [#allocation11], 0
    %19 = vsyncpa [#allocation6], 0
    %s20 = scalar_lea.sflag [#allocation6], 1
    %21 = vsyncpa %s20, 0
    %22 = vsyncpa [#allocation14], 0
    %s23 = scalar_lea.sflag [#allocation14], 1
    %24 = vsyncpa %s23, 0
    loop: start=0, step=1, limit=4
    $region2: #{tpu_custom_call.1} parent=1 // loop_pre_header
      _
    $region3: #{tpu_custom_call.1} parent=1 // loop_header
      %s26 = sphi 0, %s30
      %p27 = scmp.ge.s32.totalorder %s26, 4
      %s33 = sphi 0, %s45
      %s34 = sphi 0, %s41
      %s35 = sphi 0, %s33
      %s36 = sphi 0, %s34
      %s37 = sphi 0, %s35
      %s38 = sphi 0, %s36
      %s50 = sphi 0, %s52
      %s53 = sphi 0, %s50
      %s54 = sphi 0, %s53
      %s70 = sphi 0, %s54
      %s74 = sphi 0, %s74
      %s76 = sphi 0, %s74
      %s77 = sphi 0, %s76
      %s91 = sphi 0, %s77
      %s95 = sphi 0, %s95
      %s97 = sphi 0, %s95
      %s98 = sphi 0, %s97
      %s112 = sphi 0, %s98
      %s116 = sphi 0, %s116
      %s118 = sphi 0, %s116
      %s119 = sphi 0, %s118
      %s133 = sphi 0, %s119
      %s137 = sphi 0, %s137
      %s139 = sphi 0, %s137
      %s140 = sphi 0, %s139
      %s154 = sphi 0, %s140
      %s160 = sphi 0, %s162
      %s163 = sphi 0, %s160
      %s164 = sphi 0, %s163
      %s180 = sphi 0, %s164
      %s186 = sphi 0, %s188
      %s189 = sphi 0, %s186
      %s190 = sphi 0, %s189
      %s206 = sphi 0, %s190
    $region4: #{tpu_custom_call.1} parent=1 // loop_header_branch
      %29 = sbr.rel (%p27) target = $region8
    $region5: #{tpu_custom_call.1} parent=1 // loop_body
      %s31 = ssub.s32 %s26, 1
      %s32 = ssub.s32 %s26, 2
      %s39 = sadd.s32 1, %s34
      %p40 = scmp.ge.s32.totalorder %s39, 1
      %s41 = scalar_select %p40, 0, %s39
      %s42 = sadd.s32 1, %s33
      %s43 = scalar_select %p40, %s42, %s33
      %p44 = scmp.ge.s32.totalorder %s43, 2
      %s45 = scalar_select %p44, 0, %s43
      %s46 = sadd.s32 %s33, %s34
      %s47 = sadd.s32 %s45, %s41
      %s48 = ssub.s32 %s46, %s47
      %p49 = scmp.eq.s32.totalorder %s48, 0
      %s51 = sadd.s32 %s50, 1
      %s52 = scalar_select %p49, %s50, %s51
      %p55 = pneg %p49
      %p56 = scmp.eq.s32.totalorder %s26, 1
      %p57 = por %p55, %p56
      %p58 = scmp.ne.s32.totalorder %s50, %s53
      %p59 = scmp.eq.s32.totalorder %s26, 0
      %p60 = por %p58, %p59
      %p61 = scmp.ne.s32.totalorder %s50, %s53
      %p62 = scmp.eq.s32.totalorder %s31, 1
      %p63 = por %p61, %p62
      %p64 = scmp.ne.s32.totalorder %s53, %s54
      %p65 = scmp.eq.s32.totalorder %s31, 0
      %p66 = por %p64, %p65
      %p67 = scmp.ne.s32.totalorder %s53, %s54
      %p68 = scmp.eq.s32.totalorder %s32, 1
      %p69 = por %p67, %p68
      %p71 = scmp.ne.s32.totalorder %s54, %s70
      %p72 = scmp.eq.s32.totalorder %s32, 0
      %p73 = por %p71, %p72
      %s75 = sadd.s32 %s74, 1
      %p78 = scmp.eq.s32.totalorder %s26, 1
      %p79 = scmp.ne.s32.totalorder %s74, %s76
      %p80 = scmp.eq.s32.totalorder %s26, 0
      %p81 = por %p79, %p80
      %p82 = scmp.ne.s32.totalorder %s74, %s76
      %p83 = scmp.eq.s32.totalorder %s31, 1
      %p84 = por %p82, %p83
      %p85 = scmp.ne.s32.totalorder %s76, %s77
      %p86 = scmp.eq.s32.totalorder %s31, 0
      %p87 = por %p85, %p86
      %p88 = scmp.ne.s32.totalorder %s76, %s77
      %p89 = scmp.eq.s32.totalorder %s32, 1
      %p90 = por %p88, %p89
      %p92 = scmp.ne.s32.totalorder %s77, %s91
      %p93 = scmp.eq.s32.totalorder %s32, 0
      %p94 = por %p92, %p93
      %s96 = sadd.s32 %s95, 1
      %p99 = scmp.eq.s32.totalorder %s26, 1
      %p100 = scmp.ne.s32.totalorder %s95, %s97
      %p101 = scmp.eq.s32.totalorder %s26, 0
      %p102 = por %p100, %p101
      %p103 = scmp.ne.s32.totalorder %s95, %s97
      %p104 = scmp.eq.s32.totalorder %s31, 1
      %p105 = por %p103, %p104
      %p106 = scmp.ne.s32.totalorder %s97, %s98
      %p107 = scmp.eq.s32.totalorder %s31, 0
      %p108 = por %p106, %p107
      %p109 = scmp.ne.s32.totalorder %s97, %s98
      %p110 = scmp.eq.s32.totalorder %s32, 1
      %p111 = por %p109, %p110
      %p113 = scmp.ne.s32.totalorder %s98, %s112
      %p114 = scmp.eq.s32.totalorder %s32, 0
      %p115 = por %p113, %p114
      %s117 = sadd.s32 %s116, 1
      %p120 = scmp.eq.s32.totalorder %s26, 1
      %p121 = scmp.ne.s32.totalorder %s116, %s118
      %p122 = scmp.eq.s32.totalorder %s26, 0
      %p123 = por %p121, %p122
      %p124 = scmp.ne.s32.totalorder %s116, %s118
      %p125 = scmp.eq.s32.totalorder %s31, 1
      %p126 = por %p124, %p125
      %p127 = scmp.ne.s32.totalorder %s118, %s119
      %p128 = scmp.eq.s32.totalorder %s31, 0
      %p129 = por %p127, %p128
      %p130 = scmp.ne.s32.totalorder %s118, %s119
      %p131 = scmp.eq.s32.totalorder %s32, 1
      %p132 = por %p130, %p131
      %p134 = scmp.ne.s32.totalorder %s119, %s133
      %p135 = scmp.eq.s32.totalorder %s32, 0
      %p136 = por %p134, %p135
      %s138 = sadd.s32 %s137, 1
      %p141 = scmp.eq.s32.totalorder %s26, 1
      %p142 = scmp.ne.s32.totalorder %s137, %s139
      %p143 = scmp.eq.s32.totalorder %s26, 0
      %p144 = por %p142, %p143
      %p145 = scmp.ne.s32.totalorder %s137, %s139
      %p146 = scmp.eq.s32.totalorder %s31, 1
      %p147 = por %p145, %p146
      %p148 = scmp.ne.s32.totalorder %s139, %s140
      %p149 = scmp.eq.s32.totalorder %s31, 0
      %p150 = por %p148, %p149
      %p151 = scmp.ne.s32.totalorder %s139, %s140
      %p152 = scmp.eq.s32.totalorder %s32, 1
      %p153 = por %p151, %p152
      %p155 = scmp.ne.s32.totalorder %s140, %s154
      %p156 = scmp.eq.s32.totalorder %s32, 0
      %p157 = por %p155, %p156
      %s158 = ssub.s32 %s33, %s45
      %p159 = scmp.eq.s32.totalorder %s158, 0
      %s161 = sadd.s32 %s160, 1
      %s162 = scalar_select %p159, %s160, %s161
      %p165 = pneg %p159
      %p166 = scmp.eq.s32.totalorder %s26, 1
      %p167 = por %p165, %p166
      %p168 = scmp.ne.s32.totalorder %s160, %s163
      %p169 = scmp.eq.s32.totalorder %s26, 0
      %p170 = por %p168, %p169
      %p171 = scmp.ne.s32.totalorder %s160, %s163
      %p172 = scmp.eq.s32.totalorder %s31, 1
      %p173 = por %p171, %p172
      %p174 = scmp.ne.s32.totalorder %s163, %s164
      %p175 = scmp.eq.s32.totalorder %s31, 0
      %p176 = por %p174, %p175
      %p177 = scmp.ne.s32.totalorder %s163, %s164
      %p178 = scmp.eq.s32.totalorder %s32, 1
      %p179 = por %p177, %p178
      %p181 = scmp.ne.s32.totalorder %s164, %s180
      %p182 = scmp.eq.s32.totalorder %s32, 0
      %p183 = por %p181, %p182
      %s184 = ssub.s32 %s33, %s45
      %p185 = scmp.eq.s32.totalorder %s184, 0
      %s187 = sadd.s32 %s186, 1
      %s188 = scalar_select %p185, %s186, %s187
      %p191 = pneg %p185
      %p192 = scmp.eq.s32.totalorder %s26, 1
      %p193 = por %p191, %p192
      %p194 = scmp.ne.s32.totalorder %s186, %s189
      %p195 = scmp.eq.s32.totalorder %s26, 0
      %p196 = por %p194, %p195
      %p197 = scmp.ne.s32.totalorder %s186, %s189
      %p198 = scmp.eq.s32.totalorder %s31, 1
      %p199 = por %p197, %p198
      %p200 = scmp.ne.s32.totalorder %s189, %s190
      %p201 = scmp.eq.s32.totalorder %s31, 0
      %p202 = por %p200, %p201
      %p203 = scmp.ne.s32.totalorder %s189, %s190
      %p204 = scmp.eq.s32.totalorder %s32, 1
      %p205 = por %p203, %p204
      %p207 = scmp.ne.s32.totalorder %s190, %s206
      %p208 = scmp.eq.s32.totalorder %s32, 0
      %p209 = por %p207, %p208
      %p210 = scmp.le.s32.totalorder 1, %s26
      %p211 = scmp.lt.s32.totalorder %s26, 3
      %p212 = pnand %p210, %p211
      %p213 = pneg %p212
      // Predicated region
      $region9: #{tpu_custom_call.1} parent=5 // pred_check
        _
      $region10: #{tpu_custom_call.1} parent=5 // pred_check_branch
        %215 = sbr.rel (%p212) target = $region12
      $region11: #{tpu_custom_call.1} parent=5 // pred_region
        %s216 = ssub.s32 %s26, 1
        // Predicated region
        $region13: #{tpu_custom_call.1} parent=11 // pred_check
          %p217 = pneg %p87
        $region14: #{tpu_custom_call.1} parent=11 // pred_check_branch
          %219 = sbr.rel (%p217) target = $region16
        $region15: #{tpu_custom_call.1} parent=11 // pred_region
          %s221 = ssub.s32 4096, 4096
          %222 = vsyncadd [#allocation8], %s221
          %s223 = sshll.u32 [#allocation7], 4
          %s224 = int_to_ptr.vmem [resolvable:$true] %s223
          %229 = dma.hbm_to_vmem [thread:$0]  %s1, 4096, %s224, [#allocation8], 1024, 1024, 64
        $region16: #{tpu_custom_call.1} parent=11 // pred_fallthru
          _
        // Predicated region
        $region17: #{tpu_custom_call.1} parent=11 // pred_check
          %p230 = pneg %p108
        $region18: #{tpu_custom_call.1} parent=11 // pred_check_branch
          %232 = sbr.rel (%p230) target = $region20
        $region19: #{tpu_custom_call.1} parent=11 // pred_region
          %s234 = ssub.s32 256, 256
          %235 = vsyncadd [#allocation8], %s234
          %s237 = sshll.u32 [#allocation9], 4
          %s238 = int_to_ptr.vmem [resolvable:$true] %s237
          %240 = dma.hbm_to_vmem [thread:$0]  %s2, 256, %s238, [#allocation8]
        $region20: #{tpu_custom_call.1} parent=11 // pred_fallthru
          _
        // Predicated region
        $region21: #{tpu_custom_call.1} parent=11 // pred_check
          %p241 = pneg %p129
        $region22: #{tpu_custom_call.1} parent=11 // pred_check_branch
          %243 = sbr.rel (%p241) target = $region24
        $region23: #{tpu_custom_call.1} parent=11 // pred_region
          _
        $region24: #{tpu_custom_call.1} parent=11 // pred_fallthru
          _
        // Predicated region
        $region25: #{tpu_custom_call.1} parent=11 // pred_check
          %p244 = pneg %p150
        $region26: #{tpu_custom_call.1} parent=11 // pred_check_branch
          %246 = sbr.rel (%p244) target = $region28
        $region27: #{tpu_custom_call.1} parent=11 // pred_region
          %s248 = ssub.s32 16, 16
          %249 = vsyncadd [#allocation11], %s248
          %s251 = sshll.u32 [#allocation10], 4
          %s252 = int_to_ptr.vmem [resolvable:$true] %s251
          %254 = dma.hbm_to_vmem [thread:$0]  %s4, 16, %s252, [#allocation11]
        $region28: #{tpu_custom_call.1} parent=11 // pred_fallthru
          _
      $region12: #{tpu_custom_call.1} parent=5 // pred_fallthru
        _
      %p255 = scmp.lt.s32.totalorder %s26, 2
      // Predicated region
      $region29: #{tpu_custom_call.1} parent=5 // pred_check
        %p256 = pneg %p255
      $region30: #{tpu_custom_call.1} parent=5 // pred_check_branch
        %258 = sbr.rel (%p256) target = $region32
      $region31: #{tpu_custom_call.1} parent=5 // pred_region
        // Predicated region
        $region33: #{tpu_custom_call.1} parent=31 // pred_check
          %p259 = pneg %p60
        $region34: #{tpu_custom_call.1} parent=31 // pred_check_branch
          %261 = sbr.rel (%p259) target = $region36
        $region35: #{tpu_custom_call.1} parent=31 // pred_region
          %s262 = sand.u32 %s50, 1
          %s263 = scalar_lea.sflag [#allocation5], %s262
          %s264 = sand.u32 %s50, 1
          %s265 = smul.addr %s264, 128
          %s266 = scalar_lea.vmem [#allocation4], %s265
          %s267 = sadd.s32 %s33, %s34
          %s268 = smul.u32 32, %s267
          %s270 = ssub.s32 2048, 2048
          %271 = vsyncadd %s263, %s270
          %s272 = smul.addr %s268, 64
          %s273 = scalar_lea.hbm %s0, %s272
          %s274 = sshll.u32 %s266, 4
          %s275 = int_to_ptr.vmem [resolvable:$true] %s274
          %280 = dma.hbm_to_vmem [thread:$0]  %s273, 2048, %s275, %s263, 64, 64, 4
        $region36: #{tpu_custom_call.1} parent=31 // pred_fallthru
          _
      $region32: #{tpu_custom_call.1} parent=5 // pred_fallthru
        _
      %p281 = scmp.le.s32.totalorder 1, %s26
      %p282 = scmp.lt.s32.totalorder %s26, 3
      %p283 = pnand %p281, %p282
      %p284 = pneg %p283
      // Predicated region
      $region37: #{tpu_custom_call.1} parent=5 // pred_check
        _
      $region38: #{tpu_custom_call.1} parent=5 // pred_check_branch
        %286 = sbr.rel (%p283) target = $region40
      $region39: #{tpu_custom_call.1} parent=5 // pred_region
        %s287 = ssub.s32 %s26, 1
        %s288 = sand.u32 %s53, 1
        %s289 = scalar_lea.sflag [#allocation5], %s288
        %s290 = sand.u32 %s53, 1
        %s291 = smul.addr %s290, 128
        %s292 = scalar_lea.vmem [#allocation4], %s291
        // Predicated region
        $region41: #{tpu_custom_call.1} parent=39 // pred_check
          %p293 = pneg %p66
        $region42: #{tpu_custom_call.1} parent=39 // pred_check_branch
          %295 = sbr.rel (%p293) target = $region44
        $region43: #{tpu_custom_call.1} parent=39 // pred_region
          %296 = dma.done %s289, 2048
        $region44: #{tpu_custom_call.1} parent=39 // pred_fallthru
          _
        // Predicated region
        $region45: #{tpu_custom_call.1} parent=39 // pred_check
          %p297 = pneg %p87
        $region46: #{tpu_custom_call.1} parent=39 // pred_check_branch
          %299 = sbr.rel (%p297) target = $region48
        $region47: #{tpu_custom_call.1} parent=39 // pred_region
          %300 = dma.done [#allocation8], 4096
        $region48: #{tpu_custom_call.1} parent=39 // pred_fallthru
          _
        // Predicated region
        $region49: #{tpu_custom_call.1} parent=39 // pred_check
          %p301 = pneg %p108
        $region50: #{tpu_custom_call.1} parent=39 // pred_check_branch
          %303 = sbr.rel (%p301) target = $region52
        $region51: #{tpu_custom_call.1} parent=39 // pred_region
          %304 = dma.done [#allocation8], 256
        $region52: #{tpu_custom_call.1} parent=39 // pred_fallthru
          _
        // Predicated region
        $region53: #{tpu_custom_call.1} parent=39 // pred_check
          %p305 = pneg %p150
        $region54: #{tpu_custom_call.1} parent=39 // pred_check_branch
          %307 = sbr.rel (%p305) target = $region56
        $region55: #{tpu_custom_call.1} parent=39 // pred_region
          %308 = dma.done [#allocation11], 16
        $region56: #{tpu_custom_call.1} parent=39 // pred_fallthru
          _
        %s309 = sand.u32 %s53, 1
        %s310 = scalar_lea.sflag [#allocation5], %s309
        %s311 = sand.u32 %s53, 1
        %s312 = smul.addr %s311, 128
        %s313 = scalar_lea.vmem [#allocation4], %s312
        %p314 = pneg %p66
        %p315 = pneg %p63
        %p316 = pneg %p87
        %p317 = pneg %p84
        %p318 = pneg %p108
        %p319 = pneg %p105
        %p320 = pneg %p129
        %p321 = pneg %p126
        %p322 = pneg %p150
        %p323 = pneg %p147
        %p324 = pneg %p176
        %p325 = pneg %p173
        %s326 = sand.u32 %s163, 1
        %s327 = scalar_lea.sflag [#allocation6], %s326
        %s328 = sand.u32 %s163, 1
        %s329 = scalar_lea.vmem [#allocation12], %s328
        %p330 = pneg %p202
        %p331 = pneg %p199
        %s332 = sand.u32 %s189, 1
        %s333 = scalar_lea.sflag [#allocation14], %s332
        %s334 = sand.u32 %s189, 1
        %s335 = scalar_lea.vmem [#allocation13], %s334
        %s336 = sadd.s32 %s35, %s36
        %s337 = smul.u32 32, %s336
        %p339 = scmp.eq.s32.totalorder %s36, 0
        // Predicated region
        $region57: #{tpu_custom_call.1} parent=39 // pred_check
          %p340 = pneg %p339
        $region58: #{tpu_custom_call.1} parent=39 // pred_check_branch
          %342 = sbr.rel (%p340) target = $region60
        $region59: #{tpu_custom_call.1} parent=39 // pred_region
          %343 = vst [vmem:[#allocation2] sm:$0xff] 0.0
          %344 = vst [vmem:[#allocation2 + $0x8] sm:$0xff] 0.0
        $region60: #{tpu_custom_call.1} parent=39 // pred_fallthru
          _
        %v345 = vld [vmem:[%s292] sm:$0xf]
        %v346 = vld [vmem:[%s292 + $0x4] sm:$0xf]
        %v347 = vld [vmem:[%s292 + $0x8] sm:$0xf]
        %v348 = vld [vmem:[%s292 + $0xc] sm:$0xf]
        %v349 = vld [vmem:[%s292 + $0x10] sm:$0xf]
        %v350 = vld [vmem:[%s292 + $0x14] sm:$0xf]
        %v351 = vld [vmem:[%s292 + $0x18] sm:$0xf]
        %v352 = vld [vmem:[%s292 + $0x1c] sm:$0xf]
        %v353 = vld [vmem:[%s292 + $0x20] sm:$0xf]
        %v354 = vld [vmem:[%s292 + $0x24] sm:$0xf]
        %v355 = vld [vmem:[%s292 + $0x28] sm:$0xf]
        %v356 = vld [vmem:[%s292 + $0x2c] sm:$0xf]
        %v357 = vld [vmem:[%s292 + $0x30] sm:$0xf]
        %v358 = vld [vmem:[%s292 + $0x34] sm:$0xf]
        %v359 = vld [vmem:[%s292 + $0x38] sm:$0xf]
        %v360 = vld [vmem:[%s292 + $0x3c] sm:$0xf]
        %v361 = vld [vmem:[%s292 + $0x40] sm:$0xf]
        %v362 = vld [vmem:[%s292 + $0x44] sm:$0xf]
        %v363 = vld [vmem:[%s292 + $0x48] sm:$0xf]
        %v364 = vld [vmem:[%s292 + $0x4c] sm:$0xf]
        %v365 = vld [vmem:[%s292 + $0x50] sm:$0xf]
        %v366 = vld [vmem:[%s292 + $0x54] sm:$0xf]
        %v367 = vld [vmem:[%s292 + $0x58] sm:$0xf]
        %v368 = vld [vmem:[%s292 + $0x5c] sm:$0xf]
        %v369 = vld [vmem:[%s292 + $0x60] sm:$0xf]
        %v370 = vld [vmem:[%s292 + $0x64] sm:$0xf]
        %v371 = vld [vmem:[%s292 + $0x68] sm:$0xf]
        %v372 = vld [vmem:[%s292 + $0x6c] sm:$0xf]
        %v373 = vld [vmem:[%s292 + $0x70] sm:$0xf]
        %v374 = vld [vmem:[%s292 + $0x74] sm:$0xf]
        %v375 = vld [vmem:[%s292 + $0x78] sm:$0xf]
        %v376 = vld [vmem:[%s292 + $0x7c] sm:$0xf]
        %v377 = vld [vmem:[#allocation7] sm:$0xff]
        %v378 = vld [vmem:[#allocation7 + $0x8] sm:$0xff]
        %v379 = vld [vmem:[#allocation7 + $0x10] sm:$0xff]
        %v380 = vld [vmem:[#allocation7 + $0x18] sm:$0xff]
        %v381 = vld [vmem:[#allocation7 + $0x20] sm:$0xff]
        %v382 = vld [vmem:[#allocation7 + $0x28] sm:$0xff]
        %v383 = vld [vmem:[#allocation7 + $0x30] sm:$0xff]
        %v384 = vld [vmem:[#allocation7 + $0x38] sm:$0xff]
        %v385 = vld [vmem:[#allocation7 + $0x40] sm:$0xff]
        %v386 = vld [vmem:[#allocation7 + $0x48] sm:$0xff]
        %v387 = vld [vmem:[#allocation7 + $0x50] sm:$0xff]
        %v388 = vld [vmem:[#allocation7 + $0x58] sm:$0xff]
        %v389 = vld [vmem:[#allocation7 + $0x60] sm:$0xff]
        %v390 = vld [vmem:[#allocation7 + $0x68] sm:$0xff]
        %v391 = vld [vmem:[#allocation7 + $0x70] sm:$0xff]
        %v392 = vld [vmem:[#allocation7 + $0x78] sm:$0xff]
        %v393 = vld [vmem:[#allocation7 + $0x80] sm:$0xff]
        %v394 = vld [vmem:[#allocation7 + $0x88] sm:$0xff]
        %v395 = vld [vmem:[#allocation7 + $0x90] sm:$0xff]
        %v396 = vld [vmem:[#allocation7 + $0x98] sm:$0xff]
        %v397 = vld [vmem:[#allocation7 + $0xa0] sm:$0xff]
        %v398 = vld [vmem:[#allocation7 + $0xa8] sm:$0xff]
        %v399 = vld [vmem:[#allocation7 + $0xb0] sm:$0xff]
        %v400 = vld [vmem:[#allocation7 + $0xb8] sm:$0xff]
        %v401 = vld [vmem:[#allocation7 + $0xc0] sm:$0xff]
        %v402 = vld [vmem:[#allocation7 + $0xc8] sm:$0xff]
        %v403 = vld [vmem:[#allocation7 + $0xd0] sm:$0xff]
        %v404 = vld [vmem:[#allocation7 + $0xd8] sm:$0xff]
        %v405 = vld [vmem:[#allocation7 + $0xe0] sm:$0xff]
        %v406 = vld [vmem:[#allocation7 + $0xe8] sm:$0xff]
        %v407 = vld [vmem:[#allocation7 + $0xf0] sm:$0xff]
        %v408 = vld [vmem:[#allocation7 + $0xf8] sm:$0xff]
        %v441 = vunpack.c.l.b16 %v345
        %v442 = vunpack.c.l.b16 %v346
        %v443 = vunpack.c.l.b16 %v347
        %v444 = vunpack.c.l.b16 %v348
        %v445 = vunpack.c.l.b16 %v349
        %v446 = vunpack.c.l.b16 %v350
        %v447 = vunpack.c.l.b16 %v351
        %v448 = vunpack.c.l.b16 %v352
        %v449 = vunpack.c.l.b16 %v353
        %v450 = vunpack.c.l.b16 %v354
        %v451 = vunpack.c.l.b16 %v355
        %v452 = vunpack.c.l.b16 %v356
        %v453 = vunpack.c.l.b16 %v357
        %v454 = vunpack.c.l.b16 %v358
        %v455 = vunpack.c.l.b16 %v359
        %v456 = vunpack.c.l.b16 %v360
        %v457 = vunpack.c.l.b16 %v361
        %v458 = vunpack.c.l.b16 %v362
        %v459 = vunpack.c.l.b16 %v363
        %v460 = vunpack.c.l.b16 %v364
        %v461 = vunpack.c.l.b16 %v365
        %v462 = vunpack.c.l.b16 %v366
        %v463 = vunpack.c.l.b16 %v367
        %v464 = vunpack.c.l.b16 %v368
        %v465 = vunpack.c.l.b16 %v369
        %v466 = vunpack.c.l.b16 %v370
        %v467 = vunpack.c.l.b16 %v371
        %v468 = vunpack.c.l.b16 %v372
        %v469 = vunpack.c.l.b16 %v373
        %v470 = vunpack.c.l.b16 %v374
        %v471 = vunpack.c.l.b16 %v375
        %v472 = vunpack.c.l.b16 %v376
        %v473 = vpack.c.b16 %v442, %v441
        %v474 = vpack.c.b16 %v444, %v443
        %v475 = vpack.c.b16 %v446, %v445
        %v476 = vpack.c.b16 %v448, %v447
        %v477 = vpack.c.b16 %v450, %v449
        %v478 = vpack.c.b16 %v452, %v451
        %v479 = vpack.c.b16 %v454, %v453
        %v480 = vpack.c.b16 %v456, %v455
        %v481 = vpack.c.b16 %v458, %v457
        %v482 = vpack.c.b16 %v460, %v459
        %v483 = vpack.c.b16 %v462, %v461
        %v484 = vpack.c.b16 %v464, %v463
        %v485 = vpack.c.b16 %v466, %v465
        %v486 = vpack.c.b16 %v468, %v467
        %v487 = vpack.c.b16 %v470, %v469
        %v488 = vpack.c.b16 %v472, %v471
        %v521 = vunpack.c.l.b16 %v377
        %v522 = vunpack.c.h.b16 %v377
        %v523 = vunpack.c.l.b16 %v378
        %v524 = vunpack.c.h.b16 %v378
        %v525 = vunpack.c.l.b16 %v379
        %v526 = vunpack.c.h.b16 %v379
        %v527 = vunpack.c.l.b16 %v380
        %v528 = vunpack.c.h.b16 %v380
        %v529 = vunpack.c.l.b16 %v381
        %v530 = vunpack.c.h.b16 %v381
        %v531 = vunpack.c.l.b16 %v382
        %v532 = vunpack.c.h.b16 %v382
        %v533 = vunpack.c.l.b16 %v383
        %v534 = vunpack.c.h.b16 %v383
        %v535 = vunpack.c.l.b16 %v384
        %v536 = vunpack.c.h.b16 %v384
        %v537 = vunpack.c.l.b16 %v385
        %v538 = vunpack.c.h.b16 %v385
        %v539 = vunpack.c.l.b16 %v386
        %v540 = vunpack.c.h.b16 %v386
        %v541 = vunpack.c.l.b16 %v387
        %v542 = vunpack.c.h.b16 %v387
        %v543 = vunpack.c.l.b16 %v388
        %v544 = vunpack.c.h.b16 %v388
        %v545 = vunpack.c.l.b16 %v389
        %v546 = vunpack.c.h.b16 %v389
        %v547 = vunpack.c.l.b16 %v390
        %v548 = vunpack.c.h.b16 %v390
        %v549 = vunpack.c.l.b16 %v391
        %v550 = vunpack.c.h.b16 %v391
        %v551 = vunpack.c.l.b16 %v392
        %v552 = vunpack.c.h.b16 %v392
        %v553 = vunpack.c.l.b16 %v393
        %v554 = vunpack.c.h.b16 %v393
        %v555 = vunpack.c.l.b16 %v394
        %v556 = vunpack.c.h.b16 %v394
        %v557 = vunpack.c.l.b16 %v395
        %v558 = vunpack.c.h.b16 %v395
        %v559 = vunpack.c.l.b16 %v396
        %v560 = vunpack.c.h.b16 %v396
        %v561 = vunpack.c.l.b16 %v397
        %v562 = vunpack.c.h.b16 %v397
        %v563 = vunpack.c.l.b16 %v398
        %v564 = vunpack.c.h.b16 %v398
        %v565 = vunpack.c.l.b16 %v399
        %v566 = vunpack.c.h.b16 %v399
        %v567 = vunpack.c.l.b16 %v400
        %v568 = vunpack.c.h.b16 %v400
        %v569 = vunpack.c.l.b16 %v401
        %v570 = vunpack.c.h.b16 %v401
        %v571 = vunpack.c.l.b16 %v402
        %v572 = vunpack.c.h.b16 %v402
        %v573 = vunpack.c.l.b16 %v403
        %v574 = vunpack.c.h.b16 %v403
        %v575 = vunpack.c.l.b16 %v404
        %v576 = vunpack.c.h.b16 %v404
        %v577 = vunpack.c.l.b16 %v405
        %v578 = vunpack.c.h.b16 %v405
        %v579 = vunpack.c.l.b16 %v406
        %v580 = vunpack.c.h.b16 %v406
        %v581 = vunpack.c.l.b16 %v407
        %v582 = vunpack.c.h.b16 %v407
        %v583 = vunpack.c.l.b16 %v408
        %v584 = vunpack.c.h.b16 %v408
        %v585 = vpack.c.b16 %v537, %v521
        %v586 = vpack.c.b16 %v538, %v522
        %v587 = vpack.c.b16 %v539, %v523
        %v588 = vpack.c.b16 %v540, %v524
        %v589 = vpack.c.b16 %v541, %v525
        %v590 = vpack.c.b16 %v542, %v526
        %v591 = vpack.c.b16 %v543, %v527
        %v592 = vpack.c.b16 %v544, %v528
        %v593 = vpack.c.b16 %v545, %v529
        %v594 = vpack.c.b16 %v546, %v530
        %v595 = vpack.c.b16 %v547, %v531
        %v596 = vpack.c.b16 %v548, %v532
        %v597 = vpack.c.b16 %v549, %v533
        %v598 = vpack.c.b16 %v550, %v534
        %v599 = vpack.c.b16 %v551, %v535
        %v600 = vpack.c.b16 %v552, %v536
        %v601 = vpack.c.b16 %v569, %v553
        %v602 = vpack.c.b16 %v570, %v554
        %v603 = vpack.c.b16 %v571, %v555
        %v604 = vpack.c.b16 %v572, %v556
        %v605 = vpack.c.b16 %v573, %v557
        %v606 = vpack.c.b16 %v574, %v558
        %v607 = vpack.c.b16 %v575, %v559
        %v608 = vpack.c.b16 %v576, %v560
        %v609 = vpack.c.b16 %v577, %v561
        %v610 = vpack.c.b16 %v578, %v562
        %v611 = vpack.c.b16 %v579, %v563
        %v612 = vpack.c.b16 %v580, %v564
        %v613 = vpack.c.b16 %v581, %v565
        %v614 = vpack.c.b16 %v582, %v566
        %v615 = vpack.c.b16 %v583, %v567
        %v616 = vpack.c.b16 %v584, %v568
        %vm649 = vcmask 261120
        %v651 = vsel %vm649, %v473, 0
        %v654 = vsel %vm649, %v474, 0
        %v657 = vsel %vm649, %v475, 0
        %v660 = vsel %vm649, %v476, 0
        %v663 = vsel %vm649, %v477, 0
        %v666 = vsel %vm649, %v478, 0
        %v669 = vsel %vm649, %v479, 0
        %v672 = vsel %vm649, %v480, 0
        %v675 = vsel %vm649, %v481, 0
        %v678 = vsel %vm649, %v482, 0
        %v681 = vsel %vm649, %v483, 0
        %v684 = vsel %vm649, %v484, 0
        %v687 = vsel %vm649, %v485, 0
        %v690 = vsel %vm649, %v486, 0
        %v693 = vsel %vm649, %v487, 0
        %v696 = vsel %vm649, %v488, 0
        %698 = vmatprep.subr.bf16.mxu0 %v586
        %699 = vmatpush1.bf16.msra.mxu0 %v585
        %700 = vmatprep.subr.bf16.mxu0 %v602
        %701 = vmatpush1.bf16.msra.mxu0 %v601
        %702 = vmatprep.subr.bf16.mxu0 0
        %703 = vmatpush1.bf16.msra.mxu0 0
        %704 = vmatprep.subr.bf16.mxu0 0
        %705 = vmatpush1.bf16.msra.mxu0 0
        %706 = vmatprep.subr.bf16.mxu0 0
        %707 = vmatpush1.bf16.msra.mxu0 0
        %708 = vmatprep.subr.bf16.mxu0 0
        %709 = vmatpush1.bf16.msra.mxu0 0
        %710 = vmatprep.subr.bf16.mxu0 0
        %711 = vmatpush1.bf16.msra.mxu0 0
        %712 = vmatprep.subr.bf16.mxu0 0
        %713 = vmatpush1.bf16.msra.mxu0 0
        %714 = vmatprep.subr.bf16.mxu0 0
        %715 = vmatpush1.bf16.msra.mxu0 0
        %716 = vmatprep.subr.bf16.mxu0 0
        %717 = vmatpush1.bf16.msra.mxu0 0
        %718 = vmatprep.subr.bf16.mxu0 0
        %719 = vmatpush1.bf16.msra.mxu0 0
        %720 = vmatprep.subr.bf16.mxu0 0
        %721 = vmatpush1.bf16.msra.mxu0 0
        %722 = vmatprep.subr.bf16.mxu0 0
        %723 = vmatpush1.bf16.msra.mxu0 0
        %724 = vmatprep.subr.bf16.mxu0 0
        %725 = vmatpush1.bf16.msra.mxu0 0
        %726 = vmatprep.subr.bf16.mxu0 0
        %727 = vmatpush1.bf16.msra.mxu0 0
        %728 = vmatprep.subr.bf16.mxu0 0
        %729 = vmatpush1.bf16.msra.mxu0 0
        %730 = vmatprep.mubr.bf16.mxu0 0
        %731 = vmatmul.mubr.bf16.gmra.mrb[0].mxu0 %v651
        %v732 = vpop.f32.mrb[0].mxu0
        %v733 = vadd.f32 0.0, %v732
        %v734 = vpop.f32.mrb[0].mxu0
        %v735 = vadd.f32 0.0, %v734
        %v736 = vpop.f32.mrb[0].mxu0
        %v737 = vadd.f32 0.0, %v736
        %v738 = vpop.f32.mrb[0].mxu0
        %v739 = vadd.f32 0.0, %v738
        %740 = vmatprep.mubr.bf16.mxu0 0
        %741 = vmatmul.mubr.bf16.gmra.mrb[0].mxu0 %v654
        %v742 = vpop.f32.mrb[0].mxu0
        %v743 = vadd.f32 0.0, %v742
        %v744 = vpop.f32.mrb[0].mxu0
        %v745 = vadd.f32 0.0, %v744
        %v746 = vpop.f32.mrb[0].mxu0
        %v747 = vadd.f32 0.0, %v746
        %v748 = vpop.f32.mrb[0].mxu0
        %v749 = vadd.f32 0.0, %v748
        %750 = vmatprep.mubr.bf16.mxu0 0
        %751 = vmatmul.mubr.bf16.gmra.mrb[0].mxu0 %v657
        %v752 = vpop.f32.mrb[0].mxu0
        %v753 = vadd.f32 0.0, %v752
        %v754 = vpop.f32.mrb[0].mxu0
        %v755 = vadd.f32 0.0, %v754
        %v756 = vpop.f32.mrb[0].mxu0
        %v757 = vadd.f32 0.0, %v756
        %v758 = vpop.f32.mrb[0].mxu0
        %v759 = vadd.f32 0.0, %v758
        %760 = vmatprep.mubr.bf16.mxu0 0
        %761 = vmatmul.mubr.bf16.gmra.mrb[0].mxu0 %v660
        %v762 = vpop.f32.mrb[0].mxu0
        %v763 = vadd.f32 0.0, %v762
        %v764 = vpop.f32.mrb[0].mxu0
        %v765 = vadd.f32 0.0, %v764
        %v766 = vpop.f32.mrb[0].mxu0
        %v767 = vadd.f32 0.0, %v766
        %v768 = vpop.f32.mrb[0].mxu0
        %v769 = vadd.f32 0.0, %v768
        %770 = vmatprep.mubr.bf16.mxu0 0
        %771 = vmatmul.mubr.bf16.gmra.mrb[0].mxu0 %v663
        %v772 = vpop.f32.mrb[0].mxu0
        %v773 = vadd.f32 0.0, %v772
        %v774 = vpop.f32.mrb[0].mxu0
        %v775 = vadd.f32 0.0, %v774
        %v776 = vpop.f32.mrb[0].mxu0
        %v777 = vadd.f32 0.0, %v776
        %v778 = vpop.f32.mrb[0].mxu0
        %v779 = vadd.f32 0.0, %v778
        %780 = vmatprep.mubr.bf16.mxu0 0
        %781 = vmatmul.mubr.bf16.gmra.mrb[0].mxu0 %v666
        %v782 = vpop.f32.mrb[0].mxu0
        %v783 = vadd.f32 0.0, %v782
        %v784 = vpop.f32.mrb[0].mxu0
        %v785 = vadd.f32 0.0, %v784
        %v786 = vpop.f32.mrb[0].mxu0
        %v787 = vadd.f32 0.0, %v786
        %v788 = vpop.f32.mrb[0].mxu0
        %v789 = vadd.f32 0.0, %v788
        %790 = vmatprep.mubr.bf16.mxu0 0
        %791 = vmatmul.mubr.bf16.gmra.mrb[0].mxu0 %v669
        %v792 = vpop.f32.mrb[0].mxu0
        %v793 = vadd.f32 0.0, %v792
        %v794 = vpop.f32.mrb[0].mxu0
        %v795 = vadd.f32 0.0, %v794
        %v796 = vpop.f32.mrb[0].mxu0
        %v797 = vadd.f32 0.0, %v796
        %v798 = vpop.f32.mrb[0].mxu0
        %v799 = vadd.f32 0.0, %v798
        %800 = vmatprep.mubr.bf16.mxu0 0
        %801 = vmatmul.mubr.bf16.gmra.mrb[0].mxu0 %v672
        %v802 = vpop.f32.mrb[0].mxu0
        %v803 = vadd.f32 0.0, %v802
        %v804 = vpop.f32.mrb[0].mxu0
        %v805 = vadd.f32 0.0, %v804
        %v806 = vpop.f32.mrb[0].mxu0
        %v807 = vadd.f32 0.0, %v806
        %v808 = vpop.f32.mrb[0].mxu0
        %v809 = vadd.f32 0.0, %v808
        %810 = vmatprep.mubr.bf16.mxu0 0
        %811 = vmatmul.mubr.bf16.gmra.mrb[0].mxu0 %v675
        %v812 = vpop.f32.mrb[0].mxu0
        %v813 = vadd.f32 0.0, %v812
        %v814 = vpop.f32.mrb[0].mxu0
        %v815 = vadd.f32 0.0, %v814
        %v816 = vpop.f32.mrb[0].mxu0
        %v817 = vadd.f32 0.0, %v816
        %v818 = vpop.f32.mrb[0].mxu0
        %v819 = vadd.f32 0.0, %v818
        %820 = vmatprep.mubr.bf16.mxu0 0
        %821 = vmatmul.mubr.bf16.gmra.mrb[0].mxu0 %v678
        %v822 = vpop.f32.mrb[0].mxu0
        %v823 = vadd.f32 0.0, %v822
        %v824 = vpop.f32.mrb[0].mxu0
        %v825 = vadd.f32 0.0, %v824
        %v826 = vpop.f32.mrb[0].mxu0
        %v827 = vadd.f32 0.0, %v826
        %v828 = vpop.f32.mrb[0].mxu0
        %v829 = vadd.f32 0.0, %v828
        %830 = vmatprep.mubr.bf16.mxu0 0
        %831 = vmatmul.mubr.bf16.gmra.mrb[0].mxu0 %v681
        %v832 = vpop.f32.mrb[0].mxu0
        %v833 = vadd.f32 0.0, %v832
        %v834 = vpop.f32.mrb[0].mxu0
        %v835 = vadd.f32 0.0, %v834
        %v836 = vpop.f32.mrb[0].mxu0
        %v837 = vadd.f32 0.0, %v836
        %v838 = vpop.f32.mrb[0].mxu0
        %v839 = vadd.f32 0.0, %v838
        %840 = vmatprep.mubr.bf16.mxu0 0
        %841 = vmatmul.mubr.bf16.gmra.mrb[0].mxu0 %v684
        %v842 = vpop.f32.mrb[0].mxu0
        %v843 = vadd.f32 0.0, %v842
        %v844 = vpop.f32.mrb[0].mxu0
        %v845 = vadd.f32 0.0, %v844
        %v846 = vpop.f32.mrb[0].mxu0
        %v847 = vadd.f32 0.0, %v846
        %v848 = vpop.f32.mrb[0].mxu0
        %v849 = vadd.f32 0.0, %v848
        %850 = vmatprep.mubr.bf16.mxu0 0
        %851 = vmatmul.mubr.bf16.gmra.mrb[0].mxu0 %v687
        %v852 = vpop.f32.mrb[0].mxu0
        %v853 = vadd.f32 0.0, %v852
        %v854 = vpop.f32.mrb[0].mxu0
        %v855 = vadd.f32 0.0, %v854
        %v856 = vpop.f32.mrb[0].mxu0
        %v857 = vadd.f32 0.0, %v856
        %v858 = vpop.f32.mrb[0].mxu0
        %v859 = vadd.f32 0.0, %v858
        %860 = vmatprep.mubr.bf16.mxu0 0
        %861 = vmatmul.mubr.bf16.gmra.mrb[0].mxu0 %v690
        %v862 = vpop.f32.mrb[0].mxu0
        %v863 = vadd.f32 0.0, %v862
        %v864 = vpop.f32.mrb[0].mxu0
        %v865 = vadd.f32 0.0, %v864
        %v866 = vpop.f32.mrb[0].mxu0
        %v867 = vadd.f32 0.0, %v866
        %v868 = vpop.f32.mrb[0].mxu0
        %v869 = vadd.f32 0.0, %v868
        %870 = vmatprep.mubr.bf16.mxu0 0
        %871 = vmatmul.mubr.bf16.gmra.mrb[0].mxu0 %v693
        %v872 = vpop.f32.mrb[0].mxu0
        %v873 = vadd.f32 0.0, %v872
        %v874 = vpop.f32.mrb[0].mxu0
        %v875 = vadd.f32 0.0, %v874
        %v876 = vpop.f32.mrb[0].mxu0
        %v877 = vadd.f32 0.0, %v876
        %v878 = vpop.f32.mrb[0].mxu0
        %v879 = vadd.f32 0.0, %v878
        %880 = vmatprep.mubr.bf16.mxu0 0
        %881 = vmatmul.mubr.bf16.gmra.mrb[0].mxu0 %v696
        %v882 = vpop.f32.mrb[0].mxu0
        %v883 = vadd.f32 0.0, %v882
        %v884 = vpop.f32.mrb[0].mxu0
        %v885 = vadd.f32 0.0, %v884
        %v886 = vpop.f32.mrb[0].mxu0
        %v887 = vadd.f32 0.0, %v886
        %v888 = vpop.f32.mrb[0].mxu0
        %v889 = vadd.f32 0.0, %v888
        %890 = vdwg.mxu0
        %891 = vmatprep.subr.bf16.mxu0 %v588
        %892 = vmatpush1.bf16.msra.mxu0 %v587
        %893 = vmatprep.subr.bf16.mxu0 %v604
        %894 = vmatpush1.bf16.msra.mxu0 %v603
        %895 = vmatprep.subr.bf16.mxu0 0
        %896 = vmatpush1.bf16.msra.mxu0 0
        %897 = vmatprep.subr.bf16.mxu0 0
        %898 = vmatpush1.bf16.msra.mxu0 0
        %899 = vmatprep.subr.bf16.mxu0 0
        %900 = vmatpush1.bf16.msra.mxu0 0
        %901 = vmatprep.subr.bf16.mxu0 0
        %902 = vmatpush1.bf16.msra.mxu0 0
        %903 = vmatprep.subr.bf16.mxu0 0
        %904 = vmatpush1.bf16.msra.mxu0 0
        %905 = vmatprep.subr.bf16.mxu0 0
        %906 = vmatpush1.bf16.msra.mxu0 0
        %907 = vmatprep.subr.bf16.mxu0 0
        %908 = vmatpush1.bf16.msra.mxu0 0
        %909 = vmatprep.subr.bf16.mxu0 0
        %910 = vmatpush1.bf16.msra.mxu0 0
        %911 = vmatprep.subr.bf16.mxu0 0
        %912 = vmatpush1.bf16.msra.mxu0 0
        %913 = vmatprep.subr.bf16.mxu0 0
        %914 = vmatpush1.bf16.msra.mxu0 0
        %915 = vmatprep.subr.bf16.mxu0 0
        %916 = vmatpush1.bf16.msra.mxu0 0
        %917 = vmatprep.subr.bf16.mxu0 0
        %918 = vmatpush1.bf16.msra.mxu0 0
        %919 = vmatprep.subr.bf16.mxu0 0
        %920 = vmatpush1.bf16.msra.mxu0 0
        %921 = vmatprep.subr.bf16.mxu0 0
        %922 = vmatpush1.bf16.msra.mxu0 0
        %923 = vmatprep.mubr.bf16.mxu0 0
        %924 = vmatmul.mubr.bf16.gmra.mrb[0].mxu0 %v651
        %v925 = vpop.f32.mrb[0].mxu0
        %v926 = vadd.f32 0.0, %v925
        %v927 = vpop.f32.mrb[0].mxu0
        %v928 = vadd.f32 0.0, %v927
        %v929 = vpop.f32.mrb[0].mxu0
        %v930 = vadd.f32 0.0, %v929
        %v931 = vpop.f32.mrb[0].mxu0
        %v932 = vadd.f32 0.0, %v931
        %933 = vmatprep.mubr.bf16.mxu0 0
        %934 = vmatmul.mubr.bf16.gmra.mrb[0].mxu0 %v654
        %v935 = vpop.f32.mrb[0].mxu0
        %v936 = vadd.f32 0.0, %v935
        %v937 = vpop.f32.mrb[0].mxu0
        %v938 = vadd.f32 0.0, %v937
        %v939 = vpop.f32.mrb[0].mxu0
        %v940 = vadd.f32 0.0, %v939
        %v941 = vpop.f32.mrb[0].mxu0
        %v942 = vadd.f32 0.0, %v941
        %943 = vmatprep.mubr.bf16.mxu0 0
        %944 = vmatmul.mubr.bf16.gmra.mrb[0].mxu0 %v657
        %v945 = vpop.f32.mrb[0].mxu0
        %v946 = vadd.f32 0.0, %v945
        %v947 = vpop.f32.mrb[0].mxu0
        %v948 = vadd.f32 0.0, %v947
        %v949 = vpop.f32.mrb[0].mxu0
        %v950 = vadd.f32 0.0, %v949
        %v951 = vpop.f32.mrb[0].mxu0
        %v952 = vadd.f32 0.0, %v951
        %953 = vmatprep.mubr.bf16.mxu0 0
        %954 = vmatmul.mubr.bf16.gmra.mrb[0].mxu0 %v660
        %v955 = vpop.f32.mrb[0].mxu0
        %v956 = vadd.f32 0.0, %v955
        %v957 = vpop.f32.mrb[0].mxu0
        %v958 = vadd.f32 0.0, %v957
        %v959 = vpop.f32.mrb[0].mxu0
        %v960 = vadd.f32 0.0, %v959
        %v961 = vpop.f32.mrb[0].mxu0
        %v962 = vadd.f32 0.0, %v961
        %963 = vmatprep.mubr.bf16.mxu0 0
        %964 = vmatmul.mubr.bf16.gmra.mrb[0].mxu0 %v663
        %v965 = vpop.f32.mrb[0].mxu0
        %v966 = vadd.f32 0.0, %v965
        %v967 = vpop.f32.mrb[0].mxu0
        %v968 = vadd.f32 0.0, %v967
        %v969 = vpop.f32.mrb[0].mxu0
        %v970 = vadd.f32 0.0, %v969
        %v971 = vpop.f32.mrb[0].mxu0
        %v972 = vadd.f32 0.0, %v971
        %973 = vmatprep.mubr.bf16.mxu0 0
        %974 = vmatmul.mubr.bf16.gmra.mrb[0].mxu0 %v666
        %v975 = vpop.f32.mrb[0].mxu0
        %v976 = vadd.f32 0.0, %v975
        %v977 = vpop.f32.mrb[0].mxu0
        %v978 = vadd.f32 0.0, %v977
        %v979 = vpop.f32.mrb[0].mxu0
        %v980 = vadd.f32 0.0, %v979
        %v981 = vpop.f32.mrb[0].mxu0
        %v982 = vadd.f32 0.0, %v981
        %983 = vmatprep.mubr.bf16.mxu0 0
        %984 = vmatmul.mubr.bf16.gmra.mrb[0].mxu0 %v669
        %v985 = vpop.f32.mrb[0].mxu0
        %v986 = vadd.f32 0.0, %v985
        %v987 = vpop.f32.mrb[0].mxu0
        %v988 = vadd.f32 0.0, %v987
        %v989 = vpop.f32.mrb[0].mxu0
        %v990 = vadd.f32 0.0, %v989
        %v991 = vpop.f32.mrb[0].mxu0
        %v992 = vadd.f32 0.0, %v991
        %993 = vmatprep.mubr.bf16.mxu0 0
        %994 = vmatmul.mubr.bf16.gmra.mrb[0].mxu0 %v672
        %v995 = vpop.f32.mrb[0].mxu0
        %v996 = vadd.f32 0.0, %v995
        %v997 = vpop.f32.mrb[0].mxu0
        %v998 = vadd.f32 0.0, %v997
        %v999 = vpop.f32.mrb[0].mxu0
        %v1000 = vadd.f32 0.0, %v999
        %v1001 = vpop.f32.mrb[0].mxu0
        %v1002 = vadd.f32 0.0, %v1001
        %1003 = vmatprep.mubr.bf16.mxu0 0
        %1004 = vmatmul.mubr.bf16.gmra.mrb[0].mxu0 %v675
        %v1005 = vpop.f32.mrb[0].mxu0
        %v1006 = vadd.f32 0.0, %v1005
        %v1007 = vpop.f32.mrb[0].mxu0
        %v1008 = vadd.f32 0.0, %v1007
        %v1009 = vpop.f32.mrb[0].mxu0
        %v1010 = vadd.f32 0.0, %v1009
        %v1011 = vpop.f32.mrb[0].mxu0
        %v1012 = vadd.f32 0.0, %v1011
        %1013 = vmatprep.mubr.bf16.mxu0 0
        %1014 = vmatmul.mubr.bf16.gmra.mrb[0].mxu0 %v678
        %v1015 = vpop.f32.mrb[0].mxu0
        %v1016 = vadd.f32 0.0, %v1015
        %v1017 = vpop.f32.mrb[0].mxu0
        %v1018 = vadd.f32 0.0, %v1017
        %v1019 = vpop.f32.mrb[0].mxu0
        %v1020 = vadd.f32 0.0, %v1019
        %v1021 = vpop.f32.mrb[0].mxu0
        %v1022 = vadd.f32 0.0, %v1021
        %1023 = vmatprep.mubr.bf16.mxu0 0
        %1024 = vmatmul.mubr.bf16.gmra.mrb[0].mxu0 %v681
        %v1025 = vpop.f32.mrb[0].mxu0
        %v1026 = vadd.f32 0.0, %v1025
        %v1027 = vpop.f32.mrb[0].mxu0
        %v1028 = vadd.f32 0.0, %v1027
        %v1029 = vpop.f32.mrb[0].mxu0
        %v1030 = vadd.f32 0.0, %v1029
        %v1031 = vpop.f32.mrb[0].mxu0
        %v1032 = vadd.f32 0.0, %v1031
        %1033 = vmatprep.mubr.bf16.mxu0 0
        %1034 = vmatmul.mubr.bf16.gmra.mrb[0].mxu0 %v684
        %v1035 = vpop.f32.mrb[0].mxu0
        %v1036 = vadd.f32 0.0, %v1035
        %v1037 = vpop.f32.mrb[0].mxu0
        %v1038 = vadd.f32 0.0, %v1037
        %v1039 = vpop.f32.mrb[0].mxu0
        %v1040 = vadd.f32 0.0, %v1039
        %v1041 = vpop.f32.mrb[0].mxu0
        %v1042 = vadd.f32 0.0, %v1041
        %1043 = vmatprep.mubr.bf16.mxu0 0
        %1044 = vmatmul.mubr.bf16.gmra.mrb[0].mxu0 %v687
        %v1045 = vpop.f32.mrb[0].mxu0
        %v1046 = vadd.f32 0.0, %v1045
        %v1047 = vpop.f32.mrb[0].mxu0
        %v1048 = vadd.f32 0.0, %v1047
        %v1049 = vpop.f32.mrb[0].mxu0
        %v1050 = vadd.f32 0.0, %v1049
        %v1051 = vpop.f32.mrb[0].mxu0
        %v1052 = vadd.f32 0.0, %v1051
        %1053 = vmatprep.mubr.bf16.mxu0 0
        %1054 = vmatmul.mubr.bf16.gmra.mrb[0].mxu0 %v690
        %v1055 = vpop.f32.mrb[0].mxu0
        %v1056 = vadd.f32 0.0, %v1055
        %v1057 = vpop.f32.mrb[0].mxu0
        %v1058 = vadd.f32 0.0, %v1057
        %v1059 = vpop.f32.mrb[0].mxu0
        %v1060 = vadd.f32 0.0, %v1059
        %v1061 = vpop.f32.mrb[0].mxu0
        %v1062 = vadd.f32 0.0, %v1061
        %1063 = vmatprep.mubr.bf16.mxu0 0
        %1064 = vmatmul.mubr.bf16.gmra.mrb[0].mxu0 %v693
        %v1065 = vpop.f32.mrb[0].mxu0
        %v1066 = vadd.f32 0.0, %v1065
        %v1067 = vpop.f32.mrb[0].mxu0
        %v1068 = vadd.f32 0.0, %v1067
        %v1069 = vpop.f32.mrb[0].mxu0
        %v1070 = vadd.f32 0.0, %v1069
        %v1071 = vpop.f32.mrb[0].mxu0
        %v1072 = vadd.f32 0.0, %v1071
        %1073 = vmatprep.mubr.bf16.mxu0 0
        %1074 = vmatmul.mubr.bf16.gmra.mrb[0].mxu0 %v696
        %v1075 = vpop.f32.mrb[0].mxu0
        %v1076 = vadd.f32 0.0, %v1075
        %v1077 = vpop.f32.mrb[0].mxu0
        %v1078 = vadd.f32 0.0, %v1077
        %v1079 = vpop.f32.mrb[0].mxu0
        %v1080 = vadd.f32 0.0, %v1079
        %v1081 = vpop.f32.mrb[0].mxu0
        %v1082 = vadd.f32 0.0, %v1081
        %1083 = vdwg.mxu0
        %1084 = vmatprep.subr.bf16.mxu0 %v590
        %1085 = vmatpush1.bf16.msra.mxu0 %v589
        %1086 = vmatprep.subr.bf16.mxu0 %v606
        %1087 = vmatpush1.bf16.msra.mxu0 %v605
        %1088 = vmatprep.subr.bf16.mxu0 0
        %1089 = vmatpush1.bf16.msra.mxu0 0
        %1090 = vmatprep.subr.bf16.mxu0 0
        %1091 = vmatpush1.bf16.msra.mxu0 0
        %1092 = vmatprep.subr.bf16.mxu0 0
        %1093 = vmatpush1.bf16.msra.mxu0 0
        %1094 = vmatprep.subr.bf16.mxu0 0
        %1095 = vmatpush1.bf16.msra.mxu0 0
        %1096 = vmatprep.subr.bf16.mxu0 0
        %1097 = vmatpush1.bf16.msra.mxu0 0
        %1098 = vmatprep.subr.bf16.mxu0 0
        %1099 = vmatpush1.bf16.msra.mxu0 0
        %1100 = vmatprep.subr.bf16.mxu0 0
        %1101 = vmatpush1.bf16.msra.mxu0 0
        %1102 = vmatprep.subr.bf16.mxu0 0
        %1103 = vmatpush1.bf16.msra.mxu0 0
        %1104 = vmatprep.subr.bf16.mxu0 0
        %1105 = vmatpush1.bf16.msra.mxu0 0
        %1106 = vmatprep.subr.bf16.mxu0 0
        %1107 = vmatpush1.bf16.msra.mxu0 0
        %1108 = vmatprep.subr.bf16.mxu0 0
        %1109 = vmatpush1.bf16.msra.mxu0 0
        %1110 = vmatprep.subr.bf16.mxu0 0
        %1111 = vmatpush1.bf16.msra.mxu0 0
        %1112 = vmatprep.subr.bf16.mxu0 0
        %1113 = vmatpush1.bf16.msra.mxu0 0
        %1114 = vmatprep.subr.bf16.mxu0 0
        %1115 = vmatpush1.bf16.msra.mxu0 0
        %1116 = vmatprep.mubr.bf16.mxu0 0
        %1117 = vmatmul.mubr.bf16.gmra.mrb[0].mxu0 %v651
        %v1118 = vpop.f32.mrb[0].mxu0
        %v1119 = vadd.f32 0.0, %v1118
        %v1120 = vpop.f32.mrb[0].mxu0
        %v1121 = vadd.f32 0.0, %v1120
        %v1122 = vpop.f32.mrb[0].mxu0
        %v1123 = vadd.f32 0.0, %v1122
        %v1124 = vpop.f32.mrb[0].mxu0
        %v1125 = vadd.f32 0.0, %v1124
        %1126 = vmatprep.mubr.bf16.mxu0 0
        %1127 = vmatmul.mubr.bf16.gmra.mrb[0].mxu0 %v654
        %v1128 = vpop.f32.mrb[0].mxu0
        %v1129 = vadd.f32 0.0, %v1128
        %v1130 = vpop.f32.mrb[0].mxu0
        %v1131 = vadd.f32 0.0, %v1130
        %v1132 = vpop.f32.mrb[0].mxu0
        %v1133 = vadd.f32 0.0, %v1132
        %v1134 = vpop.f32.mrb[0].mxu0
        %v1135 = vadd.f32 0.0, %v1134
        %1136 = vmatprep.mubr.bf16.mxu0 0
        %1137 = vmatmul.mubr.bf16.gmra.mrb[0].mxu0 %v657
        %v1138 = vpop.f32.mrb[0].mxu0
        %v1139 = vadd.f32 0.0, %v1138
        %v1140 = vpop.f32.mrb[0].mxu0
        %v1141 = vadd.f32 0.0, %v1140
        %v1142 = vpop.f32.mrb[0].mxu0
        %v1143 = vadd.f32 0.0, %v1142
        %v1144 = vpop.f32.mrb[0].mxu0
        %v1145 = vadd.f32 0.0, %v1144
        %1146 = vmatprep.mubr.bf16.mxu0 0
        %1147 = vmatmul.mubr.bf16.gmra.mrb[0].mxu0 %v660
        %v1148 = vpop.f32.mrb[0].mxu0
        %v1149 = vadd.f32 0.0, %v1148
        %v1150 = vpop.f32.mrb[0].mxu0
        %v1151 = vadd.f32 0.0, %v1150
        %v1152 = vpop.f32.mrb[0].mxu0
        %v1153 = vadd.f32 0.0, %v1152
        %v1154 = vpop.f32.mrb[0].mxu0
        %v1155 = vadd.f32 0.0, %v1154
        %1156 = vmatprep.mubr.bf16.mxu0 0
        %1157 = vmatmul.mubr.bf16.gmra.mrb[0].mxu0 %v663
        %v1158 = vpop.f32.mrb[0].mxu0
        %v1159 = vadd.f32 0.0, %v1158
        %v1160 = vpop.f32.mrb[0].mxu0
        %v1161 = vadd.f32 0.0, %v1160
        %v1162 = vpop.f32.mrb[0].mxu0
        %v1163 = vadd.f32 0.0, %v1162
        %v1164 = vpop.f32.mrb[0].mxu0
        %v1165 = vadd.f32 0.0, %v1164
        %1166 = vmatprep.mubr.bf16.mxu0 0
        %1167 = vmatmul.mubr.bf16.gmra.mrb[0].mxu0 %v666
        %v1168 = vpop.f32.mrb[0].mxu0
        %v1169 = vadd.f32 0.0, %v1168
        %v1170 = vpop.f32.mrb[0].mxu0
        %v1171 = vadd.f32 0.0, %v1170
        %v1172 = vpop.f32.mrb[0].mxu0
        %v1173 = vadd.f32 0.0, %v1172
        %v1174 = vpop.f32.mrb[0].mxu0
        %v1175 = vadd.f32 0.0, %v1174
        %1176 = vmatprep.mubr.bf16.mxu0 0
        %1177 = vmatmul.mubr.bf16.gmra.mrb[0].mxu0 %v669
        %v1178 = vpop.f32.mrb[0].mxu0
        %v1179 = vadd.f32 0.0, %v1178
        %v1180 = vpop.f32.mrb[0].mxu0
        %v1181 = vadd.f32 0.0, %v1180
        %v1182 = vpop.f32.mrb[0].mxu0
        %v1183 = vadd.f32 0.0, %v1182
        %v1184 = vpop.f32.mrb[0].mxu0
        %v1185 = vadd.f32 0.0, %v1184
        %1186 = vmatprep.mubr.bf16.mxu0 0
        %1187 = vmatmul.mubr.bf16.gmra.mrb[0].mxu0 %v672
        %v1188 = vpop.f32.mrb[0].mxu0
        %v1189 = vadd.f32 0.0, %v1188
        %v1190 = vpop.f32.mrb[0].mxu0
        %v1191 = vadd.f32 0.0, %v1190
        %v1192 = vpop.f32.mrb[0].mxu0
        %v1193 = vadd.f32 0.0, %v1192
        %v1194 = vpop.f32.mrb[0].mxu0
        %v1195 = vadd.f32 0.0, %v1194
        %1196 = vmatprep.mubr.bf16.mxu0 0
        %1197 = vmatmul.mubr.bf16.gmra.mrb[0].mxu0 %v675
        %v1198 = vpop.f32.mrb[0].mxu0
        %v1199 = vadd.f32 0.0, %v1198
        %v1200 = vpop.f32.mrb[0].mxu0
        %v1201 = vadd.f32 0.0, %v1200
        %v1202 = vpop.f32.mrb[0].mxu0
        %v1203 = vadd.f32 0.0, %v1202
        %v1204 = vpop.f32.mrb[0].mxu0
        %v1205 = vadd.f32 0.0, %v1204
        %1206 = vmatprep.mubr.bf16.mxu0 0
        %1207 = vmatmul.mubr.bf16.gmra.mrb[0].mxu0 %v678
        %v1208 = vpop.f32.mrb[0].mxu0
        %v1209 = vadd.f32 0.0, %v1208
        %v1210 = vpop.f32.mrb[0].mxu0
        %v1211 = vadd.f32 0.0, %v1210
        %v1212 = vpop.f32.mrb[0].mxu0
        %v1213 = vadd.f32 0.0, %v1212
        %v1214 = vpop.f32.mrb[0].mxu0
        %v1215 = vadd.f32 0.0, %v1214
        %1216 = vmatprep.mubr.bf16.mxu0 0
        %1217 = vmatmul.mubr.bf16.gmra.mrb[0].mxu0 %v681
        %v1218 = vpop.f32.mrb[0].mxu0
        %v1219 = vadd.f32 0.0, %v1218
        %v1220 = vpop.f32.mrb[0].mxu0
        %v1221 = vadd.f32 0.0, %v1220
        %v1222 = vpop.f32.mrb[0].mxu0
        %v1223 = vadd.f32 0.0, %v1222
        %v1224 = vpop.f32.mrb[0].mxu0
        %v1225 = vadd.f32 0.0, %v1224
        %1226 = vmatprep.mubr.bf16.mxu0 0
        %1227 = vmatmul.mubr.bf16.gmra.mrb[0].mxu0 %v684
        %v1228 = vpop.f32.mrb[0].mxu0
        %v1229 = vadd.f32 0.0, %v1228
        %v1230 = vpop.f32.mrb[0].mxu0
        %v1231 = vadd.f32 0.0, %v1230
        %v1232 = vpop.f32.mrb[0].mxu0
        %v1233 = vadd.f32 0.0, %v1232
        %v1234 = vpop.f32.mrb[0].mxu0
        %v1235 = vadd.f32 0.0, %v1234
        %1236 = vmatprep.mubr.bf16.mxu0 0
        %1237 = vmatmul.mubr.bf16.gmra.mrb[0].mxu0 %v687
        %v1238 = vpop.f32.mrb[0].mxu0
        %v1239 = vadd.f32 0.0, %v1238
        %v1240 = vpop.f32.mrb[0].mxu0
        %v1241 = vadd.f32 0.0, %v1240
        %v1242 = vpop.f32.mrb[0].mxu0
        %v1243 = vadd.f32 0.0, %v1242
        %v1244 = vpop.f32.mrb[0].mxu0
        %v1245 = vadd.f32 0.0, %v1244
        %1246 = vmatprep.mubr.bf16.mxu0 0
        %1247 = vmatmul.mubr.bf16.gmra.mrb[0].mxu0 %v690
        %v1248 = vpop.f32.mrb[0].mxu0
        %v1249 = vadd.f32 0.0, %v1248
        %v1250 = vpop.f32.mrb[0].mxu0
        %v1251 = vadd.f32 0.0, %v1250
        %v1252 = vpop.f32.mrb[0].mxu0
        %v1253 = vadd.f32 0.0, %v1252
        %v1254 = vpop.f32.mrb[0].mxu0
        %v1255 = vadd.f32 0.0, %v1254
        %1256 = vmatprep.mubr.bf16.mxu0 0
        %1257 = vmatmul.mubr.bf16.gmra.mrb[0].mxu0 %v693
        %v1258 = vpop.f32.mrb[0].mxu0
        %v1259 = vadd.f32 0.0, %v1258
        %v1260 = vpop.f32.mrb[0].mxu0
        %v1261 = vadd.f32 0.0, %v1260
        %v1262 = vpop.f32.mrb[0].mxu0
        %v1263 = vadd.f32 0.0, %v1262
        %v1264 = vpop.f32.mrb[0].mxu0
        %v1265 = vadd.f32 0.0, %v1264
        %1266 = vmatprep.mubr.bf16.mxu0 0
        %1267 = vmatmul.mubr.bf16.gmra.mrb[0].mxu0 %v696
        %v1268 = vpop.f32.mrb[0].mxu0
        %v1269 = vadd.f32 0.0, %v1268
        %v1270 = vpop.f32.mrb[0].mxu0
        %v1271 = vadd.f32 0.0, %v1270
        %v1272 = vpop.f32.mrb[0].mxu0
        %v1273 = vadd.f32 0.0, %v1272
        %v1274 = vpop.f32.mrb[0].mxu0
        %v1275 = vadd.f32 0.0, %v1274
        %1276 = vdwg.mxu0
        %1277 = vmatprep.subr.bf16.mxu0 %v592
        %1278 = vmatpush1.bf16.msra.mxu0 %v591
        %1279 = vmatprep.subr.bf16.mxu0 %v608
        %1280 = vmatpush1.bf16.msra.mxu0 %v607
        %1281 = vmatprep.subr.bf16.mxu0 0
        %1282 = vmatpush1.bf16.msra.mxu0 0
        %1283 = vmatprep.subr.bf16.mxu0 0
        %1284 = vmatpush1.bf16.msra.mxu0 0
        %1285 = vmatprep.subr.bf16.mxu0 0
        %1286 = vmatpush1.bf16.msra.mxu0 0
        %1287 = vmatprep.subr.bf16.mxu0 0
        %1288 = vmatpush1.bf16.msra.mxu0 0
        %1289 = vmatprep.subr.bf16.mxu0 0
        %1290 = vmatpush1.bf16.msra.mxu0 0
        %1291 = vmatprep.subr.bf16.mxu0 0
        %1292 = vmatpush1.bf16.msra.mxu0 0
        %1293 = vmatprep.subr.bf16.mxu0 0
        %1294 = vmatpush1.bf16.msra.mxu0 0
        %1295 = vmatprep.subr.bf16.mxu0 0
        %1296 = vmatpush1.bf16.msra.mxu0 0
        %1297 = vmatprep.subr.bf16.mxu0 0
        %1298 = vmatpush1.bf16.msra.mxu0 0
        %1299 = vmatprep.subr.bf16.mxu0 0
        %1300 = vmatpush1.bf16.msra.mxu0 0
        %1301 = vmatprep.subr.bf16.mxu0 0
        %1302 = vmatpush1.bf16.msra.mxu0 0
        %1303 = vmatprep.subr.bf16.mxu0 0
        %1304 = vmatpush1.bf16.msra.mxu0 0
        %1305 = vmatprep.subr.bf16.mxu0 0
        %1306 = vmatpush1.bf16.msra.mxu0 0
        %1307 = vmatprep.subr.bf16.mxu0 0
        %1308 = vmatpush1.bf16.msra.mxu0 0
        %1309 = vmatprep.mubr.bf16.mxu0 0
        %1310 = vmatmul.mubr.bf16.gmra.mrb[0].mxu0 %v651
        %v1311 = vpop.f32.mrb[0].mxu0
        %v1312 = vadd.f32 0.0, %v1311
        %v1313 = vpop.f32.mrb[0].mxu0
        %v1314 = vadd.f32 0.0, %v1313
        %v1315 = vpop.f32.mrb[0].mxu0
        %v1316 = vadd.f32 0.0, %v1315
        %v1317 = vpop.f32.mrb[0].mxu0
        %v1318 = vadd.f32 0.0, %v1317
        %1319 = vmatprep.mubr.bf16.mxu0 0
        %1320 = vmatmul.mubr.bf16.gmra.mrb[0].mxu0 %v654
        %v1321 = vpop.f32.mrb[0].mxu0
        %v1322 = vadd.f32 0.0, %v1321
        %v1323 = vpop.f32.mrb[0].mxu0
        %v1324 = vadd.f32 0.0, %v1323
        %v1325 = vpop.f32.mrb[0].mxu0
        %v1326 = vadd.f32 0.0, %v1325
        %v1327 = vpop.f32.mrb[0].mxu0
        %v1328 = vadd.f32 0.0, %v1327
        %1329 = vmatprep.mubr.bf16.mxu0 0
        %1330 = vmatmul.mubr.bf16.gmra.mrb[0].mxu0 %v657
        %v1331 = vpop.f32.mrb[0].mxu0
        %v1332 = vadd.f32 0.0, %v1331
        %v1333 = vpop.f32.mrb[0].mxu0
        %v1334 = vadd.f32 0.0, %v1333
        %v1335 = vpop.f32.mrb[0].mxu0
        %v1336 = vadd.f32 0.0, %v1335
        %v1337 = vpop.f32.mrb[0].mxu0
        %v1338 = vadd.f32 0.0, %v1337
        %1339 = vmatprep.mubr.bf16.mxu0 0
        %1340 = vmatmul.mubr.bf16.gmra.mrb[0].mxu0 %v660
        %v1341 = vpop.f32.mrb[0].mxu0
        %v1342 = vadd.f32 0.0, %v1341
        %v1343 = vpop.f32.mrb[0].mxu0
        %v1344 = vadd.f32 0.0, %v1343
        %v1345 = vpop.f32.mrb[0].mxu0
        %v1346 = vadd.f32 0.0, %v1345
        %v1347 = vpop.f32.mrb[0].mxu0
        %v1348 = vadd.f32 0.0, %v1347
        %1349 = vmatprep.mubr.bf16.mxu0 0
        %1350 = vmatmul.mubr.bf16.gmra.mrb[0].mxu0 %v663
        %v1351 = vpop.f32.mrb[0].mxu0
        %v1352 = vadd.f32 0.0, %v1351
        %v1353 = vpop.f32.mrb[0].mxu0
        %v1354 = vadd.f32 0.0, %v1353
        %v1355 = vpop.f32.mrb[0].mxu0
        %v1356 = vadd.f32 0.0, %v1355
        %v1357 = vpop.f32.mrb[0].mxu0
        %v1358 = vadd.f32 0.0, %v1357
        %1359 = vmatprep.mubr.bf16.mxu0 0
        %1360 = vmatmul.mubr.bf16.gmra.mrb[0].mxu0 %v666
        %v1361 = vpop.f32.mrb[0].mxu0
        %v1362 = vadd.f32 0.0, %v1361
        %v1363 = vpop.f32.mrb[0].mxu0
        %v1364 = vadd.f32 0.0, %v1363
        %v1365 = vpop.f32.mrb[0].mxu0
        %v1366 = vadd.f32 0.0, %v1365
        %v1367 = vpop.f32.mrb[0].mxu0
        %v1368 = vadd.f32 0.0, %v1367
        %1369 = vmatprep.mubr.bf16.mxu0 0
        %1370 = vmatmul.mubr.bf16.gmra.mrb[0].mxu0 %v669
        %v1371 = vpop.f32.mrb[0].mxu0
        %v1372 = vadd.f32 0.0, %v1371
        %v1373 = vpop.f32.mrb[0].mxu0
        %v1374 = vadd.f32 0.0, %v1373
        %v1375 = vpop.f32.mrb[0].mxu0
        %v1376 = vadd.f32 0.0, %v1375
        %v1377 = vpop.f32.mrb[0].mxu0
        %v1378 = vadd.f32 0.0, %v1377
        %1379 = vmatprep.mubr.bf16.mxu0 0
        %1380 = vmatmul.mubr.bf16.gmra.mrb[0].mxu0 %v672
        %v1381 = vpop.f32.mrb[0].mxu0
        %v1382 = vadd.f32 0.0, %v1381
        %v1383 = vpop.f32.mrb[0].mxu0
        %v1384 = vadd.f32 0.0, %v1383
        %v1385 = vpop.f32.mrb[0].mxu0
        %v1386 = vadd.f32 0.0, %v1385
        %v1387 = vpop.f32.mrb[0].mxu0
        %v1388 = vadd.f32 0.0, %v1387
        %1389 = vmatprep.mubr.bf16.mxu0 0
        %1390 = vmatmul.mubr.bf16.gmra.mrb[0].mxu0 %v675
        %v1391 = vpop.f32.mrb[0].mxu0
        %v1392 = vadd.f32 0.0, %v1391
        %v1393 = vpop.f32.mrb[0].mxu0
        %v1394 = vadd.f32 0.0, %v1393
        %v1395 = vpop.f32.mrb[0].mxu0
        %v1396 = vadd.f32 0.0, %v1395
        %v1397 = vpop.f32.mrb[0].mxu0
        %v1398 = vadd.f32 0.0, %v1397
        %1399 = vmatprep.mubr.bf16.mxu0 0
        %1400 = vmatmul.mubr.bf16.gmra.mrb[0].mxu0 %v678
        %v1401 = vpop.f32.mrb[0].mxu0
        %v1402 = vadd.f32 0.0, %v1401
        %v1403 = vpop.f32.mrb[0].mxu0
        %v1404 = vadd.f32 0.0, %v1403
        %v1405 = vpop.f32.mrb[0].mxu0
        %v1406 = vadd.f32 0.0, %v1405
        %v1407 = vpop.f32.mrb[0].mxu0
        %v1408 = vadd.f32 0.0, %v1407
        %1409 = vmatprep.mubr.bf16.mxu0 0
        %1410 = vmatmul.mubr.bf16.gmra.mrb[0].mxu0 %v681
        %v1411 = vpop.f32.mrb[0].mxu0
        %v1412 = vadd.f32 0.0, %v1411
        %v1413 = vpop.f32.mrb[0].mxu0
        %v1414 = vadd.f32 0.0, %v1413
        %v1415 = vpop.f32.mrb[0].mxu0
        %v1416 = vadd.f32 0.0, %v1415
        %v1417 = vpop.f32.mrb[0].mxu0
        %v1418 = vadd.f32 0.0, %v1417
        %1419 = vmatprep.mubr.bf16.mxu0 0
        %1420 = vmatmul.mubr.bf16.gmra.mrb[0].mxu0 %v684
        %v1421 = vpop.f32.mrb[0].mxu0
        %v1422 = vadd.f32 0.0, %v1421
        %v1423 = vpop.f32.mrb[0].mxu0
        %v1424 = vadd.f32 0.0, %v1423
        %v1425 = vpop.f32.mrb[0].mxu0
        %v1426 = vadd.f32 0.0, %v1425
        %v1427 = vpop.f32.mrb[0].mxu0
        %v1428 = vadd.f32 0.0, %v1427
        %1429 = vmatprep.mubr.bf16.mxu0 0
        %1430 = vmatmul.mubr.bf16.gmra.mrb[0].mxu0 %v687
        %v1431 = vpop.f32.mrb[0].mxu0
        %v1432 = vadd.f32 0.0, %v1431
        %v1433 = vpop.f32.mrb[0].mxu0
        %v1434 = vadd.f32 0.0, %v1433
        %v1435 = vpop.f32.mrb[0].mxu0
        %v1436 = vadd.f32 0.0, %v1435
        %v1437 = vpop.f32.mrb[0].mxu0
        %v1438 = vadd.f32 0.0, %v1437
        %1439 = vmatprep.mubr.bf16.mxu0 0
        %1440 = vmatmul.mubr.bf16.gmra.mrb[0].mxu0 %v690
        %v1441 = vpop.f32.mrb[0].mxu0
        %v1442 = vadd.f32 0.0, %v1441
        %v1443 = vpop.f32.mrb[0].mxu0
        %v1444 = vadd.f32 0.0, %v1443
        %v1445 = vpop.f32.mrb[0].mxu0
        %v1446 = vadd.f32 0.0, %v1445
        %v1447 = vpop.f32.mrb[0].mxu0
        %v1448 = vadd.f32 0.0, %v1447
        %1449 = vmatprep.mubr.bf16.mxu0 0
        %1450 = vmatmul.mubr.bf16.gmra.mrb[0].mxu0 %v693
        %v1451 = vpop.f32.mrb[0].mxu0
        %v1452 = vadd.f32 0.0, %v1451
        %v1453 = vpop.f32.mrb[0].mxu0
        %v1454 = vadd.f32 0.0, %v1453
        %v1455 = vpop.f32.mrb[0].mxu0
        %v1456 = vadd.f32 0.0, %v1455
        %v1457 = vpop.f32.mrb[0].mxu0
        %v1458 = vadd.f32 0.0, %v1457
        %1459 = vmatprep.mubr.bf16.mxu0 0
        %1460 = vmatmul.mubr.bf16.gmra.mrb[0].mxu0 %v696
        %v1461 = vpop.f32.mrb[0].mxu0
        %v1462 = vadd.f32 0.0, %v1461
        %v1463 = vpop.f32.mrb[0].mxu0
        %v1464 = vadd.f32 0.0, %v1463
        %v1465 = vpop.f32.mrb[0].mxu0
        %v1466 = vadd.f32 0.0, %v1465
        %v1467 = vpop.f32.mrb[0].mxu0
        %v1468 = vadd.f32 0.0, %v1467
        %1469 = vdwg.mxu0
        %1470 = vmatprep.subr.bf16.mxu0 %v594
        %1471 = vmatpush1.bf16.msra.mxu0 %v593
        %1472 = vmatprep.subr.bf16.mxu0 %v610
        %1473 = vmatpush1.bf16.msra.mxu0 %v609
        %1474 = vmatprep.subr.bf16.mxu0 0
        %1475 = vmatpush1.bf16.msra.mxu0 0
        %1476 = vmatprep.subr.bf16.mxu0 0
        %1477 = vmatpush1.bf16.msra.mxu0 0
        %1478 = vmatprep.subr.bf16.mxu0 0
        %1479 = vmatpush1.bf16.msra.mxu0 0
        %1480 = vmatprep.subr.bf16.mxu0 0
        %1481 = vmatpush1.bf16.msra.mxu0 0
        %1482 = vmatprep.subr.bf16.mxu0 0
        %1483 = vmatpush1.bf16.msra.mxu0 0
        %1484 = vmatprep.subr.bf16.mxu0 0
        %1485 = vmatpush1.bf16.msra.mxu0 0
        %1486 = vmatprep.subr.bf16.mxu0 0
        %1487 = vmatpush1.bf16.msra.mxu0 0
        %1488 = vmatprep.subr.bf16.mxu0 0
        %1489 = vmatpush1.bf16.msra.mxu0 0
        %1490 = vmatprep.subr.bf16.mxu0 0
        %1491 = vmatpush1.bf16.msra.mxu0 0
        %1492 = vmatprep.subr.bf16.mxu0 0
        %1493 = vmatpush1.bf16.msra.mxu0 0
        %1494 = vmatprep.subr.bf16.mxu0 0
        %1495 = vmatpush1.bf16.msra.mxu0 0
        %1496 = vmatprep.subr.bf16.mxu0 0
        %1497 = vmatpush1.bf16.msra.mxu0 0
        %1498 = vmatprep.subr.bf16.mxu0 0
        %1499 = vmatpush1.bf16.msra.mxu0 0
        %1500 = vmatprep.subr.bf16.mxu0 0
        %1501 = vmatpush1.bf16.msra.mxu0 0
        %1502 = vmatprep.mubr.bf16.mxu0 0
        %1503 = vmatmul.mubr.bf16.gmra.mrb[0].mxu0 %v651
        %v1504 = vpop.f32.mrb[0].mxu0
        %v1505 = vadd.f32 0.0, %v1504
        %v1506 = vpop.f32.mrb[0].mxu0
        %v1507 = vadd.f32 0.0, %v1506
        %v1508 = vpop.f32.mrb[0].mxu0
        %v1509 = vadd.f32 0.0, %v1508
        %v1510 = vpop.f32.mrb[0].mxu0
        %v1511 = vadd.f32 0.0, %v1510
        %1512 = vmatprep.mubr.bf16.mxu0 0
        %1513 = vmatmul.mubr.bf16.gmra.mrb[0].mxu0 %v654
        %v1514 = vpop.f32.mrb[0].mxu0
        %v1515 = vadd.f32 0.0, %v1514
        %v1516 = vpop.f32.mrb[0].mxu0
        %v1517 = vadd.f32 0.0, %v1516
        %v1518 = vpop.f32.mrb[0].mxu0
        %v1519 = vadd.f32 0.0, %v1518
        %v1520 = vpop.f32.mrb[0].mxu0
        %v1521 = vadd.f32 0.0, %v1520
        %1522 = vmatprep.mubr.bf16.mxu0 0
        %1523 = vmatmul.mubr.bf16.gmra.mrb[0].mxu0 %v657
        %v1524 = vpop.f32.mrb[0].mxu0
        %v1525 = vadd.f32 0.0, %v1524
        %v1526 = vpop.f32.mrb[0].mxu0
        %v1527 = vadd.f32 0.0, %v1526
        %v1528 = vpop.f32.mrb[0].mxu0
        %v1529 = vadd.f32 0.0, %v1528
        %v1530 = vpop.f32.mrb[0].mxu0
        %v1531 = vadd.f32 0.0, %v1530
        %1532 = vmatprep.mubr.bf16.mxu0 0
        %1533 = vmatmul.mubr.bf16.gmra.mrb[0].mxu0 %v660
        %v1534 = vpop.f32.mrb[0].mxu0
        %v1535 = vadd.f32 0.0, %v1534
        %v1536 = vpop.f32.mrb[0].mxu0
        %v1537 = vadd.f32 0.0, %v1536
        %v1538 = vpop.f32.mrb[0].mxu0
        %v1539 = vadd.f32 0.0, %v1538
        %v1540 = vpop.f32.mrb[0].mxu0
        %v1541 = vadd.f32 0.0, %v1540
        %1542 = vmatprep.mubr.bf16.mxu0 0
        %1543 = vmatmul.mubr.bf16.gmra.mrb[0].mxu0 %v663
        %v1544 = vpop.f32.mrb[0].mxu0
        %v1545 = vadd.f32 0.0, %v1544
        %v1546 = vpop.f32.mrb[0].mxu0
        %v1547 = vadd.f32 0.0, %v1546
        %v1548 = vpop.f32.mrb[0].mxu0
        %v1549 = vadd.f32 0.0, %v1548
        %v1550 = vpop.f32.mrb[0].mxu0
        %v1551 = vadd.f32 0.0, %v1550
        %1552 = vmatprep.mubr.bf16.mxu0 0
        %1553 = vmatmul.mubr.bf16.gmra.mrb[0].mxu0 %v666
        %v1554 = vpop.f32.mrb[0].mxu0
        %v1555 = vadd.f32 0.0, %v1554
        %v1556 = vpop.f32.mrb[0].mxu0
        %v1557 = vadd.f32 0.0, %v1556
        %v1558 = vpop.f32.mrb[0].mxu0
        %v1559 = vadd.f32 0.0, %v1558
        %v1560 = vpop.f32.mrb[0].mxu0
        %v1561 = vadd.f32 0.0, %v1560
        %1562 = vmatprep.mubr.bf16.mxu0 0
        %1563 = vmatmul.mubr.bf16.gmra.mrb[0].mxu0 %v669
        %v1564 = vpop.f32.mrb[0].mxu0
        %v1565 = vadd.f32 0.0, %v1564
        %v1566 = vpop.f32.mrb[0].mxu0
        %v1567 = vadd.f32 0.0, %v1566
        %v1568 = vpop.f32.mrb[0].mxu0
        %v1569 = vadd.f32 0.0, %v1568
        %v1570 = vpop.f32.mrb[0].mxu0
        %v1571 = vadd.f32 0.0, %v1570
        %1572 = vmatprep.mubr.bf16.mxu0 0
        %1573 = vmatmul.mubr.bf16.gmra.mrb[0].mxu0 %v672
        %v1574 = vpop.f32.mrb[0].mxu0
        %v1575 = vadd.f32 0.0, %v1574
        %v1576 = vpop.f32.mrb[0].mxu0
        %v1577 = vadd.f32 0.0, %v1576
        %v1578 = vpop.f32.mrb[0].mxu0
        %v1579 = vadd.f32 0.0, %v1578
        %v1580 = vpop.f32.mrb[0].mxu0
        %v1581 = vadd.f32 0.0, %v1580
        %1582 = vmatprep.mubr.bf16.mxu0 0
        %1583 = vmatmul.mubr.bf16.gmra.mrb[0].mxu0 %v675
        %v1584 = vpop.f32.mrb[0].mxu0
        %v1585 = vadd.f32 0.0, %v1584
        %v1586 = vpop.f32.mrb[0].mxu0
        %v1587 = vadd.f32 0.0, %v1586
        %v1588 = vpop.f32.mrb[0].mxu0
        %v1589 = vadd.f32 0.0, %v1588
        %v1590 = vpop.f32.mrb[0].mxu0
        %v1591 = vadd.f32 0.0, %v1590
        %1592 = vmatprep.mubr.bf16.mxu0 0
        %1593 = vmatmul.mubr.bf16.gmra.mrb[0].mxu0 %v678
        %v1594 = vpop.f32.mrb[0].mxu0
        %v1595 = vadd.f32 0.0, %v1594
        %v1596 = vpop.f32.mrb[0].mxu0
        %v1597 = vadd.f32 0.0, %v1596
        %v1598 = vpop.f32.mrb[0].mxu0
        %v1599 = vadd.f32 0.0, %v1598
        %v1600 = vpop.f32.mrb[0].mxu0
        %v1601 = vadd.f32 0.0, %v1600
        %1602 = vmatprep.mubr.bf16.mxu0 0
        %1603 = vmatmul.mubr.bf16.gmra.mrb[0].mxu0 %v681
        %v1604 = vpop.f32.mrb[0].mxu0
        %v1605 = vadd.f32 0.0, %v1604
        %v1606 = vpop.f32.mrb[0].mxu0
        %v1607 = vadd.f32 0.0, %v1606
        %v1608 = vpop.f32.mrb[0].mxu0
        %v1609 = vadd.f32 0.0, %v1608
        %v1610 = vpop.f32.mrb[0].mxu0
        %v1611 = vadd.f32 0.0, %v1610
        %1612 = vmatprep.mubr.bf16.mxu0 0
        %1613 = vmatmul.mubr.bf16.gmra.mrb[0].mxu0 %v684
        %v1614 = vpop.f32.mrb[0].mxu0
        %v1615 = vadd.f32 0.0, %v1614
        %v1616 = vpop.f32.mrb[0].mxu0
        %v1617 = vadd.f32 0.0, %v1616
        %v1618 = vpop.f32.mrb[0].mxu0
        %v1619 = vadd.f32 0.0, %v1618
        %v1620 = vpop.f32.mrb[0].mxu0
        %v1621 = vadd.f32 0.0, %v1620
        %1622 = vmatprep.mubr.bf16.mxu0 0
        %1623 = vmatmul.mubr.bf16.gmra.mrb[0].mxu0 %v687
        %v1624 = vpop.f32.mrb[0].mxu0
        %v1625 = vadd.f32 0.0, %v1624
        %v1626 = vpop.f32.mrb[0].mxu0
        %v1627 = vadd.f32 0.0, %v1626
        %v1628 = vpop.f32.mrb[0].mxu0
        %v1629 = vadd.f32 0.0, %v1628
        %v1630 = vpop.f32.mrb[0].mxu0
        %v1631 = vadd.f32 0.0, %v1630
        %1632 = vmatprep.mubr.bf16.mxu0 0
        %1633 = vmatmul.mubr.bf16.gmra.mrb[0].mxu0 %v690
        %v1634 = vpop.f32.mrb[0].mxu0
        %v1635 = vadd.f32 0.0, %v1634
        %v1636 = vpop.f32.mrb[0].mxu0
        %v1637 = vadd.f32 0.0, %v1636
        %v1638 = vpop.f32.mrb[0].mxu0
        %v1639 = vadd.f32 0.0, %v1638
        %v1640 = vpop.f32.mrb[0].mxu0
        %v1641 = vadd.f32 0.0, %v1640
        %1642 = vmatprep.mubr.bf16.mxu0 0
        %1643 = vmatmul.mubr.bf16.gmra.mrb[0].mxu0 %v693
        %v1644 = vpop.f32.mrb[0].mxu0
        %v1645 = vadd.f32 0.0, %v1644
        %v1646 = vpop.f32.mrb[0].mxu0
        %v1647 = vadd.f32 0.0, %v1646
        %v1648 = vpop.f32.mrb[0].mxu0
        %v1649 = vadd.f32 0.0, %v1648
        %v1650 = vpop.f32.mrb[0].mxu0
        %v1651 = vadd.f32 0.0, %v1650
        %1652 = vmatprep.mubr.bf16.mxu0 0
        %1653 = vmatmul.mubr.bf16.gmra.mrb[0].mxu0 %v696
        %v1654 = vpop.f32.mrb[0].mxu0
        %v1655 = vadd.f32 0.0, %v1654
        %v1656 = vpop.f32.mrb[0].mxu0
        %v1657 = vadd.f32 0.0, %v1656
        %v1658 = vpop.f32.mrb[0].mxu0
        %v1659 = vadd.f32 0.0, %v1658
        %v1660 = vpop.f32.mrb[0].mxu0
        %v1661 = vadd.f32 0.0, %v1660
        %1662 = vdwg.mxu0
        %1663 = vmatprep.subr.bf16.mxu0 %v596
        %1664 = vmatpush1.bf16.msra.mxu0 %v595
        %1665 = vmatprep.subr.bf16.mxu0 %v612
        %1666 = vmatpush1.bf16.msra.mxu0 %v611
        %1667 = vmatprep.subr.bf16.mxu0 0
        %1668 = vmatpush1.bf16.msra.mxu0 0
        %1669 = vmatprep.subr.bf16.mxu0 0
        %1670 = vmatpush1.bf16.msra.mxu0 0
        %1671 = vmatprep.subr.bf16.mxu0 0
        %1672 = vmatpush1.bf16.msra.mxu0 0
        %1673 = vmatprep.subr.bf16.mxu0 0
        %1674 = vmatpush1.bf16.msra.mxu0 0
        %1675 = vmatprep.subr.bf16.mxu0 0
        %1676 = vmatpush1.bf16.msra.mxu0 0
        %1677 = vmatprep.subr.bf16.mxu0 0
        %1678 = vmatpush1.bf16.msra.mxu0 0
        %1679 = vmatprep.subr.bf16.mxu0 0
        %1680 = vmatpush1.bf16.msra.mxu0 0
        %1681 = vmatprep.subr.bf16.mxu0 0
        %1682 = vmatpush1.bf16.msra.mxu0 0
        %1683 = vmatprep.subr.bf16.mxu0 0
        %1684 = vmatpush1.bf16.msra.mxu0 0
        %1685 = vmatprep.subr.bf16.mxu0 0
        %1686 = vmatpush1.bf16.msra.mxu0 0
        %1687 = vmatprep.subr.bf16.mxu0 0
        %1688 = vmatpush1.bf16.msra.mxu0 0
        %1689 = vmatprep.subr.bf16.mxu0 0
        %1690 = vmatpush1.bf16.msra.mxu0 0
        %1691 = vmatprep.subr.bf16.mxu0 0
        %1692 = vmatpush1.bf16.msra.mxu0 0
        %1693 = vmatprep.subr.bf16.mxu0 0
        %1694 = vmatpush1.bf16.msra.mxu0 0
        %1695 = vmatprep.mubr.bf16.mxu0 0
        %1696 = vmatmul.mubr.bf16.gmra.mrb[0].mxu0 %v651
        %v1697 = vpop.f32.mrb[0].mxu0
        %v1698 = vadd.f32 0.0, %v1697
        %v1699 = vpop.f32.mrb[0].mxu0
        %v1700 = vadd.f32 0.0, %v1699
        %v1701 = vpop.f32.mrb[0].mxu0
        %v1702 = vadd.f32 0.0, %v1701
        %v1703 = vpop.f32.mrb[0].mxu0
        %v1704 = vadd.f32 0.0, %v1703
        %1705 = vmatprep.mubr.bf16.mxu0 0
        %1706 = vmatmul.mubr.bf16.gmra.mrb[0].mxu0 %v654
        %v1707 = vpop.f32.mrb[0].mxu0
        %v1708 = vadd.f32 0.0, %v1707
        %v1709 = vpop.f32.mrb[0].mxu0
        %v1710 = vadd.f32 0.0, %v1709
        %v1711 = vpop.f32.mrb[0].mxu0
        %v1712 = vadd.f32 0.0, %v1711
        %v1713 = vpop.f32.mrb[0].mxu0
        %v1714 = vadd.f32 0.0, %v1713
        %1715 = vmatprep.mubr.bf16.mxu0 0
        %1716 = vmatmul.mubr.bf16.gmra.mrb[0].mxu0 %v657
        %v1717 = vpop.f32.mrb[0].mxu0
        %v1718 = vadd.f32 0.0, %v1717
        %v1719 = vpop.f32.mrb[0].mxu0
        %v1720 = vadd.f32 0.0, %v1719
        %v1721 = vpop.f32.mrb[0].mxu0
        %v1722 = vadd.f32 0.0, %v1721
        %v1723 = vpop.f32.mrb[0].mxu0
        %v1724 = vadd.f32 0.0, %v1723
        %1725 = vmatprep.mubr.bf16.mxu0 0
        %1726 = vmatmul.mubr.bf16.gmra.mrb[0].mxu0 %v660
        %v1727 = vpop.f32.mrb[0].mxu0
        %v1728 = vadd.f32 0.0, %v1727
        %v1729 = vpop.f32.mrb[0].mxu0
        %v1730 = vadd.f32 0.0, %v1729
        %v1731 = vpop.f32.mrb[0].mxu0
        %v1732 = vadd.f32 0.0, %v1731
        %v1733 = vpop.f32.mrb[0].mxu0
        %v1734 = vadd.f32 0.0, %v1733
        %1735 = vmatprep.mubr.bf16.mxu0 0
        %1736 = vmatmul.mubr.bf16.gmra.mrb[0].mxu0 %v663
        %v1737 = vpop.f32.mrb[0].mxu0
        %v1738 = vadd.f32 0.0, %v1737
        %v1739 = vpop.f32.mrb[0].mxu0
        %v1740 = vadd.f32 0.0, %v1739
        %v1741 = vpop.f32.mrb[0].mxu0
        %v1742 = vadd.f32 0.0, %v1741
        %v1743 = vpop.f32.mrb[0].mxu0
        %v1744 = vadd.f32 0.0, %v1743
        %1745 = vmatprep.mubr.bf16.mxu0 0
        %1746 = vmatmul.mubr.bf16.gmra.mrb[0].mxu0 %v666
        %v1747 = vpop.f32.mrb[0].mxu0
        %v1748 = vadd.f32 0.0, %v1747
        %v1749 = vpop.f32.mrb[0].mxu0
        %v1750 = vadd.f32 0.0, %v1749
        %v1751 = vpop.f32.mrb[0].mxu0
        %v1752 = vadd.f32 0.0, %v1751
        %v1753 = vpop.f32.mrb[0].mxu0
        %v1754 = vadd.f32 0.0, %v1753
        %1755 = vmatprep.mubr.bf16.mxu0 0
        %1756 = vmatmul.mubr.bf16.gmra.mrb[0].mxu0 %v669
        %v1757 = vpop.f32.mrb[0].mxu0
        %v1758 = vadd.f32 0.0, %v1757
        %v1759 = vpop.f32.mrb[0].mxu0
        %v1760 = vadd.f32 0.0, %v1759
        %v1761 = vpop.f32.mrb[0].mxu0
        %v1762 = vadd.f32 0.0, %v1761
        %v1763 = vpop.f32.mrb[0].mxu0
        %v1764 = vadd.f32 0.0, %v1763
        %1765 = vmatprep.mubr.bf16.mxu0 0
        %1766 = vmatmul.mubr.bf16.gmra.mrb[0].mxu0 %v672
        %v1767 = vpop.f32.mrb[0].mxu0
        %v1768 = vadd.f32 0.0, %v1767
        %v1769 = vpop.f32.mrb[0].mxu0
        %v1770 = vadd.f32 0.0, %v1769
        %v1771 = vpop.f32.mrb[0].mxu0
        %v1772 = vadd.f32 0.0, %v1771
        %v1773 = vpop.f32.mrb[0].mxu0
        %v1774 = vadd.f32 0.0, %v1773
        %1775 = vmatprep.mubr.bf16.mxu0 0
        %1776 = vmatmul.mubr.bf16.gmra.mrb[0].mxu0 %v675
        %v1777 = vpop.f32.mrb[0].mxu0
        %v1778 = vadd.f32 0.0, %v1777
        %v1779 = vpop.f32.mrb[0].mxu0
        %v1780 = vadd.f32 0.0, %v1779
        %v1781 = vpop.f32.mrb[0].mxu0
        %v1782 = vadd.f32 0.0, %v1781
        %v1783 = vpop.f32.mrb[0].mxu0
        %v1784 = vadd.f32 0.0, %v1783
        %1785 = vmatprep.mubr.bf16.mxu0 0
        %1786 = vmatmul.mubr.bf16.gmra.mrb[0].mxu0 %v678
        %v1787 = vpop.f32.mrb[0].mxu0
        %v1788 = vadd.f32 0.0, %v1787
        %v1789 = vpop.f32.mrb[0].mxu0
        %v1790 = vadd.f32 0.0, %v1789
        %v1791 = vpop.f32.mrb[0].mxu0
        %v1792 = vadd.f32 0.0, %v1791
        %v1793 = vpop.f32.mrb[0].mxu0
        %v1794 = vadd.f32 0.0, %v1793
        %1795 = vmatprep.mubr.bf16.mxu0 0
        %1796 = vmatmul.mubr.bf16.gmra.mrb[0].mxu0 %v681
        %v1797 = vpop.f32.mrb[0].mxu0
        %v1798 = vadd.f32 0.0, %v1797
        %v1799 = vpop.f32.mrb[0].mxu0
        %v1800 = vadd.f32 0.0, %v1799
        %v1801 = vpop.f32.mrb[0].mxu0
        %v1802 = vadd.f32 0.0, %v1801
        %v1803 = vpop.f32.mrb[0].mxu0
        %v1804 = vadd.f32 0.0, %v1803
        %1805 = vmatprep.mubr.bf16.mxu0 0
        %1806 = vmatmul.mubr.bf16.gmra.mrb[0].mxu0 %v684
        %v1807 = vpop.f32.mrb[0].mxu0
        %v1808 = vadd.f32 0.0, %v1807
        %v1809 = vpop.f32.mrb[0].mxu0
        %v1810 = vadd.f32 0.0, %v1809
        %v1811 = vpop.f32.mrb[0].mxu0
        %v1812 = vadd.f32 0.0, %v1811
        %v1813 = vpop.f32.mrb[0].mxu0
        %v1814 = vadd.f32 0.0, %v1813
        %1815 = vmatprep.mubr.bf16.mxu0 0
        %1816 = vmatmul.mubr.bf16.gmra.mrb[0].mxu0 %v687
        %v1817 = vpop.f32.mrb[0].mxu0
        %v1818 = vadd.f32 0.0, %v1817
        %v1819 = vpop.f32.mrb[0].mxu0
        %v1820 = vadd.f32 0.0, %v1819
        %v1821 = vpop.f32.mrb[0].mxu0
        %v1822 = vadd.f32 0.0, %v1821
        %v1823 = vpop.f32.mrb[0].mxu0
        %v1824 = vadd.f32 0.0, %v1823
        %1825 = vmatprep.mubr.bf16.mxu0 0
        %1826 = vmatmul.mubr.bf16.gmra.mrb[0].mxu0 %v690
        %v1827 = vpop.f32.mrb[0].mxu0
        %v1828 = vadd.f32 0.0, %v1827
        %v1829 = vpop.f32.mrb[0].mxu0
        %v1830 = vadd.f32 0.0, %v1829
        %v1831 = vpop.f32.mrb[0].mxu0
        %v1832 = vadd.f32 0.0, %v1831
        %v1833 = vpop.f32.mrb[0].mxu0
        %v1834 = vadd.f32 0.0, %v1833
        %1835 = vmatprep.mubr.bf16.mxu0 0
        %1836 = vmatmul.mubr.bf16.gmra.mrb[0].mxu0 %v693
        %v1837 = vpop.f32.mrb[0].mxu0
        %v1838 = vadd.f32 0.0, %v1837
        %v1839 = vpop.f32.mrb[0].mxu0
        %v1840 = vadd.f32 0.0, %v1839
        %v1841 = vpop.f32.mrb[0].mxu0
        %v1842 = vadd.f32 0.0, %v1841
        %v1843 = vpop.f32.mrb[0].mxu0
        %v1844 = vadd.f32 0.0, %v1843
        %1845 = vmatprep.mubr.bf16.mxu0 0
        %1846 = vmatmul.mubr.bf16.gmra.mrb[0].mxu0 %v696
        %v1847 = vpop.f32.mrb[0].mxu0
        %v1848 = vadd.f32 0.0, %v1847
        %v1849 = vpop.f32.mrb[0].mxu0
        %v1850 = vadd.f32 0.0, %v1849
        %v1851 = vpop.f32.mrb[0].mxu0
        %v1852 = vadd.f32 0.0, %v1851
        %v1853 = vpop.f32.mrb[0].mxu0
        %v1854 = vadd.f32 0.0, %v1853
        %1855 = vdwg.mxu0
        %1856 = vmatprep.subr.bf16.mxu0 %v598
        %1857 = vmatpush1.bf16.msra.mxu0 %v597
        %1858 = vmatprep.subr.bf16.mxu0 %v614
        %1859 = vmatpush1.bf16.msra.mxu0 %v613
        %1860 = vmatprep.subr.bf16.mxu0 0
        %1861 = vmatpush1.bf16.msra.mxu0 0
        %1862 = vmatprep.subr.bf16.mxu0 0
        %1863 = vmatpush1.bf16.msra.mxu0 0
        %1864 = vmatprep.subr.bf16.mxu0 0
        %1865 = vmatpush1.bf16.msra.mxu0 0
        %1866 = vmatprep.subr.bf16.mxu0 0
        %1867 = vmatpush1.bf16.msra.mxu0 0
        %1868 = vmatprep.subr.bf16.mxu0 0
        %1869 = vmatpush1.bf16.msra.mxu0 0
        %1870 = vmatprep.subr.bf16.mxu0 0
        %1871 = vmatpush1.bf16.msra.mxu0 0
        %1872 = vmatprep.subr.bf16.mxu0 0
        %1873 = vmatpush1.bf16.msra.mxu0 0
        %1874 = vmatprep.subr.bf16.mxu0 0
        %1875 = vmatpush1.bf16.msra.mxu0 0
        %1876 = vmatprep.subr.bf16.mxu0 0
        %1877 = vmatpush1.bf16.msra.mxu0 0
        %1878 = vmatprep.subr.bf16.mxu0 0
        %1879 = vmatpush1.bf16.msra.mxu0 0
        %1880 = vmatprep.subr.bf16.mxu0 0
        %1881 = vmatpush1.bf16.msra.mxu0 0
        %1882 = vmatprep.subr.bf16.mxu0 0
        %1883 = vmatpush1.bf16.msra.mxu0 0
        %1884 = vmatprep.subr.bf16.mxu0 0
        %1885 = vmatpush1.bf16.msra.mxu0 0
        %1886 = vmatprep.subr.bf16.mxu0 0
        %1887 = vmatpush1.bf16.msra.mxu0 0
        %1888 = vmatprep.mubr.bf16.mxu0 0
        %1889 = vmatmul.mubr.bf16.gmra.mrb[0].mxu0 %v651
        %v1890 = vpop.f32.mrb[0].mxu0
        %v1891 = vadd.f32 0.0, %v1890
        %v1892 = vpop.f32.mrb[0].mxu0
        %v1893 = vadd.f32 0.0, %v1892
        %v1894 = vpop.f32.mrb[0].mxu0
        %v1895 = vadd.f32 0.0, %v1894
        %v1896 = vpop.f32.mrb[0].mxu0
        %v1897 = vadd.f32 0.0, %v1896
        %1898 = vmatprep.mubr.bf16.mxu0 0
        %1899 = vmatmul.mubr.bf16.gmra.mrb[0].mxu0 %v654
        %v1900 = vpop.f32.mrb[0].mxu0
        %v1901 = vadd.f32 0.0, %v1900
        %v1902 = vpop.f32.mrb[0].mxu0
        %v1903 = vadd.f32 0.0, %v1902
        %v1904 = vpop.f32.mrb[0].mxu0
        %v1905 = vadd.f32 0.0, %v1904
        %v1906 = vpop.f32.mrb[0].mxu0
        %v1907 = vadd.f32 0.0, %v1906
        %1908 = vmatprep.mubr.bf16.mxu0 0
        %1909 = vmatmul.mubr.bf16.gmra.mrb[0].mxu0 %v657
        %v1910 = vpop.f32.mrb[0].mxu0
        %v1911 = vadd.f32 0.0, %v1910
        %v1912 = vpop.f32.mrb[0].mxu0
        %v1913 = vadd.f32 0.0, %v1912
        %v1914 = vpop.f32.mrb[0].mxu0
        %v1915 = vadd.f32 0.0, %v1914
        %v1916 = vpop.f32.mrb[0].mxu0
        %v1917 = vadd.f32 0.0, %v1916
        %1918 = vmatprep.mubr.bf16.mxu0 0
        %1919 = vmatmul.mubr.bf16.gmra.mrb[0].mxu0 %v660
        %v1920 = vpop.f32.mrb[0].mxu0
        %v1921 = vadd.f32 0.0, %v1920
        %v1922 = vpop.f32.mrb[0].mxu0
        %v1923 = vadd.f32 0.0, %v1922
        %v1924 = vpop.f32.mrb[0].mxu0
        %v1925 = vadd.f32 0.0, %v1924
        %v1926 = vpop.f32.mrb[0].mxu0
        %v1927 = vadd.f32 0.0, %v1926
        %1928 = vmatprep.mubr.bf16.mxu0 0
        %1929 = vmatmul.mubr.bf16.gmra.mrb[0].mxu0 %v663
        %v1930 = vpop.f32.mrb[0].mxu0
        %v1931 = vadd.f32 0.0, %v1930
        %v1932 = vpop.f32.mrb[0].mxu0
        %v1933 = vadd.f32 0.0, %v1932
        %v1934 = vpop.f32.mrb[0].mxu0
        %v1935 = vadd.f32 0.0, %v1934
        %v1936 = vpop.f32.mrb[0].mxu0
        %v1937 = vadd.f32 0.0, %v1936
        %1938 = vmatprep.mubr.bf16.mxu0 0
        %1939 = vmatmul.mubr.bf16.gmra.mrb[0].mxu0 %v666
        %v1940 = vpop.f32.mrb[0].mxu0
        %v1941 = vadd.f32 0.0, %v1940
        %v1942 = vpop.f32.mrb[0].mxu0
        %v1943 = vadd.f32 0.0, %v1942
        %v1944 = vpop.f32.mrb[0].mxu0
        %v1945 = vadd.f32 0.0, %v1944
        %v1946 = vpop.f32.mrb[0].mxu0
        %v1947 = vadd.f32 0.0, %v1946
        %1948 = vmatprep.mubr.bf16.mxu0 0
        %1949 = vmatmul.mubr.bf16.gmra.mrb[0].mxu0 %v669
        %v1950 = vpop.f32.mrb[0].mxu0
        %v1951 = vadd.f32 0.0, %v1950
        %v1952 = vpop.f32.mrb[0].mxu0
        %v1953 = vadd.f32 0.0, %v1952
        %v1954 = vpop.f32.mrb[0].mxu0
        %v1955 = vadd.f32 0.0, %v1954
        %v1956 = vpop.f32.mrb[0].mxu0
        %v1957 = vadd.f32 0.0, %v1956
        %1958 = vmatprep.mubr.bf16.mxu0 0
        %1959 = vmatmul.mubr.bf16.gmra.mrb[0].mxu0 %v672
        %v1960 = vpop.f32.mrb[0].mxu0
        %v1961 = vadd.f32 0.0, %v1960
        %v1962 = vpop.f32.mrb[0].mxu0
        %v1963 = vadd.f32 0.0, %v1962
        %v1964 = vpop.f32.mrb[0].mxu0
        %v1965 = vadd.f32 0.0, %v1964
        %v1966 = vpop.f32.mrb[0].mxu0
        %v1967 = vadd.f32 0.0, %v1966
        %1968 = vmatprep.mubr.bf16.mxu0 0
        %1969 = vmatmul.mubr.bf16.gmra.mrb[0].mxu0 %v675
        %v1970 = vpop.f32.mrb[0].mxu0
        %v1971 = vadd.f32 0.0, %v1970
        %v1972 = vpop.f32.mrb[0].mxu0
        %v1973 = vadd.f32 0.0, %v1972
        %v1974 = vpop.f32.mrb[0].mxu0
        %v1975 = vadd.f32 0.0, %v1974
        %v1976 = vpop.f32.mrb[0].mxu0
        %v1977 = vadd.f32 0.0, %v1976
        %1978 = vmatprep.mubr.bf16.mxu0 0
        %1979 = vmatmul.mubr.bf16.gmra.mrb[0].mxu0 %v678
        %v1980 = vpop.f32.mrb[0].mxu0
        %v1981 = vadd.f32 0.0, %v1980
        %v1982 = vpop.f32.mrb[0].mxu0
        %v1983 = vadd.f32 0.0, %v1982
        %v1984 = vpop.f32.mrb[0].mxu0
        %v1985 = vadd.f32 0.0, %v1984
        %v1986 = vpop.f32.mrb[0].mxu0
        %v1987 = vadd.f32 0.0, %v1986
        %1988 = vmatprep.mubr.bf16.mxu0 0
        %1989 = vmatmul.mubr.bf16.gmra.mrb[0].mxu0 %v681
        %v1990 = vpop.f32.mrb[0].mxu0
        %v1991 = vadd.f32 0.0, %v1990
        %v1992 = vpop.f32.mrb[0].mxu0
        %v1993 = vadd.f32 0.0, %v1992
        %v1994 = vpop.f32.mrb[0].mxu0
        %v1995 = vadd.f32 0.0, %v1994
        %v1996 = vpop.f32.mrb[0].mxu0
        %v1997 = vadd.f32 0.0, %v1996
        %1998 = vmatprep.mubr.bf16.mxu0 0
        %1999 = vmatmul.mubr.bf16.gmra.mrb[0].mxu0 %v684
        %v2000 = vpop.f32.mrb[0].mxu0
        %v2001 = vadd.f32 0.0, %v2000
        %v2002 = vpop.f32.mrb[0].mxu0
        %v2003 = vadd.f32 0.0, %v2002
        %v2004 = vpop.f32.mrb[0].mxu0
        %v2005 = vadd.f32 0.0, %v2004
        %v2006 = vpop.f32.mrb[0].mxu0
        %v2007 = vadd.f32 0.0, %v2006
        %2008 = vmatprep.mubr.bf16.mxu0 0
        %2009 = vmatmul.mubr.bf16.gmra.mrb[0].mxu0 %v687
        %v2010 = vpop.f32.mrb[0].mxu0
        %v2011 = vadd.f32 0.0, %v2010
        %v2012 = vpop.f32.mrb[0].mxu0
        %v2013 = vadd.f32 0.0, %v2012
        %v2014 = vpop.f32.mrb[0].mxu0
        %v2015 = vadd.f32 0.0, %v2014
        %v2016 = vpop.f32.mrb[0].mxu0
        %v2017 = vadd.f32 0.0, %v2016
        %2018 = vmatprep.mubr.bf16.mxu0 0
        %2019 = vmatmul.mubr.bf16.gmra.mrb[0].mxu0 %v690
        %v2020 = vpop.f32.mrb[0].mxu0
        %v2021 = vadd.f32 0.0, %v2020
        %v2022 = vpop.f32.mrb[0].mxu0
        %v2023 = vadd.f32 0.0, %v2022
        %v2024 = vpop.f32.mrb[0].mxu0
        %v2025 = vadd.f32 0.0, %v2024
        %v2026 = vpop.f32.mrb[0].mxu0
        %v2027 = vadd.f32 0.0, %v2026
        %2028 = vmatprep.mubr.bf16.mxu0 0
        %2029 = vmatmul.mubr.bf16.gmra.mrb[0].mxu0 %v693
        %v2030 = vpop.f32.mrb[0].mxu0
        %v2031 = vadd.f32 0.0, %v2030
        %v2032 = vpop.f32.mrb[0].mxu0
        %v2033 = vadd.f32 0.0, %v2032
        %v2034 = vpop.f32.mrb[0].mxu0
        %v2035 = vadd.f32 0.0, %v2034
        %v2036 = vpop.f32.mrb[0].mxu0
        %v2037 = vadd.f32 0.0, %v2036
        %2038 = vmatprep.mubr.bf16.mxu0 0
        %2039 = vmatmul.mubr.bf16.gmra.mrb[0].mxu0 %v696
        %v2040 = vpop.f32.mrb[0].mxu0
        %v2041 = vadd.f32 0.0, %v2040
        %v2042 = vpop.f32.mrb[0].mxu0
        %v2043 = vadd.f32 0.0, %v2042
        %v2044 = vpop.f32.mrb[0].mxu0
        %v2045 = vadd.f32 0.0, %v2044
        %v2046 = vpop.f32.mrb[0].mxu0
        %v2047 = vadd.f32 0.0, %v2046
        %2048 = vdwg.mxu0
        %2049 = vmatprep.subr.bf16.mxu0 %v600
        %2050 = vmatpush1.bf16.msra.mxu0 %v599
        %2051 = vmatprep.subr.bf16.mxu0 %v616
        %2052 = vmatpush1.bf16.msra.mxu0 %v615
        %2053 = vmatprep.subr.bf16.mxu0 0
        %2054 = vmatpush1.bf16.msra.mxu0 0
        %2055 = vmatprep.subr.bf16.mxu0 0
        %2056 = vmatpush1.bf16.msra.mxu0 0
        %2057 = vmatprep.subr.bf16.mxu0 0
        %2058 = vmatpush1.bf16.msra.mxu0 0
        %2059 = vmatprep.subr.bf16.mxu0 0
        %2060 = vmatpush1.bf16.msra.mxu0 0
        %2061 = vmatprep.subr.bf16.mxu0 0
        %2062 = vmatpush1.bf16.msra.mxu0 0
        %2063 = vmatprep.subr.bf16.mxu0 0
        %2064 = vmatpush1.bf16.msra.mxu0 0
        %2065 = vmatprep.subr.bf16.mxu0 0
        %2066 = vmatpush1.bf16.msra.mxu0 0
        %2067 = vmatprep.subr.bf16.mxu0 0
        %2068 = vmatpush1.bf16.msra.mxu0 0
        %2069 = vmatprep.subr.bf16.mxu0 0
        %2070 = vmatpush1.bf16.msra.mxu0 0
        %2071 = vmatprep.subr.bf16.mxu0 0
        %2072 = vmatpush1.bf16.msra.mxu0 0
        %2073 = vmatprep.subr.bf16.mxu0 0
        %2074 = vmatpush1.bf16.msra.mxu0 0
        %2075 = vmatprep.subr.bf16.mxu0 0
        %2076 = vmatpush1.bf16.msra.mxu0 0
        %2077 = vmatprep.subr.bf16.mxu0 0
        %2078 = vmatpush1.bf16.msra.mxu0 0
        %2079 = vmatprep.subr.bf16.mxu0 0
        %2080 = vmatpush1.bf16.msra.mxu0 0
        %2081 = vmatprep.mubr.bf16.mxu0 0
        %2082 = vmatmul.mubr.bf16.gmra.mrb[0].mxu0 %v651
        %v2083 = vpop.f32.mrb[0].mxu0
        %v2084 = vadd.f32 0.0, %v2083
        %v2085 = vpop.f32.mrb[0].mxu0
        %v2086 = vadd.f32 0.0, %v2085
        %v2087 = vpop.f32.mrb[0].mxu0
        %v2088 = vadd.f32 0.0, %v2087
        %v2089 = vpop.f32.mrb[0].mxu0
        %v2090 = vadd.f32 0.0, %v2089
        %2091 = vmatprep.mubr.bf16.mxu0 0
        %2092 = vmatmul.mubr.bf16.gmra.mrb[0].mxu0 %v654
        %v2093 = vpop.f32.mrb[0].mxu0
        %v2094 = vadd.f32 0.0, %v2093
        %v2095 = vpop.f32.mrb[0].mxu0
        %v2096 = vadd.f32 0.0, %v2095
        %v2097 = vpop.f32.mrb[0].mxu0
        %v2098 = vadd.f32 0.0, %v2097
        %v2099 = vpop.f32.mrb[0].mxu0
        %v2100 = vadd.f32 0.0, %v2099
        %2101 = vmatprep.mubr.bf16.mxu0 0
        %2102 = vmatmul.mubr.bf16.gmra.mrb[0].mxu0 %v657
        %v2103 = vpop.f32.mrb[0].mxu0
        %v2104 = vadd.f32 0.0, %v2103
        %v2105 = vpop.f32.mrb[0].mxu0
        %v2106 = vadd.f32 0.0, %v2105
        %v2107 = vpop.f32.mrb[0].mxu0
        %v2108 = vadd.f32 0.0, %v2107
        %v2109 = vpop.f32.mrb[0].mxu0
        %v2110 = vadd.f32 0.0, %v2109
        %2111 = vmatprep.mubr.bf16.mxu0 0
        %2112 = vmatmul.mubr.bf16.gmra.mrb[0].mxu0 %v660
        %v2113 = vpop.f32.mrb[0].mxu0
        %v2114 = vadd.f32 0.0, %v2113
        %v2115 = vpop.f32.mrb[0].mxu0
        %v2116 = vadd.f32 0.0, %v2115
        %v2117 = vpop.f32.mrb[0].mxu0
        %v2118 = vadd.f32 0.0, %v2117
        %v2119 = vpop.f32.mrb[0].mxu0
        %v2120 = vadd.f32 0.0, %v2119
        %2121 = vmatprep.mubr.bf16.mxu0 0
        %2122 = vmatmul.mubr.bf16.gmra.mrb[0].mxu0 %v663
        %v2123 = vpop.f32.mrb[0].mxu0
        %v2124 = vadd.f32 0.0, %v2123
        %v2125 = vpop.f32.mrb[0].mxu0
        %v2126 = vadd.f32 0.0, %v2125
        %v2127 = vpop.f32.mrb[0].mxu0
        %v2128 = vadd.f32 0.0, %v2127
        %v2129 = vpop.f32.mrb[0].mxu0
        %v2130 = vadd.f32 0.0, %v2129
        %2131 = vmatprep.mubr.bf16.mxu0 0
        %2132 = vmatmul.mubr.bf16.gmra.mrb[0].mxu0 %v666
        %v2133 = vpop.f32.mrb[0].mxu0
        %v2134 = vadd.f32 0.0, %v2133
        %v2135 = vpop.f32.mrb[0].mxu0
        %v2136 = vadd.f32 0.0, %v2135
        %v2137 = vpop.f32.mrb[0].mxu0
        %v2138 = vadd.f32 0.0, %v2137
        %v2139 = vpop.f32.mrb[0].mxu0
        %v2140 = vadd.f32 0.0, %v2139
        %2141 = vmatprep.mubr.bf16.mxu0 0
        %2142 = vmatmul.mubr.bf16.gmra.mrb[0].mxu0 %v669
        %v2143 = vpop.f32.mrb[0].mxu0
        %v2144 = vadd.f32 0.0, %v2143
        %v2145 = vpop.f32.mrb[0].mxu0
        %v2146 = vadd.f32 0.0, %v2145
        %v2147 = vpop.f32.mrb[0].mxu0
        %v2148 = vadd.f32 0.0, %v2147
        %v2149 = vpop.f32.mrb[0].mxu0
        %v2150 = vadd.f32 0.0, %v2149
        %2151 = vmatprep.mubr.bf16.mxu0 0
        %2152 = vmatmul.mubr.bf16.gmra.mrb[0].mxu0 %v672
        %v2153 = vpop.f32.mrb[0].mxu0
        %v2154 = vadd.f32 0.0, %v2153
        %v2155 = vpop.f32.mrb[0].mxu0
        %v2156 = vadd.f32 0.0, %v2155
        %v2157 = vpop.f32.mrb[0].mxu0
        %v2158 = vadd.f32 0.0, %v2157
        %v2159 = vpop.f32.mrb[0].mxu0
        %v2160 = vadd.f32 0.0, %v2159
        %2161 = vmatprep.mubr.bf16.mxu0 0
        %2162 = vmatmul.mubr.bf16.gmra.mrb[0].mxu0 %v675
        %v2163 = vpop.f32.mrb[0].mxu0
        %v2164 = vadd.f32 0.0, %v2163
        %v2165 = vpop.f32.mrb[0].mxu0
        %v2166 = vadd.f32 0.0, %v2165
        %v2167 = vpop.f32.mrb[0].mxu0
        %v2168 = vadd.f32 0.0, %v2167
        %v2169 = vpop.f32.mrb[0].mxu0
        %v2170 = vadd.f32 0.0, %v2169
        %2171 = vmatprep.mubr.bf16.mxu0 0
        %2172 = vmatmul.mubr.bf16.gmra.mrb[0].mxu0 %v678
        %v2173 = vpop.f32.mrb[0].mxu0
        %v2174 = vadd.f32 0.0, %v2173
        %v2175 = vpop.f32.mrb[0].mxu0
        %v2176 = vadd.f32 0.0, %v2175
        %v2177 = vpop.f32.mrb[0].mxu0
        %v2178 = vadd.f32 0.0, %v2177
        %v2179 = vpop.f32.mrb[0].mxu0
        %v2180 = vadd.f32 0.0, %v2179
        %2181 = vmatprep.mubr.bf16.mxu0 0
        %2182 = vmatmul.mubr.bf16.gmra.mrb[0].mxu0 %v681
        %v2183 = vpop.f32.mrb[0].mxu0
        %v2184 = vadd.f32 0.0, %v2183
        %v2185 = vpop.f32.mrb[0].mxu0
        %v2186 = vadd.f32 0.0, %v2185
        %v2187 = vpop.f32.mrb[0].mxu0
        %v2188 = vadd.f32 0.0, %v2187
        %v2189 = vpop.f32.mrb[0].mxu0
        %v2190 = vadd.f32 0.0, %v2189
        %2191 = vmatprep.mubr.bf16.mxu0 0
        %2192 = vmatmul.mubr.bf16.gmra.mrb[0].mxu0 %v684
        %v2193 = vpop.f32.mrb[0].mxu0
        %v2194 = vadd.f32 0.0, %v2193
        %v2195 = vpop.f32.mrb[0].mxu0
        %v2196 = vadd.f32 0.0, %v2195
        %v2197 = vpop.f32.mrb[0].mxu0
        %v2198 = vadd.f32 0.0, %v2197
        %v2199 = vpop.f32.mrb[0].mxu0
        %v2200 = vadd.f32 0.0, %v2199
        %2201 = vmatprep.mubr.bf16.mxu0 0
        %2202 = vmatmul.mubr.bf16.gmra.mrb[0].mxu0 %v687
        %v2203 = vpop.f32.mrb[0].mxu0
        %v2204 = vadd.f32 0.0, %v2203
        %v2205 = vpop.f32.mrb[0].mxu0
        %v2206 = vadd.f32 0.0, %v2205
        %v2207 = vpop.f32.mrb[0].mxu0
        %v2208 = vadd.f32 0.0, %v2207
        %v2209 = vpop.f32.mrb[0].mxu0
        %v2210 = vadd.f32 0.0, %v2209
        %2211 = vmatprep.mubr.bf16.mxu0 0
        %2212 = vmatmul.mubr.bf16.gmra.mrb[0].mxu0 %v690
        %v2213 = vpop.f32.mrb[0].mxu0
        %v2214 = vadd.f32 0.0, %v2213
        %v2215 = vpop.f32.mrb[0].mxu0
        %v2216 = vadd.f32 0.0, %v2215
        %v2217 = vpop.f32.mrb[0].mxu0
        %v2218 = vadd.f32 0.0, %v2217
        %v2219 = vpop.f32.mrb[0].mxu0
        %v2220 = vadd.f32 0.0, %v2219
        %2221 = vmatprep.mubr.bf16.mxu0 0
        %2222 = vmatmul.mubr.bf16.gmra.mrb[0].mxu0 %v693
        %v2223 = vpop.f32.mrb[0].mxu0
        %v2224 = vadd.f32 0.0, %v2223
        %v2225 = vpop.f32.mrb[0].mxu0
        %v2226 = vadd.f32 0.0, %v2225
        %v2227 = vpop.f32.mrb[0].mxu0
        %v2228 = vadd.f32 0.0, %v2227
        %v2229 = vpop.f32.mrb[0].mxu0
        %v2230 = vadd.f32 0.0, %v2229
        %2231 = vmatprep.mubr.bf16.mxu0 0
        %2232 = vmatmul.mubr.bf16.gmra.mrb[0].mxu0 %v696
        %v2233 = vpop.f32.mrb[0].mxu0
        %v2234 = vadd.f32 0.0, %v2233
        %v2235 = vpop.f32.mrb[0].mxu0
        %v2236 = vadd.f32 0.0, %v2235
        %v2237 = vpop.f32.mrb[0].mxu0
        %v2238 = vadd.f32 0.0, %v2237
        %v2239 = vpop.f32.mrb[0].mxu0
        %v2240 = vadd.f32 0.0, %v2239
        %2241 = vdwg.mxu0
        %v2242 = vmax.f32 %v733, 0.0
        %v2243 = vmax.f32 %v735, 0.0
        %v2244 = vmax.f32 %v926, 0.0
        %v2245 = vmax.f32 %v928, 0.0
        %v2246 = vmax.f32 %v1119, 0.0
        %v2247 = vmax.f32 %v1121, 0.0
        %v2248 = vmax.f32 %v1312, 0.0
        %v2249 = vmax.f32 %v1314, 0.0
        %v2250 = vmax.f32 %v1505, 0.0
        %v2251 = vmax.f32 %v1507, 0.0
        %v2252 = vmax.f32 %v1698, 0.0
        %v2253 = vmax.f32 %v1700, 0.0
        %v2254 = vmax.f32 %v1891, 0.0
        %v2255 = vmax.f32 %v1893, 0.0
        %v2256 = vmax.f32 %v2084, 0.0
        %v2257 = vmax.f32 %v2086, 0.0
        %v2258 = vmax.f32 %v737, 0.0
        %v2259 = vmax.f32 %v739, 0.0
        %v2260 = vmax.f32 %v930, 0.0
        %v2261 = vmax.f32 %v932, 0.0
        %v2262 = vmax.f32 %v1123, 0.0
        %v2263 = vmax.f32 %v1125, 0.0
        %v2264 = vmax.f32 %v1316, 0.0
        %v2265 = vmax.f32 %v1318, 0.0
        %v2266 = vmax.f32 %v1509, 0.0
        %v2267 = vmax.f32 %v1511, 0.0
        %v2268 = vmax.f32 %v1702, 0.0
        %v2269 = vmax.f32 %v1704, 0.0
        %v2270 = vmax.f32 %v1895, 0.0
        %v2271 = vmax.f32 %v1897, 0.0
        %v2272 = vmax.f32 %v2088, 0.0
        %v2273 = vmax.f32 %v2090, 0.0
        %v2274 = vmax.f32 %v743, 0.0
        %v2275 = vmax.f32 %v745, 0.0
        %v2276 = vmax.f32 %v936, 0.0
        %v2277 = vmax.f32 %v938, 0.0
        %v2278 = vmax.f32 %v1129, 0.0
        %v2279 = vmax.f32 %v1131, 0.0
        %v2280 = vmax.f32 %v1322, 0.0
        %v2281 = vmax.f32 %v1324, 0.0
        %v2282 = vmax.f32 %v1515, 0.0
        %v2283 = vmax.f32 %v1517, 0.0
        %v2284 = vmax.f32 %v1708, 0.0
        %v2285 = vmax.f32 %v1710, 0.0
        %v2286 = vmax.f32 %v1901, 0.0
        %v2287 = vmax.f32 %v1903, 0.0
        %v2288 = vmax.f32 %v2094, 0.0
        %v2289 = vmax.f32 %v2096, 0.0
        %v2290 = vmax.f32 %v747, 0.0
        %v2291 = vmax.f32 %v749, 0.0
        %v2292 = vmax.f32 %v940, 0.0
        %v2293 = vmax.f32 %v942, 0.0
        %v2294 = vmax.f32 %v1133, 0.0
        %v2295 = vmax.f32 %v1135, 0.0
        %v2296 = vmax.f32 %v1326, 0.0
        %v2297 = vmax.f32 %v1328, 0.0
        %v2298 = vmax.f32 %v1519, 0.0
        %v2299 = vmax.f32 %v1521, 0.0
        %v2300 = vmax.f32 %v1712, 0.0
        %v2301 = vmax.f32 %v1714, 0.0
        %v2302 = vmax.f32 %v1905, 0.0
        %v2303 = vmax.f32 %v1907, 0.0
        %v2304 = vmax.f32 %v2098, 0.0
        %v2305 = vmax.f32 %v2100, 0.0
        %v2306 = vmax.f32 %v753, 0.0
        %v2307 = vmax.f32 %v755, 0.0
        %v2308 = vmax.f32 %v946, 0.0
        %v2309 = vmax.f32 %v948, 0.0
        %v2310 = vmax.f32 %v1139, 0.0
        %v2311 = vmax.f32 %v1141, 0.0
        %v2312 = vmax.f32 %v1332, 0.0
        %v2313 = vmax.f32 %v1334, 0.0
        %v2314 = vmax.f32 %v1525, 0.0
        %v2315 = vmax.f32 %v1527, 0.0
        %v2316 = vmax.f32 %v1718, 0.0
        %v2317 = vmax.f32 %v1720, 0.0
        %v2318 = vmax.f32 %v1911, 0.0
        %v2319 = vmax.f32 %v1913, 0.0
        %v2320 = vmax.f32 %v2104, 0.0
        %v2321 = vmax.f32 %v2106, 0.0
        %v2322 = vmax.f32 %v757, 0.0
        %v2323 = vmax.f32 %v759, 0.0
        %v2324 = vmax.f32 %v950, 0.0
        %v2325 = vmax.f32 %v952, 0.0
        %v2326 = vmax.f32 %v1143, 0.0
        %v2327 = vmax.f32 %v1145, 0.0
        %v2328 = vmax.f32 %v1336, 0.0
        %v2329 = vmax.f32 %v1338, 0.0
        %v2330 = vmax.f32 %v1529, 0.0
        %v2331 = vmax.f32 %v1531, 0.0
        %v2332 = vmax.f32 %v1722, 0.0
        %v2333 = vmax.f32 %v1724, 0.0
        %v2334 = vmax.f32 %v1915, 0.0
        %v2335 = vmax.f32 %v1917, 0.0
        %v2336 = vmax.f32 %v2108, 0.0
        %v2337 = vmax.f32 %v2110, 0.0
        %v2338 = vmax.f32 %v763, 0.0
        %v2339 = vmax.f32 %v765, 0.0
        %v2340 = vmax.f32 %v956, 0.0
        %v2341 = vmax.f32 %v958, 0.0
        %v2342 = vmax.f32 %v1149, 0.0
        %v2343 = vmax.f32 %v1151, 0.0
        %v2344 = vmax.f32 %v1342, 0.0
        %v2345 = vmax.f32 %v1344, 0.0
        %v2346 = vmax.f32 %v1535, 0.0
        %v2347 = vmax.f32 %v1537, 0.0
        %v2348 = vmax.f32 %v1728, 0.0
        %v2349 = vmax.f32 %v1730, 0.0
        %v2350 = vmax.f32 %v1921, 0.0
        %v2351 = vmax.f32 %v1923, 0.0
        %v2352 = vmax.f32 %v2114, 0.0
        %v2353 = vmax.f32 %v2116, 0.0
        %v2354 = vmax.f32 %v767, 0.0
        %v2355 = vmax.f32 %v769, 0.0
        %v2356 = vmax.f32 %v960, 0.0
        %v2357 = vmax.f32 %v962, 0.0
        %v2358 = vmax.f32 %v1153, 0.0
        %v2359 = vmax.f32 %v1155, 0.0
        %v2360 = vmax.f32 %v1346, 0.0
        %v2361 = vmax.f32 %v1348, 0.0
        %v2362 = vmax.f32 %v1539, 0.0
        %v2363 = vmax.f32 %v1541, 0.0
        %v2364 = vmax.f32 %v1732, 0.0
        %v2365 = vmax.f32 %v1734, 0.0
        %v2366 = vmax.f32 %v1925, 0.0
        %v2367 = vmax.f32 %v1927, 0.0
        %v2368 = vmax.f32 %v2118, 0.0
        %v2369 = vmax.f32 %v2120, 0.0
        %v2370 = vmax.f32 %v773, 0.0
        %v2371 = vmax.f32 %v775, 0.0
        %v2372 = vmax.f32 %v966, 0.0
        %v2373 = vmax.f32 %v968, 0.0
        %v2374 = vmax.f32 %v1159, 0.0
        %v2375 = vmax.f32 %v1161, 0.0
        %v2376 = vmax.f32 %v1352, 0.0
        %v2377 = vmax.f32 %v1354, 0.0
        %v2378 = vmax.f32 %v1545, 0.0
        %v2379 = vmax.f32 %v1547, 0.0
        %v2380 = vmax.f32 %v1738, 0.0
        %v2381 = vmax.f32 %v1740, 0.0
        %v2382 = vmax.f32 %v1931, 0.0
        %v2383 = vmax.f32 %v1933, 0.0
        %v2384 = vmax.f32 %v2124, 0.0
        %v2385 = vmax.f32 %v2126, 0.0
        %v2386 = vmax.f32 %v777, 0.0
        %v2387 = vmax.f32 %v779, 0.0
        %v2388 = vmax.f32 %v970, 0.0
        %v2389 = vmax.f32 %v972, 0.0
        %v2390 = vmax.f32 %v1163, 0.0
        %v2391 = vmax.f32 %v1165, 0.0
        %v2392 = vmax.f32 %v1356, 0.0
        %v2393 = vmax.f32 %v1358, 0.0
        %v2394 = vmax.f32 %v1549, 0.0
        %v2395 = vmax.f32 %v1551, 0.0
        %v2396 = vmax.f32 %v1742, 0.0
        %v2397 = vmax.f32 %v1744, 0.0
        %v2398 = vmax.f32 %v1935, 0.0
        %v2399 = vmax.f32 %v1937, 0.0
        %v2400 = vmax.f32 %v2128, 0.0
        %v2401 = vmax.f32 %v2130, 0.0
        %v2402 = vmax.f32 %v783, 0.0
        %v2403 = vmax.f32 %v785, 0.0
        %v2404 = vmax.f32 %v976, 0.0
        %v2405 = vmax.f32 %v978, 0.0
        %v2406 = vmax.f32 %v1169, 0.0
        %v2407 = vmax.f32 %v1171, 0.0
        %v2408 = vmax.f32 %v1362, 0.0
        %v2409 = vmax.f32 %v1364, 0.0
        %v2410 = vmax.f32 %v1555, 0.0
        %v2411 = vmax.f32 %v1557, 0.0
        %v2412 = vmax.f32 %v1748, 0.0
        %v2413 = vmax.f32 %v1750, 0.0
        %v2414 = vmax.f32 %v1941, 0.0
        %v2415 = vmax.f32 %v1943, 0.0
        %v2416 = vmax.f32 %v2134, 0.0
        %v2417 = vmax.f32 %v2136, 0.0
        %v2418 = vmax.f32 %v787, 0.0
        %v2419 = vmax.f32 %v789, 0.0
        %v2420 = vmax.f32 %v980, 0.0
        %v2421 = vmax.f32 %v982, 0.0
        %v2422 = vmax.f32 %v1173, 0.0
        %v2423 = vmax.f32 %v1175, 0.0
        %v2424 = vmax.f32 %v1366, 0.0
        %v2425 = vmax.f32 %v1368, 0.0
        %v2426 = vmax.f32 %v1559, 0.0
        %v2427 = vmax.f32 %v1561, 0.0
        %v2428 = vmax.f32 %v1752, 0.0
        %v2429 = vmax.f32 %v1754, 0.0
        %v2430 = vmax.f32 %v1945, 0.0
        %v2431 = vmax.f32 %v1947, 0.0
        %v2432 = vmax.f32 %v2138, 0.0
        %v2433 = vmax.f32 %v2140, 0.0
        %v2434 = vmax.f32 %v793, 0.0
        %v2435 = vmax.f32 %v795, 0.0
        %v2436 = vmax.f32 %v986, 0.0
        %v2437 = vmax.f32 %v988, 0.0
        %v2438 = vmax.f32 %v1179, 0.0
        %v2439 = vmax.f32 %v1181, 0.0
        %v2440 = vmax.f32 %v1372, 0.0
        %v2441 = vmax.f32 %v1374, 0.0
        %v2442 = vmax.f32 %v1565, 0.0
        %v2443 = vmax.f32 %v1567, 0.0
        %v2444 = vmax.f32 %v1758, 0.0
        %v2445 = vmax.f32 %v1760, 0.0
        %v2446 = vmax.f32 %v1951, 0.0
        %v2447 = vmax.f32 %v1953, 0.0
        %v2448 = vmax.f32 %v2144, 0.0
        %v2449 = vmax.f32 %v2146, 0.0
        %v2450 = vmax.f32 %v797, 0.0
        %v2451 = vmax.f32 %v799, 0.0
        %v2452 = vmax.f32 %v990, 0.0
        %v2453 = vmax.f32 %v992, 0.0
        %v2454 = vmax.f32 %v1183, 0.0
        %v2455 = vmax.f32 %v1185, 0.0
        %v2456 = vmax.f32 %v1376, 0.0
        %v2457 = vmax.f32 %v1378, 0.0
        %v2458 = vmax.f32 %v1569, 0.0
        %v2459 = vmax.f32 %v1571, 0.0
        %v2460 = vmax.f32 %v1762, 0.0
        %v2461 = vmax.f32 %v1764, 0.0
        %v2462 = vmax.f32 %v1955, 0.0
        %v2463 = vmax.f32 %v1957, 0.0
        %v2464 = vmax.f32 %v2148, 0.0
        %v2465 = vmax.f32 %v2150, 0.0
        %v2466 = vmax.f32 %v803, 0.0
        %v2467 = vmax.f32 %v805, 0.0
        %v2468 = vmax.f32 %v996, 0.0
        %v2469 = vmax.f32 %v998, 0.0
        %v2470 = vmax.f32 %v1189, 0.0
        %v2471 = vmax.f32 %v1191, 0.0
        %v2472 = vmax.f32 %v1382, 0.0
        %v2473 = vmax.f32 %v1384, 0.0
        %v2474 = vmax.f32 %v1575, 0.0
        %v2475 = vmax.f32 %v1577, 0.0
        %v2476 = vmax.f32 %v1768, 0.0
        %v2477 = vmax.f32 %v1770, 0.0
        %v2478 = vmax.f32 %v1961, 0.0
        %v2479 = vmax.f32 %v1963, 0.0
        %v2480 = vmax.f32 %v2154, 0.0
        %v2481 = vmax.f32 %v2156, 0.0
        %v2482 = vmax.f32 %v807, 0.0
        %v2483 = vmax.f32 %v809, 0.0
        %v2484 = vmax.f32 %v1000, 0.0
        %v2485 = vmax.f32 %v1002, 0.0
        %v2486 = vmax.f32 %v1193, 0.0
        %v2487 = vmax.f32 %v1195, 0.0
        %v2488 = vmax.f32 %v1386, 0.0
        %v2489 = vmax.f32 %v1388, 0.0
        %v2490 = vmax.f32 %v1579, 0.0
        %v2491 = vmax.f32 %v1581, 0.0
        %v2492 = vmax.f32 %v1772, 0.0
        %v2493 = vmax.f32 %v1774, 0.0
        %v2494 = vmax.f32 %v1965, 0.0
        %v2495 = vmax.f32 %v1967, 0.0
        %v2496 = vmax.f32 %v2158, 0.0
        %v2497 = vmax.f32 %v2160, 0.0
        %v2498 = vmax.f32 %v813, 0.0
        %v2499 = vmax.f32 %v815, 0.0
        %v2500 = vmax.f32 %v1006, 0.0
        %v2501 = vmax.f32 %v1008, 0.0
        %v2502 = vmax.f32 %v1199, 0.0
        %v2503 = vmax.f32 %v1201, 0.0
        %v2504 = vmax.f32 %v1392, 0.0
        %v2505 = vmax.f32 %v1394, 0.0
        %v2506 = vmax.f32 %v1585, 0.0
        %v2507 = vmax.f32 %v1587, 0.0
        %v2508 = vmax.f32 %v1778, 0.0
        %v2509 = vmax.f32 %v1780, 0.0
        %v2510 = vmax.f32 %v1971, 0.0
        %v2511 = vmax.f32 %v1973, 0.0
        %v2512 = vmax.f32 %v2164, 0.0
        %v2513 = vmax.f32 %v2166, 0.0
        %v2514 = vmax.f32 %v817, 0.0
        %v2515 = vmax.f32 %v819, 0.0
        %v2516 = vmax.f32 %v1010, 0.0
        %v2517 = vmax.f32 %v1012, 0.0
        %v2518 = vmax.f32 %v1203, 0.0
        %v2519 = vmax.f32 %v1205, 0.0
        %v2520 = vmax.f32 %v1396, 0.0
        %v2521 = vmax.f32 %v1398, 0.0
        %v2522 = vmax.f32 %v1589, 0.0
        %v2523 = vmax.f32 %v1591, 0.0
        %v2524 = vmax.f32 %v1782, 0.0
        %v2525 = vmax.f32 %v1784, 0.0
        %v2526 = vmax.f32 %v1975, 0.0
        %v2527 = vmax.f32 %v1977, 0.0
        %v2528 = vmax.f32 %v2168, 0.0
        %v2529 = vmax.f32 %v2170, 0.0
        %v2530 = vmax.f32 %v823, 0.0
        %v2531 = vmax.f32 %v825, 0.0
        %v2532 = vmax.f32 %v1016, 0.0
        %v2533 = vmax.f32 %v1018, 0.0
        %v2534 = vmax.f32 %v1209, 0.0
        %v2535 = vmax.f32 %v1211, 0.0
        %v2536 = vmax.f32 %v1402, 0.0
        %v2537 = vmax.f32 %v1404, 0.0
        %v2538 = vmax.f32 %v1595, 0.0
        %v2539 = vmax.f32 %v1597, 0.0
        %v2540 = vmax.f32 %v1788, 0.0
        %v2541 = vmax.f32 %v1790, 0.0
        %v2542 = vmax.f32 %v1981, 0.0
        %v2543 = vmax.f32 %v1983, 0.0
        %v2544 = vmax.f32 %v2174, 0.0
        %v2545 = vmax.f32 %v2176, 0.0
        %v2546 = vmax.f32 %v827, 0.0
        %v2547 = vmax.f32 %v829, 0.0
        %v2548 = vmax.f32 %v1020, 0.0
        %v2549 = vmax.f32 %v1022, 0.0
        %v2550 = vmax.f32 %v1213, 0.0
        %v2551 = vmax.f32 %v1215, 0.0
        %v2552 = vmax.f32 %v1406, 0.0
        %v2553 = vmax.f32 %v1408, 0.0
        %v2554 = vmax.f32 %v1599, 0.0
        %v2555 = vmax.f32 %v1601, 0.0
        %v2556 = vmax.f32 %v1792, 0.0
        %v2557 = vmax.f32 %v1794, 0.0
        %v2558 = vmax.f32 %v1985, 0.0
        %v2559 = vmax.f32 %v1987, 0.0
        %v2560 = vmax.f32 %v2178, 0.0
        %v2561 = vmax.f32 %v2180, 0.0
        %v2562 = vmax.f32 %v833, 0.0
        %v2563 = vmax.f32 %v835, 0.0
        %v2564 = vmax.f32 %v1026, 0.0
        %v2565 = vmax.f32 %v1028, 0.0
        %v2566 = vmax.f32 %v1219, 0.0
        %v2567 = vmax.f32 %v1221, 0.0
        %v2568 = vmax.f32 %v1412, 0.0
        %v2569 = vmax.f32 %v1414, 0.0
        %v2570 = vmax.f32 %v1605, 0.0
        %v2571 = vmax.f32 %v1607, 0.0
        %v2572 = vmax.f32 %v1798, 0.0
        %v2573 = vmax.f32 %v1800, 0.0
        %v2574 = vmax.f32 %v1991, 0.0
        %v2575 = vmax.f32 %v1993, 0.0
        %v2576 = vmax.f32 %v2184, 0.0
        %v2577 = vmax.f32 %v2186, 0.0
        %v2578 = vmax.f32 %v837, 0.0
        %v2579 = vmax.f32 %v839, 0.0
        %v2580 = vmax.f32 %v1030, 0.0
        %v2581 = vmax.f32 %v1032, 0.0
        %v2582 = vmax.f32 %v1223, 0.0
        %v2583 = vmax.f32 %v1225, 0.0
        %v2584 = vmax.f32 %v1416, 0.0
        %v2585 = vmax.f32 %v1418, 0.0
        %v2586 = vmax.f32 %v1609, 0.0
        %v2587 = vmax.f32 %v1611, 0.0
        %v2588 = vmax.f32 %v1802, 0.0
        %v2589 = vmax.f32 %v1804, 0.0
        %v2590 = vmax.f32 %v1995, 0.0
        %v2591 = vmax.f32 %v1997, 0.0
        %v2592 = vmax.f32 %v2188, 0.0
        %v2593 = vmax.f32 %v2190, 0.0
        %v2594 = vmax.f32 %v843, 0.0
        %v2595 = vmax.f32 %v845, 0.0
        %v2596 = vmax.f32 %v1036, 0.0
        %v2597 = vmax.f32 %v1038, 0.0
        %v2598 = vmax.f32 %v1229, 0.0
        %v2599 = vmax.f32 %v1231, 0.0
        %v2600 = vmax.f32 %v1422, 0.0
        %v2601 = vmax.f32 %v1424, 0.0
        %v2602 = vmax.f32 %v1615, 0.0
        %v2603 = vmax.f32 %v1617, 0.0
        %v2604 = vmax.f32 %v1808, 0.0
        %v2605 = vmax.f32 %v1810, 0.0
        %v2606 = vmax.f32 %v2001, 0.0
        %v2607 = vmax.f32 %v2003, 0.0
        %v2608 = vmax.f32 %v2194, 0.0
        %v2609 = vmax.f32 %v2196, 0.0
        %v2610 = vmax.f32 %v847, 0.0
        %v2611 = vmax.f32 %v849, 0.0
        %v2612 = vmax.f32 %v1040, 0.0
        %v2613 = vmax.f32 %v1042, 0.0
        %v2614 = vmax.f32 %v1233, 0.0
        %v2615 = vmax.f32 %v1235, 0.0
        %v2616 = vmax.f32 %v1426, 0.0
        %v2617 = vmax.f32 %v1428, 0.0
        %v2618 = vmax.f32 %v1619, 0.0
        %v2619 = vmax.f32 %v1621, 0.0
        %v2620 = vmax.f32 %v1812, 0.0
        %v2621 = vmax.f32 %v1814, 0.0
        %v2622 = vmax.f32 %v2005, 0.0
        %v2623 = vmax.f32 %v2007, 0.0
        %v2624 = vmax.f32 %v2198, 0.0
        %v2625 = vmax.f32 %v2200, 0.0
        %v2626 = vmax.f32 %v853, 0.0
        %v2627 = vmax.f32 %v855, 0.0
        %v2628 = vmax.f32 %v1046, 0.0
        %v2629 = vmax.f32 %v1048, 0.0
        %v2630 = vmax.f32 %v1239, 0.0
        %v2631 = vmax.f32 %v1241, 0.0
        %v2632 = vmax.f32 %v1432, 0.0
        %v2633 = vmax.f32 %v1434, 0.0
        %v2634 = vmax.f32 %v1625, 0.0
        %v2635 = vmax.f32 %v1627, 0.0
        %v2636 = vmax.f32 %v1818, 0.0
        %v2637 = vmax.f32 %v1820, 0.0
        %v2638 = vmax.f32 %v2011, 0.0
        %v2639 = vmax.f32 %v2013, 0.0
        %v2640 = vmax.f32 %v2204, 0.0
        %v2641 = vmax.f32 %v2206, 0.0
        %v2642 = vmax.f32 %v857, 0.0
        %v2643 = vmax.f32 %v859, 0.0
        %v2644 = vmax.f32 %v1050, 0.0
        %v2645 = vmax.f32 %v1052, 0.0
        %v2646 = vmax.f32 %v1243, 0.0
        %v2647 = vmax.f32 %v1245, 0.0
        %v2648 = vmax.f32 %v1436, 0.0
        %v2649 = vmax.f32 %v1438, 0.0
        %v2650 = vmax.f32 %v1629, 0.0
        %v2651 = vmax.f32 %v1631, 0.0
        %v2652 = vmax.f32 %v1822, 0.0
        %v2653 = vmax.f32 %v1824, 0.0
        %v2654 = vmax.f32 %v2015, 0.0
        %v2655 = vmax.f32 %v2017, 0.0
        %v2656 = vmax.f32 %v2208, 0.0
        %v2657 = vmax.f32 %v2210, 0.0
        %v2658 = vmax.f32 %v863, 0.0
        %v2659 = vmax.f32 %v865, 0.0
        %v2660 = vmax.f32 %v1056, 0.0
        %v2661 = vmax.f32 %v1058, 0.0
        %v2662 = vmax.f32 %v1249, 0.0
        %v2663 = vmax.f32 %v1251, 0.0
        %v2664 = vmax.f32 %v1442, 0.0
        %v2665 = vmax.f32 %v1444, 0.0
        %v2666 = vmax.f32 %v1635, 0.0
        %v2667 = vmax.f32 %v1637, 0.0
        %v2668 = vmax.f32 %v1828, 0.0
        %v2669 = vmax.f32 %v1830, 0.0
        %v2670 = vmax.f32 %v2021, 0.0
        %v2671 = vmax.f32 %v2023, 0.0
        %v2672 = vmax.f32 %v2214, 0.0
        %v2673 = vmax.f32 %v2216, 0.0
        %v2674 = vmax.f32 %v867, 0.0
        %v2675 = vmax.f32 %v869, 0.0
        %v2676 = vmax.f32 %v1060, 0.0
        %v2677 = vmax.f32 %v1062, 0.0
        %v2678 = vmax.f32 %v1253, 0.0
        %v2679 = vmax.f32 %v1255, 0.0
        %v2680 = vmax.f32 %v1446, 0.0
        %v2681 = vmax.f32 %v1448, 0.0
        %v2682 = vmax.f32 %v1639, 0.0
        %v2683 = vmax.f32 %v1641, 0.0
        %v2684 = vmax.f32 %v1832, 0.0
        %v2685 = vmax.f32 %v1834, 0.0
        %v2686 = vmax.f32 %v2025, 0.0
        %v2687 = vmax.f32 %v2027, 0.0
        %v2688 = vmax.f32 %v2218, 0.0
        %v2689 = vmax.f32 %v2220, 0.0
        %v2690 = vmax.f32 %v873, 0.0
        %v2691 = vmax.f32 %v875, 0.0
        %v2692 = vmax.f32 %v1066, 0.0
        %v2693 = vmax.f32 %v1068, 0.0
        %v2694 = vmax.f32 %v1259, 0.0
        %v2695 = vmax.f32 %v1261, 0.0
        %v2696 = vmax.f32 %v1452, 0.0
        %v2697 = vmax.f32 %v1454, 0.0
        %v2698 = vmax.f32 %v1645, 0.0
        %v2699 = vmax.f32 %v1647, 0.0
        %v2700 = vmax.f32 %v1838, 0.0
        %v2701 = vmax.f32 %v1840, 0.0
        %v2702 = vmax.f32 %v2031, 0.0
        %v2703 = vmax.f32 %v2033, 0.0
        %v2704 = vmax.f32 %v2224, 0.0
        %v2705 = vmax.f32 %v2226, 0.0
        %v2706 = vmax.f32 %v877, 0.0
        %v2707 = vmax.f32 %v879, 0.0
        %v2708 = vmax.f32 %v1070, 0.0
        %v2709 = vmax.f32 %v1072, 0.0
        %v2710 = vmax.f32 %v1263, 0.0
        %v2711 = vmax.f32 %v1265, 0.0
        %v2712 = vmax.f32 %v1456, 0.0
        %v2713 = vmax.f32 %v1458, 0.0
        %v2714 = vmax.f32 %v1649, 0.0
        %v2715 = vmax.f32 %v1651, 0.0
        %v2716 = vmax.f32 %v1842, 0.0
        %v2717 = vmax.f32 %v1844, 0.0
        %v2718 = vmax.f32 %v2035, 0.0
        %v2719 = vmax.f32 %v2037, 0.0
        %v2720 = vmax.f32 %v2228, 0.0
        %v2721 = vmax.f32 %v2230, 0.0
        %v2722 = vmax.f32 %v883, 0.0
        %v2723 = vmax.f32 %v885, 0.0
        %v2724 = vmax.f32 %v1076, 0.0
        %v2725 = vmax.f32 %v1078, 0.0
        %v2726 = vmax.f32 %v1269, 0.0
        %v2727 = vmax.f32 %v1271, 0.0
        %v2728 = vmax.f32 %v1462, 0.0
        %v2729 = vmax.f32 %v1464, 0.0
        %v2730 = vmax.f32 %v1655, 0.0
        %v2731 = vmax.f32 %v1657, 0.0
        %v2732 = vmax.f32 %v1848, 0.0
        %v2733 = vmax.f32 %v1850, 0.0
        %v2734 = vmax.f32 %v2041, 0.0
        %v2735 = vmax.f32 %v2043, 0.0
        %v2736 = vmax.f32 %v2234, 0.0
        %v2737 = vmax.f32 %v2236, 0.0
        %v2738 = vmax.f32 %v887, 0.0
        %v2739 = vmax.f32 %v889, 0.0
        %v2740 = vmax.f32 %v1080, 0.0
        %v2741 = vmax.f32 %v1082, 0.0
        %v2742 = vmax.f32 %v1273, 0.0
        %v2743 = vmax.f32 %v1275, 0.0
        %v2744 = vmax.f32 %v1466, 0.0
        %v2745 = vmax.f32 %v1468, 0.0
        %v2746 = vmax.f32 %v1659, 0.0
        %v2747 = vmax.f32 %v1661, 0.0
        %v2748 = vmax.f32 %v1852, 0.0
        %v2749 = vmax.f32 %v1854, 0.0
        %v2750 = vmax.f32 %v2045, 0.0
        %v2751 = vmax.f32 %v2047, 0.0
        %v2752 = vmax.f32 %v2238, 0.0
        %v2753 = vmax.f32 %v2240, 0.0
        %v2754 = vld [vmem:[#allocation2] sm:$0xff]
        %v2755 = vld [vmem:[#allocation2 + $0x8] sm:$0xff]
        %v2756 = vadd.f32 %v2242, %v2258
        %v2757 = vadd.f32 %v2756, %v2274
        %v2758 = vadd.f32 %v2757, %v2290
        %v2759 = vadd.f32 %v2758, %v2306
        %v2760 = vadd.f32 %v2759, %v2322
        %v2761 = vadd.f32 %v2760, %v2338
        %v2762 = vadd.f32 %v2761, %v2354
        %v2763 = vadd.f32 %v2762, %v2370
        %v2764 = vadd.f32 %v2763, %v2386
        %v2765 = vadd.f32 %v2764, %v2402
        %v2766 = vadd.f32 %v2765, %v2418
        %v2767 = vadd.f32 %v2766, %v2434
        %v2768 = vadd.f32 %v2767, %v2450
        %v2769 = vadd.f32 %v2768, %v2466
        %v2770 = vadd.f32 %v2769, %v2482
        %v2771 = vadd.f32 %v2770, %v2498
        %v2772 = vadd.f32 %v2771, %v2514
        %v2773 = vadd.f32 %v2772, %v2530
        %v2774 = vadd.f32 %v2773, %v2546
        %v2775 = vadd.f32 %v2774, %v2562
        %v2776 = vadd.f32 %v2775, %v2578
        %v2777 = vadd.f32 %v2776, %v2594
        %v2778 = vadd.f32 %v2777, %v2610
        %v2779 = vadd.f32 %v2778, %v2626
        %v2780 = vadd.f32 %v2779, %v2642
        %v2781 = vadd.f32 %v2780, %v2658
        %v2782 = vadd.f32 %v2781, %v2674
        %v2783 = vadd.f32 %v2782, %v2690
        %v2784 = vadd.f32 %v2783, %v2706
        %v2785 = vadd.f32 %v2784, %v2722
        %v2786 = vadd.f32 %v2785, %v2738
        %v2787 = vrot.slane %v2786, 4
        %v2788 = vadd.f32 %v2786, %v2787
        %v2789 = vrot.slane %v2788, 2
        %v2790 = vadd.f32 %v2788, %v2789
        %v2791 = vrot.slane %v2790, 1
        %v2792 = vadd.f32 %v2790, %v2791
        %v2793 = vadd.f32 %v2243, %v2259
        %v2794 = vadd.f32 %v2793, %v2275
        %v2795 = vadd.f32 %v2794, %v2291
        %v2796 = vadd.f32 %v2795, %v2307
        %v2797 = vadd.f32 %v2796, %v2323
        %v2798 = vadd.f32 %v2797, %v2339
        %v2799 = vadd.f32 %v2798, %v2355
        %v2800 = vadd.f32 %v2799, %v2371
        %v2801 = vadd.f32 %v2800, %v2387
        %v2802 = vadd.f32 %v2801, %v2403
        %v2803 = vadd.f32 %v2802, %v2419
        %v2804 = vadd.f32 %v2803, %v2435
        %v2805 = vadd.f32 %v2804, %v2451
        %v2806 = vadd.f32 %v2805, %v2467
        %v2807 = vadd.f32 %v2806, %v2483
        %v2808 = vadd.f32 %v2807, %v2499
        %v2809 = vadd.f32 %v2808, %v2515
        %v2810 = vadd.f32 %v2809, %v2531
        %v2811 = vadd.f32 %v2810, %v2547
        %v2812 = vadd.f32 %v2811, %v2563
        %v2813 = vadd.f32 %v2812, %v2579
        %v2814 = vadd.f32 %v2813, %v2595
        %v2815 = vadd.f32 %v2814, %v2611
        %v2816 = vadd.f32 %v2815, %v2627
        %v2817 = vadd.f32 %v2816, %v2643
        %v2818 = vadd.f32 %v2817, %v2659
        %v2819 = vadd.f32 %v2818, %v2675
        %v2820 = vadd.f32 %v2819, %v2691
        %v2821 = vadd.f32 %v2820, %v2707
        %v2822 = vadd.f32 %v2821, %v2723
        %v2823 = vadd.f32 %v2822, %v2739
        %v2824 = vrot.slane %v2823, 4
        %v2825 = vadd.f32 %v2823, %v2824
        %v2826 = vrot.slane %v2825, 2
        %v2827 = vadd.f32 %v2825, %v2826
        %v2828 = vrot.slane %v2827, 1
        %v2829 = vadd.f32 %v2827, %v2828
        %v2830 = vadd.f32 %v2244, %v2260
        %v2831 = vadd.f32 %v2830, %v2276
        %v2832 = vadd.f32 %v2831, %v2292
        %v2833 = vadd.f32 %v2832, %v2308
        %v2834 = vadd.f32 %v2833, %v2324
        %v2835 = vadd.f32 %v2834, %v2340
        %v2836 = vadd.f32 %v2835, %v2356
        %v2837 = vadd.f32 %v2836, %v2372
        %v2838 = vadd.f32 %v2837, %v2388
        %v2839 = vadd.f32 %v2838, %v2404
        %v2840 = vadd.f32 %v2839, %v2420
        %v2841 = vadd.f32 %v2840, %v2436
        %v2842 = vadd.f32 %v2841, %v2452
        %v2843 = vadd.f32 %v2842, %v2468
        %v2844 = vadd.f32 %v2843, %v2484
        %v2845 = vadd.f32 %v2844, %v2500
        %v2846 = vadd.f32 %v2845, %v2516
        %v2847 = vadd.f32 %v2846, %v2532
        %v2848 = vadd.f32 %v2847, %v2548
        %v2849 = vadd.f32 %v2848, %v2564
        %v2850 = vadd.f32 %v2849, %v2580
        %v2851 = vadd.f32 %v2850, %v2596
        %v2852 = vadd.f32 %v2851, %v2612
        %v2853 = vadd.f32 %v2852, %v2628
        %v2854 = vadd.f32 %v2853, %v2644
        %v2855 = vadd.f32 %v2854, %v2660
        %v2856 = vadd.f32 %v2855, %v2676
        %v2857 = vadd.f32 %v2856, %v2692
        %v2858 = vadd.f32 %v2857, %v2708
        %v2859 = vadd.f32 %v2858, %v2724
        %v2860 = vadd.f32 %v2859, %v2740
        %v2861 = vrot.slane %v2860, 4
        %v2862 = vadd.f32 %v2860, %v2861
        %v2863 = vrot.slane %v2862, 2
        %v2864 = vadd.f32 %v2862, %v2863
        %v2865 = vrot.slane %v2864, 1
        %v2866 = vadd.f32 %v2864, %v2865
        %v2867 = vadd.f32 %v2245, %v2261
        %v2868 = vadd.f32 %v2867, %v2277
        %v2869 = vadd.f32 %v2868, %v2293
        %v2870 = vadd.f32 %v2869, %v2309
        %v2871 = vadd.f32 %v2870, %v2325
        %v2872 = vadd.f32 %v2871, %v2341
        %v2873 = vadd.f32 %v2872, %v2357
        %v2874 = vadd.f32 %v2873, %v2373
        %v2875 = vadd.f32 %v2874, %v2389
        %v2876 = vadd.f32 %v2875, %v2405
        %v2877 = vadd.f32 %v2876, %v2421
        %v2878 = vadd.f32 %v2877, %v2437
        %v2879 = vadd.f32 %v2878, %v2453
        %v2880 = vadd.f32 %v2879, %v2469
        %v2881 = vadd.f32 %v2880, %v2485
        %v2882 = vadd.f32 %v2881, %v2501
        %v2883 = vadd.f32 %v2882, %v2517
        %v2884 = vadd.f32 %v2883, %v2533
        %v2885 = vadd.f32 %v2884, %v2549
        %v2886 = vadd.f32 %v2885, %v2565
        %v2887 = vadd.f32 %v2886, %v2581
        %v2888 = vadd.f32 %v2887, %v2597
        %v2889 = vadd.f32 %v2888, %v2613
        %v2890 = vadd.f32 %v2889, %v2629
        %v2891 = vadd.f32 %v2890, %v2645
        %v2892 = vadd.f32 %v2891, %v2661
        %v2893 = vadd.f32 %v2892, %v2677
        %v2894 = vadd.f32 %v2893, %v2693
        %v2895 = vadd.f32 %v2894, %v2709
        %v2896 = vadd.f32 %v2895, %v2725
        %v2897 = vadd.f32 %v2896, %v2741
        %v2898 = vrot.slane %v2897, 4
        %v2899 = vadd.f32 %v2897, %v2898
        %v2900 = vrot.slane %v2899, 2
        %v2901 = vadd.f32 %v2899, %v2900
        %v2902 = vrot.slane %v2901, 1
        %v2903 = vadd.f32 %v2901, %v2902
        %v2904 = vadd.f32 %v2246, %v2262
        %v2905 = vadd.f32 %v2904, %v2278
        %v2906 = vadd.f32 %v2905, %v2294
        %v2907 = vadd.f32 %v2906, %v2310
        %v2908 = vadd.f32 %v2907, %v2326
        %v2909 = vadd.f32 %v2908, %v2342
        %v2910 = vadd.f32 %v2909, %v2358
        %v2911 = vadd.f32 %v2910, %v2374
        %v2912 = vadd.f32 %v2911, %v2390
        %v2913 = vadd.f32 %v2912, %v2406
        %v2914 = vadd.f32 %v2913, %v2422
        %v2915 = vadd.f32 %v2914, %v2438
        %v2916 = vadd.f32 %v2915, %v2454
        %v2917 = vadd.f32 %v2916, %v2470
        %v2918 = vadd.f32 %v2917, %v2486
        %v2919 = vadd.f32 %v2918, %v2502
        %v2920 = vadd.f32 %v2919, %v2518
        %v2921 = vadd.f32 %v2920, %v2534
        %v2922 = vadd.f32 %v2921, %v2550
        %v2923 = vadd.f32 %v2922, %v2566
        %v2924 = vadd.f32 %v2923, %v2582
        %v2925 = vadd.f32 %v2924, %v2598
        %v2926 = vadd.f32 %v2925, %v2614
        %v2927 = vadd.f32 %v2926, %v2630
        %v2928 = vadd.f32 %v2927, %v2646
        %v2929 = vadd.f32 %v2928, %v2662
        %v2930 = vadd.f32 %v2929, %v2678
        %v2931 = vadd.f32 %v2930, %v2694
        %v2932 = vadd.f32 %v2931, %v2710
        %v2933 = vadd.f32 %v2932, %v2726
        %v2934 = vadd.f32 %v2933, %v2742
        %v2935 = vrot.slane %v2934, 4
        %v2936 = vadd.f32 %v2934, %v2935
        %v2937 = vrot.slane %v2936, 2
        %v2938 = vadd.f32 %v2936, %v2937
        %v2939 = vrot.slane %v2938, 1
        %v2940 = vadd.f32 %v2938, %v2939
        %v2941 = vadd.f32 %v2247, %v2263
        %v2942 = vadd.f32 %v2941, %v2279
        %v2943 = vadd.f32 %v2942, %v2295
        %v2944 = vadd.f32 %v2943, %v2311
        %v2945 = vadd.f32 %v2944, %v2327
        %v2946 = vadd.f32 %v2945, %v2343
        %v2947 = vadd.f32 %v2946, %v2359
        %v2948 = vadd.f32 %v2947, %v2375
        %v2949 = vadd.f32 %v2948, %v2391
        %v2950 = vadd.f32 %v2949, %v2407
        %v2951 = vadd.f32 %v2950, %v2423
        %v2952 = vadd.f32 %v2951, %v2439
        %v2953 = vadd.f32 %v2952, %v2455
        %v2954 = vadd.f32 %v2953, %v2471
        %v2955 = vadd.f32 %v2954, %v2487
        %v2956 = vadd.f32 %v2955, %v2503
        %v2957 = vadd.f32 %v2956, %v2519
        %v2958 = vadd.f32 %v2957, %v2535
        %v2959 = vadd.f32 %v2958, %v2551
        %v2960 = vadd.f32 %v2959, %v2567
        %v2961 = vadd.f32 %v2960, %v2583
        %v2962 = vadd.f32 %v2961, %v2599
        %v2963 = vadd.f32 %v2962, %v2615
        %v2964 = vadd.f32 %v2963, %v2631
        %v2965 = vadd.f32 %v2964, %v2647
        %v2966 = vadd.f32 %v2965, %v2663
        %v2967 = vadd.f32 %v2966, %v2679
        %v2968 = vadd.f32 %v2967, %v2695
        %v2969 = vadd.f32 %v2968, %v2711
        %v2970 = vadd.f32 %v2969, %v2727
        %v2971 = vadd.f32 %v2970, %v2743
        %v2972 = vrot.slane %v2971, 4
        %v2973 = vadd.f32 %v2971, %v2972
        %v2974 = vrot.slane %v2973, 2
        %v2975 = vadd.f32 %v2973, %v2974
        %v2976 = vrot.slane %v2975, 1
        %v2977 = vadd.f32 %v2975, %v2976
        %v2978 = vadd.f32 %v2248, %v2264
        %v2979 = vadd.f32 %v2978, %v2280
        %v2980 = vadd.f32 %v2979, %v2296
        %v2981 = vadd.f32 %v2980, %v2312
        %v2982 = vadd.f32 %v2981, %v2328
        %v2983 = vadd.f32 %v2982, %v2344
        %v2984 = vadd.f32 %v2983, %v2360
        %v2985 = vadd.f32 %v2984, %v2376
        %v2986 = vadd.f32 %v2985, %v2392
        %v2987 = vadd.f32 %v2986, %v2408
        %v2988 = vadd.f32 %v2987, %v2424
        %v2989 = vadd.f32 %v2988, %v2440
        %v2990 = vadd.f32 %v2989, %v2456
        %v2991 = vadd.f32 %v2990, %v2472
        %v2992 = vadd.f32 %v2991, %v2488
        %v2993 = vadd.f32 %v2992, %v2504
        %v2994 = vadd.f32 %v2993, %v2520
        %v2995 = vadd.f32 %v2994, %v2536
        %v2996 = vadd.f32 %v2995, %v2552
        %v2997 = vadd.f32 %v2996, %v2568
        %v2998 = vadd.f32 %v2997, %v2584
        %v2999 = vadd.f32 %v2998, %v2600
        %v3000 = vadd.f32 %v2999, %v2616
        %v3001 = vadd.f32 %v3000, %v2632
        %v3002 = vadd.f32 %v3001, %v2648
        %v3003 = vadd.f32 %v3002, %v2664
        %v3004 = vadd.f32 %v3003, %v2680
        %v3005 = vadd.f32 %v3004, %v2696
        %v3006 = vadd.f32 %v3005, %v2712
        %v3007 = vadd.f32 %v3006, %v2728
        %v3008 = vadd.f32 %v3007, %v2744
        %v3009 = vrot.slane %v3008, 4
        %v3010 = vadd.f32 %v3008, %v3009
        %v3011 = vrot.slane %v3010, 2
        %v3012 = vadd.f32 %v3010, %v3011
        %v3013 = vrot.slane %v3012, 1
        %v3014 = vadd.f32 %v3012, %v3013
        %v3015 = vadd.f32 %v2249, %v2265
        %v3016 = vadd.f32 %v3015, %v2281
        %v3017 = vadd.f32 %v3016, %v2297
        %v3018 = vadd.f32 %v3017, %v2313
        %v3019 = vadd.f32 %v3018, %v2329
        %v3020 = vadd.f32 %v3019, %v2345
        %v3021 = vadd.f32 %v3020, %v2361
        %v3022 = vadd.f32 %v3021, %v2377
        %v3023 = vadd.f32 %v3022, %v2393
        %v3024 = vadd.f32 %v3023, %v2409
        %v3025 = vadd.f32 %v3024, %v2425
        %v3026 = vadd.f32 %v3025, %v2441
        %v3027 = vadd.f32 %v3026, %v2457
        %v3028 = vadd.f32 %v3027, %v2473
        %v3029 = vadd.f32 %v3028, %v2489
        %v3030 = vadd.f32 %v3029, %v2505
        %v3031 = vadd.f32 %v3030, %v2521
        %v3032 = vadd.f32 %v3031, %v2537
        %v3033 = vadd.f32 %v3032, %v2553
        %v3034 = vadd.f32 %v3033, %v2569
        %v3035 = vadd.f32 %v3034, %v2585
        %v3036 = vadd.f32 %v3035, %v2601
        %v3037 = vadd.f32 %v3036, %v2617
        %v3038 = vadd.f32 %v3037, %v2633
        %v3039 = vadd.f32 %v3038, %v2649
        %v3040 = vadd.f32 %v3039, %v2665
        %v3041 = vadd.f32 %v3040, %v2681
        %v3042 = vadd.f32 %v3041, %v2697
        %v3043 = vadd.f32 %v3042, %v2713
        %v3044 = vadd.f32 %v3043, %v2729
        %v3045 = vadd.f32 %v3044, %v2745
        %v3046 = vrot.slane %v3045, 4
        %v3047 = vadd.f32 %v3045, %v3046
        %v3048 = vrot.slane %v3047, 2
        %v3049 = vadd.f32 %v3047, %v3048
        %v3050 = vrot.slane %v3049, 1
        %v3051 = vadd.f32 %v3049, %v3050
        %v3052 = vadd.f32 %v2250, %v2266
        %v3053 = vadd.f32 %v3052, %v2282
        %v3054 = vadd.f32 %v3053, %v2298
        %v3055 = vadd.f32 %v3054, %v2314
        %v3056 = vadd.f32 %v3055, %v2330
        %v3057 = vadd.f32 %v3056, %v2346
        %v3058 = vadd.f32 %v3057, %v2362
        %v3059 = vadd.f32 %v3058, %v2378
        %v3060 = vadd.f32 %v3059, %v2394
        %v3061 = vadd.f32 %v3060, %v2410
        %v3062 = vadd.f32 %v3061, %v2426
        %v3063 = vadd.f32 %v3062, %v2442
        %v3064 = vadd.f32 %v3063, %v2458
        %v3065 = vadd.f32 %v3064, %v2474
        %v3066 = vadd.f32 %v3065, %v2490
        %v3067 = vadd.f32 %v3066, %v2506
        %v3068 = vadd.f32 %v3067, %v2522
        %v3069 = vadd.f32 %v3068, %v2538
        %v3070 = vadd.f32 %v3069, %v2554
        %v3071 = vadd.f32 %v3070, %v2570
        %v3072 = vadd.f32 %v3071, %v2586
        %v3073 = vadd.f32 %v3072, %v2602
        %v3074 = vadd.f32 %v3073, %v2618
        %v3075 = vadd.f32 %v3074, %v2634
        %v3076 = vadd.f32 %v3075, %v2650
        %v3077 = vadd.f32 %v3076, %v2666
        %v3078 = vadd.f32 %v3077, %v2682
        %v3079 = vadd.f32 %v3078, %v2698
        %v3080 = vadd.f32 %v3079, %v2714
        %v3081 = vadd.f32 %v3080, %v2730
        %v3082 = vadd.f32 %v3081, %v2746
        %v3083 = vrot.slane %v3082, 4
        %v3084 = vadd.f32 %v3082, %v3083
        %v3085 = vrot.slane %v3084, 2
        %v3086 = vadd.f32 %v3084, %v3085
        %v3087 = vrot.slane %v3086, 1
        %v3088 = vadd.f32 %v3086, %v3087
        %v3089 = vadd.f32 %v2251, %v2267
        %v3090 = vadd.f32 %v3089, %v2283
        %v3091 = vadd.f32 %v3090, %v2299
        %v3092 = vadd.f32 %v3091, %v2315
        %v3093 = vadd.f32 %v3092, %v2331
        %v3094 = vadd.f32 %v3093, %v2347
        %v3095 = vadd.f32 %v3094, %v2363
        %v3096 = vadd.f32 %v3095, %v2379
        %v3097 = vadd.f32 %v3096, %v2395
        %v3098 = vadd.f32 %v3097, %v2411
        %v3099 = vadd.f32 %v3098, %v2427
        %v3100 = vadd.f32 %v3099, %v2443
        %v3101 = vadd.f32 %v3100, %v2459
        %v3102 = vadd.f32 %v3101, %v2475
        %v3103 = vadd.f32 %v3102, %v2491
        %v3104 = vadd.f32 %v3103, %v2507
        %v3105 = vadd.f32 %v3104, %v2523
        %v3106 = vadd.f32 %v3105, %v2539
        %v3107 = vadd.f32 %v3106, %v2555
        %v3108 = vadd.f32 %v3107, %v2571
        %v3109 = vadd.f32 %v3108, %v2587
        %v3110 = vadd.f32 %v3109, %v2603
        %v3111 = vadd.f32 %v3110, %v2619
        %v3112 = vadd.f32 %v3111, %v2635
        %v3113 = vadd.f32 %v3112, %v2651
        %v3114 = vadd.f32 %v3113, %v2667
        %v3115 = vadd.f32 %v3114, %v2683
        %v3116 = vadd.f32 %v3115, %v2699
        %v3117 = vadd.f32 %v3116, %v2715
        %v3118 = vadd.f32 %v3117, %v2731
        %v3119 = vadd.f32 %v3118, %v2747
        %v3120 = vrot.slane %v3119, 4
        %v3121 = vadd.f32 %v3119, %v3120
        %v3122 = vrot.slane %v3121, 2
        %v3123 = vadd.f32 %v3121, %v3122
        %v3124 = vrot.slane %v3123, 1
        %v3125 = vadd.f32 %v3123, %v3124
        %v3126 = vadd.f32 %v2252, %v2268
        %v3127 = vadd.f32 %v3126, %v2284
        %v3128 = vadd.f32 %v3127, %v2300
        %v3129 = vadd.f32 %v3128, %v2316
        %v3130 = vadd.f32 %v3129, %v2332
        %v3131 = vadd.f32 %v3130, %v2348
        %v3132 = vadd.f32 %v3131, %v2364
        %v3133 = vadd.f32 %v3132, %v2380
        %v3134 = vadd.f32 %v3133, %v2396
        %v3135 = vadd.f32 %v3134, %v2412
        %v3136 = vadd.f32 %v3135, %v2428
        %v3137 = vadd.f32 %v3136, %v2444
        %v3138 = vadd.f32 %v3137, %v2460
        %v3139 = vadd.f32 %v3138, %v2476
        %v3140 = vadd.f32 %v3139, %v2492
        %v3141 = vadd.f32 %v3140, %v2508
        %v3142 = vadd.f32 %v3141, %v2524
        %v3143 = vadd.f32 %v3142, %v2540
        %v3144 = vadd.f32 %v3143, %v2556
        %v3145 = vadd.f32 %v3144, %v2572
        %v3146 = vadd.f32 %v3145, %v2588
        %v3147 = vadd.f32 %v3146, %v2604
        %v3148 = vadd.f32 %v3147, %v2620
        %v3149 = vadd.f32 %v3148, %v2636
        %v3150 = vadd.f32 %v3149, %v2652
        %v3151 = vadd.f32 %v3150, %v2668
        %v3152 = vadd.f32 %v3151, %v2684
        %v3153 = vadd.f32 %v3152, %v2700
        %v3154 = vadd.f32 %v3153, %v2716
        %v3155 = vadd.f32 %v3154, %v2732
        %v3156 = vadd.f32 %v3155, %v2748
        %v3157 = vrot.slane %v3156, 4
        %v3158 = vadd.f32 %v3156, %v3157
        %v3159 = vrot.slane %v3158, 2
        %v3160 = vadd.f32 %v3158, %v3159
        %v3161 = vrot.slane %v3160, 1
        %v3162 = vadd.f32 %v3160, %v3161
        %v3163 = vadd.f32 %v2253, %v2269
        %v3164 = vadd.f32 %v3163, %v2285
        %v3165 = vadd.f32 %v3164, %v2301
        %v3166 = vadd.f32 %v3165, %v2317
        %v3167 = vadd.f32 %v3166, %v2333
        %v3168 = vadd.f32 %v3167, %v2349
        %v3169 = vadd.f32 %v3168, %v2365
        %v3170 = vadd.f32 %v3169, %v2381
        %v3171 = vadd.f32 %v3170, %v2397
        %v3172 = vadd.f32 %v3171, %v2413
        %v3173 = vadd.f32 %v3172, %v2429
        %v3174 = vadd.f32 %v3173, %v2445
        %v3175 = vadd.f32 %v3174, %v2461
        %v3176 = vadd.f32 %v3175, %v2477
        %v3177 = vadd.f32 %v3176, %v2493
        %v3178 = vadd.f32 %v3177, %v2509
        %v3179 = vadd.f32 %v3178, %v2525
        %v3180 = vadd.f32 %v3179, %v2541
        %v3181 = vadd.f32 %v3180, %v2557
        %v3182 = vadd.f32 %v3181, %v2573
        %v3183 = vadd.f32 %v3182, %v2589
        %v3184 = vadd.f32 %v3183, %v2605
        %v3185 = vadd.f32 %v3184, %v2621
        %v3186 = vadd.f32 %v3185, %v2637
        %v3187 = vadd.f32 %v3186, %v2653
        %v3188 = vadd.f32 %v3187, %v2669
        %v3189 = vadd.f32 %v3188, %v2685
        %v3190 = vadd.f32 %v3189, %v2701
        %v3191 = vadd.f32 %v3190, %v2717
        %v3192 = vadd.f32 %v3191, %v2733
        %v3193 = vadd.f32 %v3192, %v2749
        %v3194 = vrot.slane %v3193, 4
        %v3195 = vadd.f32 %v3193, %v3194
        %v3196 = vrot.slane %v3195, 2
        %v3197 = vadd.f32 %v3195, %v3196
        %v3198 = vrot.slane %v3197, 1
        %v3199 = vadd.f32 %v3197, %v3198
        %v3200 = vadd.f32 %v2254, %v2270
        %v3201 = vadd.f32 %v3200, %v2286
        %v3202 = vadd.f32 %v3201, %v2302
        %v3203 = vadd.f32 %v3202, %v2318
        %v3204 = vadd.f32 %v3203, %v2334
        %v3205 = vadd.f32 %v3204, %v2350
        %v3206 = vadd.f32 %v3205, %v2366
        %v3207 = vadd.f32 %v3206, %v2382
        %v3208 = vadd.f32 %v3207, %v2398
        %v3209 = vadd.f32 %v3208, %v2414
        %v3210 = vadd.f32 %v3209, %v2430
        %v3211 = vadd.f32 %v3210, %v2446
        %v3212 = vadd.f32 %v3211, %v2462
        %v3213 = vadd.f32 %v3212, %v2478
        %v3214 = vadd.f32 %v3213, %v2494
        %v3215 = vadd.f32 %v3214, %v2510
        %v3216 = vadd.f32 %v3215, %v2526
        %v3217 = vadd.f32 %v3216, %v2542
        %v3218 = vadd.f32 %v3217, %v2558
        %v3219 = vadd.f32 %v3218, %v2574
        %v3220 = vadd.f32 %v3219, %v2590
        %v3221 = vadd.f32 %v3220, %v2606
        %v3222 = vadd.f32 %v3221, %v2622
        %v3223 = vadd.f32 %v3222, %v2638
        %v3224 = vadd.f32 %v3223, %v2654
        %v3225 = vadd.f32 %v3224, %v2670
        %v3226 = vadd.f32 %v3225, %v2686
        %v3227 = vadd.f32 %v3226, %v2702
        %v3228 = vadd.f32 %v3227, %v2718
        %v3229 = vadd.f32 %v3228, %v2734
        %v3230 = vadd.f32 %v3229, %v2750
        %v3231 = vrot.slane %v3230, 4
        %v3232 = vadd.f32 %v3230, %v3231
        %v3233 = vrot.slane %v3232, 2
        %v3234 = vadd.f32 %v3232, %v3233
        %v3235 = vrot.slane %v3234, 1
        %v3236 = vadd.f32 %v3234, %v3235
        %v3237 = vadd.f32 %v2255, %v2271
        %v3238 = vadd.f32 %v3237, %v2287
        %v3239 = vadd.f32 %v3238, %v2303
        %v3240 = vadd.f32 %v3239, %v2319
        %v3241 = vadd.f32 %v3240, %v2335
        %v3242 = vadd.f32 %v3241, %v2351
        %v3243 = vadd.f32 %v3242, %v2367
        %v3244 = vadd.f32 %v3243, %v2383
        %v3245 = vadd.f32 %v3244, %v2399
        %v3246 = vadd.f32 %v3245, %v2415
        %v3247 = vadd.f32 %v3246, %v2431
        %v3248 = vadd.f32 %v3247, %v2447
        %v3249 = vadd.f32 %v3248, %v2463
        %v3250 = vadd.f32 %v3249, %v2479
        %v3251 = vadd.f32 %v3250, %v2495
        %v3252 = vadd.f32 %v3251, %v2511
        %v3253 = vadd.f32 %v3252, %v2527
        %v3254 = vadd.f32 %v3253, %v2543
        %v3255 = vadd.f32 %v3254, %v2559
        %v3256 = vadd.f32 %v3255, %v2575
        %v3257 = vadd.f32 %v3256, %v2591
        %v3258 = vadd.f32 %v3257, %v2607
        %v3259 = vadd.f32 %v3258, %v2623
        %v3260 = vadd.f32 %v3259, %v2639
        %v3261 = vadd.f32 %v3260, %v2655
        %v3262 = vadd.f32 %v3261, %v2671
        %v3263 = vadd.f32 %v3262, %v2687
        %v3264 = vadd.f32 %v3263, %v2703
        %v3265 = vadd.f32 %v3264, %v2719
        %v3266 = vadd.f32 %v3265, %v2735
        %v3267 = vadd.f32 %v3266, %v2751
        %v3268 = vrot.slane %v3267, 4
        %v3269 = vadd.f32 %v3267, %v3268
        %v3270 = vrot.slane %v3269, 2
        %v3271 = vadd.f32 %v3269, %v3270
        %v3272 = vrot.slane %v3271, 1
        %v3273 = vadd.f32 %v3271, %v3272
        %v3274 = vadd.f32 %v2256, %v2272
        %v3275 = vadd.f32 %v3274, %v2288
        %v3276 = vadd.f32 %v3275, %v2304
        %v3277 = vadd.f32 %v3276, %v2320
        %v3278 = vadd.f32 %v3277, %v2336
        %v3279 = vadd.f32 %v3278, %v2352
        %v3280 = vadd.f32 %v3279, %v2368
        %v3281 = vadd.f32 %v3280, %v2384
        %v3282 = vadd.f32 %v3281, %v2400
        %v3283 = vadd.f32 %v3282, %v2416
        %v3284 = vadd.f32 %v3283, %v2432
        %v3285 = vadd.f32 %v3284, %v2448
        %v3286 = vadd.f32 %v3285, %v2464
        %v3287 = vadd.f32 %v3286, %v2480
        %v3288 = vadd.f32 %v3287, %v2496
        %v3289 = vadd.f32 %v3288, %v2512
        %v3290 = vadd.f32 %v3289, %v2528
        %v3291 = vadd.f32 %v3290, %v2544
        %v3292 = vadd.f32 %v3291, %v2560
        %v3293 = vadd.f32 %v3292, %v2576
        %v3294 = vadd.f32 %v3293, %v2592
        %v3295 = vadd.f32 %v3294, %v2608
        %v3296 = vadd.f32 %v3295, %v2624
        %v3297 = vadd.f32 %v3296, %v2640
        %v3298 = vadd.f32 %v3297, %v2656
        %v3299 = vadd.f32 %v3298, %v2672
        %v3300 = vadd.f32 %v3299, %v2688
        %v3301 = vadd.f32 %v3300, %v2704
        %v3302 = vadd.f32 %v3301, %v2720
        %v3303 = vadd.f32 %v3302, %v2736
        %v3304 = vadd.f32 %v3303, %v2752
        %v3305 = vrot.slane %v3304, 4
        %v3306 = vadd.f32 %v3304, %v3305
        %v3307 = vrot.slane %v3306, 2
        %v3308 = vadd.f32 %v3306, %v3307
        %v3309 = vrot.slane %v3308, 1
        %v3310 = vadd.f32 %v3308, %v3309
        %v3311 = vadd.f32 %v2257, %v2273
        %v3312 = vadd.f32 %v3311, %v2289
        %v3313 = vadd.f32 %v3312, %v2305
        %v3314 = vadd.f32 %v3313, %v2321
        %v3315 = vadd.f32 %v3314, %v2337
        %v3316 = vadd.f32 %v3315, %v2353
        %v3317 = vadd.f32 %v3316, %v2369
        %v3318 = vadd.f32 %v3317, %v2385
        %v3319 = vadd.f32 %v3318, %v2401
        %v3320 = vadd.f32 %v3319, %v2417
        %v3321 = vadd.f32 %v3320, %v2433
        %v3322 = vadd.f32 %v3321, %v2449
        %v3323 = vadd.f32 %v3322, %v2465
        %v3324 = vadd.f32 %v3323, %v2481
        %v3325 = vadd.f32 %v3324, %v2497
        %v3326 = vadd.f32 %v3325, %v2513
        %v3327 = vadd.f32 %v3326, %v2529
        %v3328 = vadd.f32 %v3327, %v2545
        %v3329 = vadd.f32 %v3328, %v2561
        %v3330 = vadd.f32 %v3329, %v2577
        %v3331 = vadd.f32 %v3330, %v2593
        %v3332 = vadd.f32 %v3331, %v2609
        %v3333 = vadd.f32 %v3332, %v2625
        %v3334 = vadd.f32 %v3333, %v2641
        %v3335 = vadd.f32 %v3334, %v2657
        %v3336 = vadd.f32 %v3335, %v2673
        %v3337 = vadd.f32 %v3336, %v2689
        %v3338 = vadd.f32 %v3337, %v2705
        %v3339 = vadd.f32 %v3338, %v2721
        %v3340 = vadd.f32 %v3339, %v2737
        %v3341 = vadd.f32 %v3340, %v2753
        %v3342 = vrot.slane %v3341, 4
        %v3343 = vadd.f32 %v3341, %v3342
        %v3344 = vrot.slane %v3343, 2
        %v3345 = vadd.f32 %v3343, %v3344
        %v3346 = vrot.slane %v3345, 1
        %v3347 = vadd.f32 %v3345, %v3346
        %v3364 = vcombine.low %v2792, %v2829
        %v3365 = vcombine.low %v2866, %v2903
        %v3366 = vcombine.low %v2940, %v2977
        %v3367 = vcombine.low %v3014, %v3051
        %v3369 = vunpack.c.l.s4 1966171168
        %v3370 = vunpack.c.0.s8 %v3369
        %v3371 = vlaneseq
        %v3372 = vshrl.u32 %v3371, 7
        %v3373 = vsub.s32 %v3370, %v3372
        %v3374 = vrot.slane %v3364, %v3373
        %v3376 = vunpack.c.l.s4 1966171168
        %v3377 = vunpack.c.0.s8 %v3376
        %v3378 = vlaneseq
        %v3379 = vshrl.u32 %v3378, 7
        %v3380 = vsub.s32 %v3377, %v3379
        %v3381 = vrot.slane %v3365, %v3380
        %v3383 = vunpack.c.l.s4 1966171168
        %v3384 = vunpack.c.0.s8 %v3383
        %v3385 = vlaneseq
        %v3386 = vshrl.u32 %v3385, 7
        %v3387 = vsub.s32 %v3384, %v3386
        %v3388 = vrot.slane %v3366, %v3387
        %v3390 = vunpack.c.l.s4 1966171168
        %v3391 = vunpack.c.0.s8 %v3390
        %v3392 = vlaneseq
        %v3393 = vshrl.u32 %v3392, 7
        %v3394 = vsub.s32 %v3391, %v3393
        %v3395 = vrot.slane %v3367, %v3394
        %v3396 = vcombine.low %v3374, %v3381
        %v3397 = vcombine.low %v3388, %v3395
        %v3399 = vunpack.c.l.s4 1966171168
        %v3400 = vunpack.c.0.s8 %v3399
        %v3401 = vlaneseq
        %v3402 = vshrl.u32 %v3401, 7
        %v3403 = vsub.s32 %v3400, %v3402
        %v3404 = vrot.slane %v3396, %v3403
        %v3406 = vunpack.c.l.s4 1966171168
        %v3407 = vunpack.c.0.s8 %v3406
        %v3408 = vlaneseq
        %v3409 = vshrl.u32 %v3408, 7
        %v3410 = vsub.s32 %v3407, %v3409
        %v3411 = vrot.slane %v3397, %v3410
        %v3412 = vcombine.low %v3404, %v3411
        %v3413 = vcombine.low %v3088, %v3125
        %v3414 = vcombine.low %v3162, %v3199
        %v3415 = vcombine.low %v3236, %v3273
        %v3416 = vcombine.low %v3310, %v3347
        %v3418 = vunpack.c.l.s4 1966171168
        %v3419 = vunpack.c.0.s8 %v3418
        %v3420 = vlaneseq
        %v3421 = vshrl.u32 %v3420, 7
        %v3422 = vsub.s32 %v3419, %v3421
        %v3423 = vrot.slane %v3413, %v3422
        %v3425 = vunpack.c.l.s4 1966171168
        %v3426 = vunpack.c.0.s8 %v3425
        %v3427 = vlaneseq
        %v3428 = vshrl.u32 %v3427, 7
        %v3429 = vsub.s32 %v3426, %v3428
        %v3430 = vrot.slane %v3414, %v3429
        %v3432 = vunpack.c.l.s4 1966171168
        %v3433 = vunpack.c.0.s8 %v3432
        %v3434 = vlaneseq
        %v3435 = vshrl.u32 %v3434, 7
        %v3436 = vsub.s32 %v3433, %v3435
        %v3437 = vrot.slane %v3415, %v3436
        %v3439 = vunpack.c.l.s4 1966171168
        %v3440 = vunpack.c.0.s8 %v3439
        %v3441 = vlaneseq
        %v3442 = vshrl.u32 %v3441, 7
        %v3443 = vsub.s32 %v3440, %v3442
        %v3444 = vrot.slane %v3416, %v3443
        %v3445 = vcombine.low %v3423, %v3430
        %v3446 = vcombine.low %v3437, %v3444
        %v3448 = vunpack.c.l.s4 1966171168
        %v3449 = vunpack.c.0.s8 %v3448
        %v3450 = vlaneseq
        %v3451 = vshrl.u32 %v3450, 7
        %v3452 = vsub.s32 %v3449, %v3451
        %v3453 = vrot.slane %v3445, %v3452
        %v3455 = vunpack.c.l.s4 1966171168
        %v3456 = vunpack.c.0.s8 %v3455
        %v3457 = vlaneseq
        %v3458 = vshrl.u32 %v3457, 7
        %v3459 = vsub.s32 %v3456, %v3458
        %v3460 = vrot.slane %v3446, %v3459
        %v3461 = vcombine.low %v3453, %v3460
        %v3464 = vadd.f32 %v2754, %v3412
        %v3465 = vadd.f32 %v2755, %v3461
        %3466 = vst [vmem:[#allocation2] sm:$0xff] %v3464
        %3467 = vst [vmem:[#allocation2 + $0x8] sm:$0xff] %v3465
        // Predicated region
        $region61: #{tpu_custom_call.1} parent=39 // pred_check
          %p3468 = pneg %p339
        $region62: #{tpu_custom_call.1} parent=39 // pred_check_branch
          %3470 = sbr.rel (%p3468) target = $region64
        $region63: #{tpu_custom_call.1} parent=39 // pred_region
          %v3471 = vld [vmem:[#allocation2] sm:$0xff]
          %v3472 = vld [vmem:[#allocation2 + $0x8] sm:$0xff]
          %v3473 = vmul.f32 %v3471, 0.00390625
          %v3474 = vmul.f32 %v3472, 0.00390625
          %v3475 = vld [vmem:[#allocation9] sm:$0xff]
          %v3476 = vld [vmem:[#allocation9 + $0x8] sm:$0xff]
          %v3477 = vmul.f32 %v3473, %v3475
          %v3478 = vmul.f32 %v3474, %v3476
          %v3481 = vlaneseq
          %v3482 = vshrl.u32 %v3481, 7
          %v3483 = vsub.s32 0, %v3482
          %v3484 = vrot.slane %v3477, %v3483
          %v3485 = vlaneseq
          %v3486 = vshrl.u32 %v3485, 7
          %v3487 = vsub.s32 1, %v3486
          %v3488 = vrot.slane %v3477, %v3487
          %v3489 = vlaneseq
          %v3490 = vshrl.u32 %v3489, 7
          %v3491 = vsub.s32 2, %v3490
          %v3492 = vrot.slane %v3477, %v3491
          %v3493 = vlaneseq
          %v3494 = vshrl.u32 %v3493, 7
          %v3495 = vsub.s32 3, %v3494
          %v3496 = vrot.slane %v3477, %v3495
          %v3497 = vlaneseq
          %v3498 = vshrl.u32 %v3497, 7
          %v3499 = vsub.s32 4, %v3498
          %v3500 = vrot.slane %v3477, %v3499
          %v3501 = vlaneseq
          %v3502 = vshrl.u32 %v3501, 7
          %v3503 = vsub.s32 5, %v3502
          %v3504 = vrot.slane %v3477, %v3503
          %v3505 = vlaneseq
          %v3506 = vshrl.u32 %v3505, 7
          %v3507 = vsub.s32 6, %v3506
          %v3508 = vrot.slane %v3477, %v3507
          %v3509 = vlaneseq
          %v3510 = vshrl.u32 %v3509, 7
          %v3511 = vsub.s32 7, %v3510
          %v3512 = vrot.slane %v3477, %v3511
          %v3513 = vlaneseq
          %v3514 = vshrl.u32 %v3513, 7
          %v3515 = vsub.s32 0, %v3514
          %v3516 = vrot.slane %v3478, %v3515
          %v3517 = vlaneseq
          %v3518 = vshrl.u32 %v3517, 7
          %v3519 = vsub.s32 1, %v3518
          %v3520 = vrot.slane %v3478, %v3519
          %v3521 = vlaneseq
          %v3522 = vshrl.u32 %v3521, 7
          %v3523 = vsub.s32 2, %v3522
          %v3524 = vrot.slane %v3478, %v3523
          %v3525 = vlaneseq
          %v3526 = vshrl.u32 %v3525, 7
          %v3527 = vsub.s32 3, %v3526
          %v3528 = vrot.slane %v3478, %v3527
          %v3529 = vlaneseq
          %v3530 = vshrl.u32 %v3529, 7
          %v3531 = vsub.s32 4, %v3530
          %v3532 = vrot.slane %v3478, %v3531
          %v3533 = vlaneseq
          %v3534 = vshrl.u32 %v3533, 7
          %v3535 = vsub.s32 5, %v3534
          %v3536 = vrot.slane %v3478, %v3535
          %v3537 = vlaneseq
          %v3538 = vshrl.u32 %v3537, 7
          %v3539 = vsub.s32 6, %v3538
          %v3540 = vrot.slane %v3478, %v3539
          %v3541 = vlaneseq
          %v3542 = vshrl.u32 %v3541, 7
          %v3543 = vsub.s32 7, %v3542
          %v3544 = vrot.slane %v3478, %v3543
          %vm3561 = vcmask 1040384
          %v3562 = vsel %vm3561, %v3484, 0.0
          %v3563 = vsel %vm3561, %v3488, 0.0
          %v3564 = vadd.f32 %v3562, %v3563
          %v3565 = vsel %vm3561, %v3492, 0.0
          %v3566 = vadd.f32 %v3564, %v3565
          %v3567 = vsel %vm3561, %v3496, 0.0
          %v3568 = vadd.f32 %v3566, %v3567
          %v3569 = vsel %vm3561, %v3500, 0.0
          %v3570 = vadd.f32 %v3568, %v3569
          %v3571 = vsel %vm3561, %v3504, 0.0
          %v3572 = vadd.f32 %v3570, %v3571
          %v3573 = vsel %vm3561, %v3508, 0.0
          %v3574 = vadd.f32 %v3572, %v3573
          %v3575 = vsel %vm3561, %v3512, 0.0
          %v3576 = vadd.f32 %v3574, %v3575
          %v3577 = vsel %vm3561, %v3516, 0.0
          %v3578 = vadd.f32 %v3576, %v3577
          %v3579 = vsel %vm3561, %v3520, 0.0
          %v3580 = vadd.f32 %v3578, %v3579
          %v3581 = vsel %vm3561, %v3524, 0.0
          %v3582 = vadd.f32 %v3580, %v3581
          %v3583 = vsel %vm3561, %v3528, 0.0
          %v3584 = vadd.f32 %v3582, %v3583
          %v3585 = vsel %vm3561, %v3532, 0.0
          %v3586 = vadd.f32 %v3584, %v3585
          %v3587 = vsel %vm3561, %v3536, 0.0
          %v3588 = vadd.f32 %v3586, %v3587
          %v3589 = vsel %vm3561, %v3540, 0.0
          %v3590 = vadd.f32 %v3588, %v3589
          %v3591 = vsel %vm3561, %v3544, 0.0
          %v3592 = vadd.f32 %v3590, %v3591
          %3593 = vadd.xlane.f32.xlu0 %v3592
          %v3594 = vpop.xlane.xlu0 %3593
          %v3595 = vld [vmem:[#allocation3] sm:$0x1]
          %v3596 = vadd.f32 %v3594, %v3595
          %v3597 = vld [vmem:[#allocation10] sm:$0x1]
          %3599 = vset.pattern.permute.xlu0 0
          %3600 = vperm.xlu0 %3599, %v3596
          %v3601 = vpop.permute.xlu0 %3600
          %v3603 = vadd.f32 %v3601, %v3597
          %vm3604 = vcmask 8192
          %3605 = vst.msk [vmem:[%s329] sm:$0x1] %vm3604, %v3603
          %v3606 = vxor.u32 %v3603, 2147483648
          %v3607 = vmul.f32 %v3606, 1.442695
          %v3608 = vpow.pop %v3607
          %v3609 = vadd.f32 %v3608, 1.0
          %v3610 = vrcp.pop %v3609
          %v3611 = vmul.f32 1.0, %v3610
          %3612 = vst.msk [vmem:[%s335] sm:$0x1] %vm3604, %v3611
        $region64: #{tpu_custom_call.1} parent=39 // pred_fallthru
          _
        %s3613 = sand.u32 %s163, 1
        %s3614 = scalar_lea.sflag [#allocation6], %s3613
        %s3615 = sand.u32 %s163, 1
        %s3616 = scalar_lea.vmem [#allocation12], %s3615
        %s3617 = sand.u32 %s189, 1
        %s3618 = scalar_lea.sflag [#allocation14], %s3617
        %s3619 = sand.u32 %s189, 1
        %s3620 = scalar_lea.vmem [#allocation13], %s3619
        // Predicated region
        $region65: #{tpu_custom_call.1} parent=39 // pred_check
          %p3621 = pneg %p173
        $region66: #{tpu_custom_call.1} parent=39 // pred_check_branch
          %3623 = sbr.rel (%p3621) target = $region68
        $region67: #{tpu_custom_call.1} parent=39 // pred_region
          %s3625 = ssub.s32 16, 16
          %3626 = vsyncadd %s3614, %s3625
          %s3627 = smul.addr %s35, 16
          %s3628 = scalar_lea.hbm %s5, %s3627
          %s3630 = sshll.u32 %s3616, 4
          %s3631 = int_to_ptr.vmem [resolvable:$true] %s3630
          %3633 = dma.vmem_to_hbm [thread:$0]  %s3631, 16, %s3628, %s3614
        $region68: #{tpu_custom_call.1} parent=39 // pred_fallthru
          _
        // Predicated region
        $region69: #{tpu_custom_call.1} parent=39 // pred_check
          %p3634 = pneg %p199
        $region70: #{tpu_custom_call.1} parent=39 // pred_check_branch
          %3636 = sbr.rel (%p3634) target = $region72
        $region71: #{tpu_custom_call.1} parent=39 // pred_region
          %s3638 = ssub.s32 16, 16
          %3639 = vsyncadd %s3618, %s3638
          %s3640 = smul.addr %s35, 16
          %s3641 = scalar_lea.hbm %s6, %s3640
          %s3643 = sshll.u32 %s3620, 4
          %s3644 = int_to_ptr.vmem [resolvable:$true] %s3643
          %3646 = dma.vmem_to_hbm [thread:$0]  %s3644, 16, %s3641, %s3618
        $region72: #{tpu_custom_call.1} parent=39 // pred_fallthru
          _
      $region40: #{tpu_custom_call.1} parent=5 // pred_fallthru
        _
      %p3647 = scmp.le.s32.totalorder 2, %s26
      // Predicated region
      $region73: #{tpu_custom_call.1} parent=5 // pred_check
        %p3648 = pneg %p3647
      $region74: #{tpu_custom_call.1} parent=5 // pred_check_branch
        %3650 = sbr.rel (%p3648) target = $region76
      $region75: #{tpu_custom_call.1} parent=5 // pred_region
        %s3651 = ssub.s32 %s26, 2
        // Predicated region
        $region77: #{tpu_custom_call.1} parent=75 // pred_check
          %p3652 = pneg %p179
        $region78: #{tpu_custom_call.1} parent=75 // pred_check_branch
          %3654 = sbr.rel (%p3652) target = $region80
        $region79: #{tpu_custom_call.1} parent=75 // pred_region
          %s3655 = sand.u32 %s164, 1
          %s3656 = scalar_lea.sflag [#allocation6], %s3655
          %s3657 = sand.u32 %s164, 1
          %s3658 = scalar_lea.vmem [#allocation12], %s3657
          %3659 = dma.done %s3656, 16
        $region80: #{tpu_custom_call.1} parent=75 // pred_fallthru
          _
        // Predicated region
        $region81: #{tpu_custom_call.1} parent=75 // pred_check
          %p3660 = pneg %p205
        $region82: #{tpu_custom_call.1} parent=75 // pred_check_branch
          %3662 = sbr.rel (%p3660) target = $region84
        $region83: #{tpu_custom_call.1} parent=75 // pred_region
          %s3663 = sand.u32 %s190, 1
          %s3664 = scalar_lea.sflag [#allocation14], %s3663
          %s3665 = sand.u32 %s190, 1
          %s3666 = scalar_lea.vmem [#allocation13], %s3665
          %3667 = dma.done %s3664, 16
        $region84: #{tpu_custom_call.1} parent=75 // pred_fallthru
          _
      $region76: #{tpu_custom_call.1} parent=5 // pred_fallthru
        _
    $region6: #{tpu_custom_call.1} parent=1 // loop_footer
      %s30 = sadd.s32 1, %s26
    $region7: #{tpu_custom_call.1} parent=1 // loop_footer_branch
      %25 = sbr.rel target = $region3
    $region8: #{tpu_custom_call.1} parent=1 // loop_exit
      _
    %3668 = vsyncpa [#allocation5], 1
    %s3669 = scalar_lea.sflag [#allocation5], 1
    %3670 = vsyncpa %s3669, 1
    %3671 = vsyncpa [#allocation8], 1
    %3672 = vsyncpa [#allocation11], 1
    %3673 = vsyncpa [#allocation6], 1
    %s3674 = scalar_lea.sflag [#allocation6], 1
    %3675 = vsyncpa %s3674, 1
    %3676 = vsyncpa [#allocation14], 1
    %s3677 = scalar_lea.sflag [#allocation14], 1
    %3678 = vsyncpa %s3677, 1

</llo_original>
